<compile_context>
chip_gen: v7x
topology: tpu7x:2x2x1
jax: 0.10.0
libtpu: 0.0.40
codegen_flags: <defaults>
</compile_context>

<pallas_src>
import functools

import numpy as np
import jax
import jax.numpy as jnp
from jax import lax
from jax.experimental import pallas as pl
from jax.experimental.pallas import tpu as pltpu


_BN_EPS = 1e-5
_BN_SCALE = float(1.0 / np.sqrt(1.0 + _BN_EPS))  # eval-mode BN fold (default stats)
# TODO(synk): per-channel BN fold (trained gamma/beta/mean/var) not expressible without
# the reference source; a scalar fold for default stats is used instead.


def _round_up(x, m):
  return ((x + m - 1) // m) * m


# ----------------------------------------------------------------------------
# Fused forward kernel (one grid step == one batch element)
# ----------------------------------------------------------------------------
def _formulanet_kernel(
    cols1_ref, cols2_ref,                 # (Mb, Kc)   bf16 stem im2col blocks
    m_lat_ref, m_sb2_ref, m_fb2_ref,      # (Mb, 9*cin) f32 conv border masks
    w_stem_s_ref, w_stem_f_ref,           # (Kc, 32), (Kc, 4) bf16
    w_lat_ref,                            # (36, 8)   bf16
    w_slow_ref, w_lat1_ref,               # (32, 80), (8, 80) bf16  [b1 | shortcut]
    w_sb2_ref, w_sb3_ref,                 # (144, 16), (16, 64) bf16
    w_fast_ref,                           # (4, 16)   bf16          [b1 | shortcut]
    w_fb2_ref, w_fb3_ref,                 # (72, 8), (8, 8) bf16
    fc_ws_ref, fc_wf_ref, fc_b_ref,       # (64, C), (8, C), (1, C) f32
    out_ref,                              # (1, 1, C) f32
    slab_ref,                             # (R, 9*max_cin) f32 shared im2col slab
    *, Wo, r0):
  f32 = jnp.float32
  bf16 = jnp.bfloat16
  Mb = cols1_ref.shape[0]

  def mm(x, w_ref):
    # bf16 activation x bf16 (pre-cast) weight on the MXU, f32 accumulation.
    return jnp.dot(x.astype(bf16), w_ref[...], preferred_element_type=f32)

  def relu(x):
    return jnp.maximum(x, 0.0)

  # Rows of the slab read-window that a tap may leave unwritten only need to be
  # FINITE (the mask multiply zeroes them); zero just the two halo bands once.
  halo = jnp.zeros((Wo + 1, slab_ref.shape[1]), f32)
  slab_ref[r0:r0 + Wo + 1, :] = halo
  slab_ref[r0 + Mb - Wo - 1:r0 + Mb, :] = halo

  def conv3x3(x2d, w_ref, mask_ref):
    """3x3 / stride-1 / pad-1 conv on a row-major (Mb, cin) activation.

    K-fused: tap (di, dj) needs neighbour (h+di-1, w+dj-1) == row m + s with
    s = (di-1)*Wo + (dj-1); x is stored at row offset r0 - s into lane block t
    of the slab, so the aligned read window [r0, r0+Mb) holds the full
    (Mb, 9*cin) im2col.  One mask multiply zeroes out-of-image taps (incl. the
    row wrap-around), then ONE MXU matmul contracts K = 9*cin at once.
    """
    kk, _ = w_ref.shape
    cin = kk // 9
    t = 0
    for di in range(3):
      for dj in range(3):
        sft = (di - 1) * Wo + (dj - 1)
        slab_ref[r0 - sft:r0 - sft + Mb, t * cin:(t + 1) * cin] = x2d
        t += 1
    slab = (slab_ref[r0:r0 + Mb, :kk] * mask_ref[...]).astype(bf16)
    return jnp.dot(slab, w_ref[...], preferred_element_type=f32)

  # --- stems (stride-2 convs; im2col'd and K-padded 27->32 in the wrapper) ---
  slow0 = relu(jnp.dot(cols1_ref[...], w_stem_s_ref[...],
                       preferred_element_type=f32))                    # (Mb, 32)
  fast0 = relu(jnp.dot(cols2_ref[...], w_stem_f_ref[...],
                       preferred_element_type=f32))                    # (Mb, 4)

  # --- lateral 3x3 conv on the fast pathway ---
  lat = relu(conv3x3(fast0, w_lat_ref, m_lat_ref))                     # (Mb, 8)

  # --- slow bottleneck: channel-concat([slow0, lat]) realised via split weights;
  #     1x1-bottleneck and 1x1-shortcut are N-fused into one matmul per LHS ---
  smid = w_sb3_ref.shape[0]
  z = mm(slow0, w_slow_ref) + mm(lat, w_lat1_ref)                      # (Mb, 16+64)
  y = relu(z[:, :smid])                                                # (Mb, 16)
  sc = z[:, smid:]                                                     # (Mb, 64)
  y = relu(conv3x3(y, w_sb2_ref, m_sb2_ref))                           # (Mb, 16)
  slow = relu(mm(y, w_sb3_ref) + sc)                                   # (Mb, 64)

  # --- fast bottleneck (same N-fusion) ---
  fmid = w_fb3_ref.shape[0]
  zf = mm(fast0, w_fast_ref)                                           # (Mb, 8+8)
  yf = relu(zf[:, :fmid])                                              # (Mb, 8)
  scf = zf[:, fmid:]                                                   # (Mb, 8)
  yf = relu(conv3x3(yf, w_fb2_ref, m_fb2_ref))                         # (Mb, 8)
  fast = relu(mm(yf, w_fb3_ref) + scf)                                 # (Mb, 8)

  # --- head: FC before the spatial mean (linear ops commute), all f32 ---
  pre = (jnp.dot(slow, fc_ws_ref[...], preferred_element_type=f32)
         + jnp.dot(fast, fc_wf_ref[...], preferred_element_type=f32))  # (Mb, C)
  logits = jnp.sum(pre, axis=0, keepdims=True) * (1.0 / Mb) + fc_b_ref[...]
  out_ref[...] = logits.reshape(out_ref.shape).astype(out_ref.dtype)


def _fused_forward(cols1, cols2, masks, w, B, Ho, Wo, num_class):
  Mb = Ho * Wo
  r0 = _round_up(Wo + 1, 8)                       # aligned read-window start
  slab_rows = _round_up(r0 + Mb + Wo + 1, 8)
  slab_cols = max(int(w["lat"].shape[0]), int(w["sb2"].shape[0]),
                  int(w["fb2"].shape[0]))         # 9 * max cin -> lane-dense (>=128)

  kern = functools.partial(_formulanet_kernel, Wo=Wo, r0=r0)

  def full_spec(a):  # whole (2-D) array, resident / revisited across the grid
    return pl.BlockSpec(a.shape, lambda b: (0, 0))

  weights_and_masks = [
      masks["lat"], masks["sb2"], masks["fb2"],
      w["stem_s"], w["stem_f"], w["lat"],
      w["w_slow"], w["w_lat1"], w["sb2"], w["sb3"],
      w["w_fast"], w["fb2"], w["fb3"],
      w["fc_ws"], w["fc_wf"], w["fc_b"],
  ]
  in_specs = ([pl.BlockSpec((Mb, cols1.shape[1]), lambda b: (b, 0)),
               pl.BlockSpec((Mb, cols2.shape[1]), lambda b: (b, 0))]
              + [full_spec(a) for a in weights_and_masks])

  out = pl.pallas_call(
      kern,
      out_shape=jax.ShapeDtypeStruct((B, 1, num_class), jnp.float32),
      grid=(B,),
      in_specs=in_specs,
      out_specs=pl.BlockSpec((1, 1, num_class), lambda b: (b, 0, 0)),
      scratch_shapes=[pltpu.VMEM((slab_rows, slab_cols), jnp.float32)],
      compiler_params=pltpu.CompilerParams(
          dimension_semantics=("parallel",)),     # v7x: both TensorCores
  )(cols1, cols2, *weights_and_masks)
  return out.reshape(B, num_class)


# ----------------------------------------------------------------------------
# Wrapper-side stem im2col (raw network inputs only; stride-2) and conv masks
# ----------------------------------------------------------------------------
def _im2col(x, kh, kw, stride, pad):
  """x: (B, H, W, C) NHWC -> (B*Ho*Wo, kh*kw*C) with rows in (b, h, w) order."""
  B, H, W, C = x.shape
  xp = jnp.pad(x, ((0, 0), (pad, pad), (pad, pad), (0, 0)))
  Ho = (H + 2 * pad - kh) // stride + 1
  Wo = (W + 2 * pad - kw) // stride + 1
  cols = []
  for i in range(kh):
    for j in range(kw):
      patch = lax.slice(
          xp, (0, i, j, 0),
          (B, i + (Ho - 1) * stride + 1, j + (Wo - 1) * stride + 1, C),
          (1, stride, stride, 1))
      cols.append(patch)
  col = jnp.concatenate(cols, axis=-1)            # (B, Ho, Wo, kh*kw*C)
  return col.reshape(B * Ho * Wo, kh * kw * C), (B, Ho, Wo)


def _conv_border_mask(Ho, Wo, cin):
  """(Ho*Wo, 9*cin) f32 mask: 1 where tap (di,dj) of pixel (h,w) is in-image."""
  M = Ho * Wo
  h = np.arange(M) // Wo
  ww = np.arange(M) % Wo
  blocks = []
  for di in range(3):
    for dj in range(3):
      ok = ((h + di - 1 >= 0) & (h + di - 1 < Ho)
            & (ww + dj - 1 >= 0) & (ww + dj - 1 < Wo)).astype(np.float32)
      blocks.append(np.repeat(ok[:, None], cin, axis=1))
  return jnp.asarray(np.concatenate(blocks, axis=1), dtype=jnp.float32)


# ----------------------------------------------------------------------------
# Parameters (same structure / RNG as before) + one-time kernel-ready prep
# ----------------------------------------------------------------------------
def init_params(key, *, base_ch=32, ratio=8, lateral_multiplier=2, num_class=3):
  fast_ch = base_ch // ratio                       # 4
  lat_ch = fast_ch * lateral_multiplier            # 8
  fused_ch = base_ch + lat_ch                      # 40
  slow_mid, slow_out = 16, 64
  fast_mid, fast_out = 8, 8

  def wgen(k, shape):
    fan_in = shape[0] * shape[1] * shape[2]
    return jax.random.normal(k, shape, jnp.float32) * (2.0 / fan_in) ** 0.5

  keys = jax.random.split(key, 12)
  return {
      "stem_slow": wgen(keys[0], (3, 3, 3, base_ch)),
      "stem_fast": wgen(keys[1], (3, 3, 3, fast_ch)),
      "lateral": wgen(keys[2], (3, 3, fast_ch, lat_ch)),
      "s_b1": wgen(keys[3], (1, 1, fused_ch, slow_mid)),
      "s_b2": wgen(keys[4], (3, 3, slow_mid, slow_mid)),
      "s_b3": wgen(keys[5], (1, 1, slow_mid, slow_out)),
      "s_sc": wgen(keys[6], (1, 1, fused_ch, slow_out)),
      "f_b1": wgen(keys[7], (1, 1, fast_ch, fast_mid)),
      "f_b2": wgen(keys[8], (3, 3, fast_mid, fast_mid)),
      "f_b3": wgen(keys[9], (1, 1, fast_mid, fast_out)),
      "f_sc": wgen(keys[10], (1, 1, fast_ch, fast_out)),
      "fc_w": jax.random.normal(keys[11], (slow_out + fast_out, num_class),
                                jnp.float32) * 0.05,
      "fc_b": jnp.zeros((num_class,), jnp.float32),
  }


def prepare_params(params):
  """Fold BN, reshape / split / N-fuse weights for the fused kernel, cast once."""
  s = _BN_SCALE
  bf = jnp.bfloat16

  def stem_mat(wt):   # (3,3,ci,co) -> (K_pad, co); K zero-padded to a multiple of 8
    kh, kw, ci, co = wt.shape
    m = (wt * s).reshape(kh * kw * ci, co)
    m = jnp.pad(m, ((0, (-m.shape[0]) % 8), (0, 0)))
    return m.astype(bf)

  def conv_mat(wt):   # (3,3,ci,co) -> (9*ci, co), tap-major rows (matches slab layout)
    kh, kw, ci, co = wt.shape
    return (wt * s).reshape(kh * kw * ci, co).astype(bf)

  def c1x1(wt):       # (1,1,ci,co) -> (ci, co) f32 (cast after N-fusion)
    return wt[0, 0] * s

  base = int(params["stem_slow"].shape[-1])        # slow stem channels (concat split)
  slow_out = int(params["s_b3"].shape[-1])         # FC split point
  sb1, ssc = c1x1(params["s_b1"]), c1x1(params["s_sc"])
  fb1, fsc = c1x1(params["f_b1"]), c1x1(params["f_sc"])
  return {
      "stem_s": stem_mat(params["stem_slow"]),
      "stem_f": stem_mat(params["stem_fast"]),
      "lat": conv_mat(params["lateral"]),
      # channel-concat([slow0, lat]) -> split weights; [1x1 | shortcut] N-fused.
      "w_slow": jnp.concatenate([sb1[:base], ssc[:base]], axis=1).astype(bf),   # (32,80)
      "w_lat1": jnp.concatenate([sb1[base:], ssc[base:]], axis=1).astype(bf),   # (8,80)
      "sb2": conv_mat(params["s_b2"]),                                          # (144,16)
      "sb3": c1x1(params["s_b3"]).astype(bf),                                   # (16,64)
      "w_fast": jnp.concatenate([fb1, fsc], axis=1).astype(bf),                 # (4,16)
      "fb2": conv_mat(params["f_b2"]),                                          # (72,8)
      "fb3": c1x1(params["f_b3"]).astype(bf),                                   # (8,8)
      # classifier head kept in f32 (no BN on the FC; avoids head re-quantisation).
      "fc_ws": params["fc_w"][:slow_out].astype(jnp.float32),
      "fc_wf": params["fc_w"][slow_out:].astype(jnp.float32),
      "fc_b": params["fc_b"].reshape(1, -1).astype(jnp.float32),
  }


# ----------------------------------------------------------------------------
# Forward
# ----------------------------------------------------------------------------
def formulanet_forward(prepped, x1_nchw, x2_nchw):
  # NCHW (PyTorch) -> NHWC
  x1 = jnp.transpose(x1_nchw, (0, 2, 3, 1)).astype(jnp.float32)
  x2 = jnp.transpose(x2_nchw, (0, 2, 3, 1)).astype(jnp.float32)

  # stride-2 stem im2col on the raw inputs only; K padded 27 -> 32 (matches weights).
  cols1, (B, Ho, Wo) = _im2col(x1, 3, 3, 2, 1)
  cols2, _ = _im2col(x2, 3, 3, 2, 1)
  kpad = (-cols1.shape[1]) % 8
  cols1 = jnp.pad(cols1, ((0, 0), (0, kpad))).astype(jnp.bfloat16)
  cols2 = jnp.pad(cols2, ((0, 0), (0, kpad))).astype(jnp.bfloat16)

  # Compile-time border masks for the three in-kernel 3x3 convs.
  masks = {
      "lat": _conv_border_mask(Ho, Wo, int(prepped["lat"].shape[0]) // 9),
      "sb2": _conv_border_mask(Ho, Wo, int(prepped["sb2"].shape[0]) // 9),
      "fb2": _conv_border_mask(Ho, Wo, int(prepped["fb2"].shape[0]) // 9),
  }
  num_class = int(prepped["fc_b"].shape[-1])
  return _fused_forward(cols1, cols2, masks, prepped, B, Ho, Wo, num_class)


# ----------------------------------------------------------------------------
if __name__ == "__main__":
  key = jax.random.PRNGKey(0)
  kp, k1, k2 = jax.random.split(key, 3)

  params = init_params(kp, num_class=3)
  prepped = prepare_params(params)   # one-time, outside jit

  # Two RGB inputs (the two views the two-pathway net consumes), NCHW.
  x1 = jax.random.normal(k1, (2, 3, 16, 16), jnp.float32)
  x2 = jax.random.normal(k2, (2, 3, 16, 16), jnp.float32)

  fwd = jax.jit(formulanet_forward)
  out = jax.block_until_ready(fwd(prepped, x1, x2))
  assert out.shape == (2, 3)
  assert bool(jnp.all(jnp.isfinite(out)))
  print("KERNEL_OK")
</pallas_src>

<mosaic_0001>
module attributes {stable_mosaic.version = 11 : i64} {
  func.func @_formulanet_kernel(%arg0: i32, %arg1: memref<64x32xbf16, #tpu.memory_space<vmem>>, %arg2: memref<64x32xbf16, #tpu.memory_space<vmem>>, %arg3: memref<64x36xf32, #tpu.memory_space<vmem>>, %arg4: memref<64x144xf32, #tpu.memory_space<vmem>>, %arg5: memref<64x72xf32, #tpu.memory_space<vmem>>, %arg6: memref<32x32xbf16, #tpu.memory_space<vmem>>, %arg7: memref<32x4xbf16, #tpu.memory_space<vmem>>, %arg8: memref<36x8xbf16, #tpu.memory_space<vmem>>, %arg9: memref<32x80xbf16, #tpu.memory_space<vmem>>, %arg10: memref<8x80xbf16, #tpu.memory_space<vmem>>, %arg11: memref<144x16xbf16, #tpu.memory_space<vmem>>, %arg12: memref<16x64xbf16, #tpu.memory_space<vmem>>, %arg13: memref<4x16xbf16, #tpu.memory_space<vmem>>, %arg14: memref<72x8xbf16, #tpu.memory_space<vmem>>, %arg15: memref<8x8xbf16, #tpu.memory_space<vmem>>, %arg16: memref<64x3xf32, #tpu.memory_space<vmem>>, %arg17: memref<8x3xf32, #tpu.memory_space<vmem>>, %arg18: memref<1x3xf32, #tpu.memory_space<vmem>>, %arg19: memref<1x1x3xf32, #tpu.memory_space<vmem>>, %arg20: memref<96x144xf32, #tpu.memory_space<vmem>>) attributes {dimension_semantics = [#tpu.dimension_semantics<parallel>], iteration_bounds = array<i64: 2>, scalar_prefetch = 0 : i64, scratch_operands = 1 : i64, tpu.core_type = #tpu.core_type<tc>, window_params = [{transform_indices = @transform_0, window_bounds = array<i64: 64, 32>}, {transform_indices = @transform_1, window_bounds = array<i64: 64, 32>}, {pipeline_mode = #tpu.pipeline_mode<synchronous>, transform_indices = @transform_2, window_bounds = array<i64: 64, 36>}, {pipeline_mode = #tpu.pipeline_mode<synchronous>, transform_indices = @transform_3, window_bounds = array<i64: 64, 144>}, {pipeline_mode = #tpu.pipeline_mode<synchronous>, transform_indices = @transform_4, window_bounds = array<i64: 64, 72>}, {pipeline_mode = #tpu.pipeline_mode<synchronous>, transform_indices = @transform_5, window_bounds = array<i64: 32, 32>}, {pipeline_mode = #tpu.pipeline_mode<synchronous>, transform_indices = @transform_6, window_bounds = array<i64: 32, 4>}, {pipeline_mode = #tpu.pipeline_mode<synchronous>, transform_indices = @transform_7, window_bounds = array<i64: 36, 8>}, {pipeline_mode = #tpu.pipeline_mode<synchronous>, transform_indices = @transform_8, window_bounds = array<i64: 32, 80>}, {pipeline_mode = #tpu.pipeline_mode<synchronous>, transform_indices = @transform_9, window_bounds = array<i64: 8, 80>}, {pipeline_mode = #tpu.pipeline_mode<synchronous>, transform_indices = @transform_10, window_bounds = array<i64: 144, 16>}, {pipeline_mode = #tpu.pipeline_mode<synchronous>, transform_indices = @transform_11, window_bounds = array<i64: 16, 64>}, {pipeline_mode = #tpu.pipeline_mode<synchronous>, transform_indices = @transform_12, window_bounds = array<i64: 4, 16>}, {pipeline_mode = #tpu.pipeline_mode<synchronous>, transform_indices = @transform_13, window_bounds = array<i64: 72, 8>}, {pipeline_mode = #tpu.pipeline_mode<synchronous>, transform_indices = @transform_14, window_bounds = array<i64: 8, 8>}, {pipeline_mode = #tpu.pipeline_mode<synchronous>, transform_indices = @transform_15, window_bounds = array<i64: 64, 3>}, {pipeline_mode = #tpu.pipeline_mode<synchronous>, transform_indices = @transform_16, window_bounds = array<i64: 8, 3>}, {pipeline_mode = #tpu.pipeline_mode<synchronous>, transform_indices = @transform_17, window_bounds = array<i64: 1, 3>}, {transform_indices = @transform_18, window_bounds = array<i64: 1, 1, 3>}]} {
    %cst = arith.constant 0.000000e+00 : f32
    %0 = vector.broadcast %cst : f32 to vector<9x144xf32>
    %c16 = arith.constant 16 : index
    %c0 = arith.constant 0 : index
    %1 = vector.load %arg20[%c16, %c0] : memref<96x144xf32, #tpu.memory_space<vmem>>, vector<9x144xf32>
    tpu.vector_store %arg20[%c16, %c0], %0 {strides = array<i32>} : memref<96x144xf32, #tpu.memory_space<vmem>>, vector<9x144xf32>,
    %c71 = arith.constant 71 : index
    %c0_0 = arith.constant 0 : index
    %2 = vector.load %arg20[%c71, %c0_0] : memref<96x144xf32, #tpu.memory_space<vmem>>, vector<9x144xf32>
    tpu.vector_store %arg20[%c71, %c0_0], %0 {strides = array<i32>} : memref<96x144xf32, #tpu.memory_space<vmem>>, vector<9x144xf32>,
    %c0_1 = arith.constant 0 : index
    %c0_2 = arith.constant 0 : index
    %3 = vector.load %arg1[%c0_1, %c0_2] : memref<64x32xbf16, #tpu.memory_space<vmem>>, vector<64x32xbf16>
    %c0_3 = arith.constant 0 : index
    %c0_4 = arith.constant 0 : index
    %4 = vector.load %arg6[%c0_3, %c0_4] : memref<32x32xbf16, #tpu.memory_space<vmem>>, vector<32x32xbf16>
    %cst_5 = arith.constant dense<0.000000e+00> : vector<64x32xf32>
    %5 = tpu.matmul %3, %4, %cst_5 {dimension_numbers = #tpu.dot_dimension_numbers<[1], [0], [0], [1], [0, 0, 1, 1], [], []>} : vector<64x32xbf16>, vector<32x32xbf16>, vector<64x32xf32> -> vector<64x32xf32>
    %cst_6 = arith.constant 0.000000e+00 : f32
    %6 = vector.broadcast %cst_6 : f32 to vector<64x32xf32>
    %7 = arith.maximumf %5, %6 : vector<64x32xf32>
    %c0_7 = arith.constant 0 : index
    %c0_8 = arith.constant 0 : index
    %8 = vector.load %arg2[%c0_7, %c0_8] : memref<64x32xbf16, #tpu.memory_space<vmem>>, vector<64x32xbf16>
    %c0_9 = arith.constant 0 : index
    %c0_10 = arith.constant 0 : index
    %9 = vector.load %arg7[%c0_9, %c0_10] : memref<32x4xbf16, #tpu.memory_space<vmem>>, vector<32x4xbf16>
    %cst_11 = arith.constant dense<0.000000e+00> : vector<64x4xf32>
    %10 = tpu.matmul %8, %9, %cst_11 {dimension_numbers = #tpu.dot_dimension_numbers<[1], [0], [0], [1], [0, 0, 1, 1], [], []>} : vector<64x32xbf16>, vector<32x4xbf16>, vector<64x4xf32> -> vector<64x4xf32>
    %cst_12 = arith.constant 0.000000e+00 : f32
    %11 = vector.broadcast %cst_12 : f32 to vector<64x4xf32>
    %12 = arith.maximumf %10, %11 : vector<64x4xf32>
    %c25 = arith.constant 25 : index
    %c0_13 = arith.constant 0 : index
    %13 = vector.load %arg20[%c25, %c0_13] : memref<96x144xf32, #tpu.memory_space<vmem>>, vector<64x4xf32>
    tpu.vector_store %arg20[%c25, %c0_13], %12 {strides = array<i32>} : memref<96x144xf32, #tpu.memory_space<vmem>>, vector<64x4xf32>,
    %c24 = arith.constant 24 : index
    %c4 = arith.constant 4 : index
    %14 = vector.load %arg20[%c24, %c4] : memref<96x144xf32, #tpu.memory_space<vmem>>, vector<64x4xf32>
    tpu.vector_store %arg20[%c24, %c4], %12 {strides = array<i32>} : memref<96x144xf32, #tpu.memory_space<vmem>>, vector<64x4xf32>,
    %c23 = arith.constant 23 : index
    %c8 = arith.constant 8 : index
    %15 = vector.load %arg20[%c23, %c8] : memref<96x144xf32, #tpu.memory_space<vmem>>, vector<64x4xf32>
    tpu.vector_store %arg20[%c23, %c8], %12 {strides = array<i32>} : memref<96x144xf32, #tpu.memory_space<vmem>>, vector<64x4xf32>,
    %c17 = arith.constant 17 : index
    %c12 = arith.constant 12 : index
    %16 = vector.load %arg20[%c17, %c12] : memref<96x144xf32, #tpu.memory_space<vmem>>, vector<64x4xf32>
    tpu.vector_store %arg20[%c17, %c12], %12 {strides = array<i32>} : memref<96x144xf32, #tpu.memory_space<vmem>>, vector<64x4xf32>,
    %c16_14 = arith.constant 16 : index
    %c16_15 = arith.constant 16 : index
    %17 = vector.load %arg20[%c16_14, %c16_15] : memref<96x144xf32, #tpu.memory_space<vmem>>, vector<64x4xf32>
    tpu.vector_store %arg20[%c16_14, %c16_15], %12 {strides = array<i32>} : memref<96x144xf32, #tpu.memory_space<vmem>>, vector<64x4xf32>,
    %c15 = arith.constant 15 : index
    %c20 = arith.constant 20 : index
    %18 = vector.load %arg20[%c15, %c20] : memref<96x144xf32, #tpu.memory_space<vmem>>, vector<64x4xf32>
    tpu.vector_store %arg20[%c15, %c20], %12 {strides = array<i32>} : memref<96x144xf32, #tpu.memory_space<vmem>>, vector<64x4xf32>,
    %c9 = arith.constant 9 : index
    %c24_16 = arith.constant 24 : index
    %19 = vector.load %arg20[%c9, %c24_16] : memref<96x144xf32, #tpu.memory_space<vmem>>, vector<64x4xf32>
    tpu.vector_store %arg20[%c9, %c24_16], %12 {strides = array<i32>} : memref<96x144xf32, #tpu.memory_space<vmem>>, vector<64x4xf32>,
    %c8_17 = arith.constant 8 : index
    %c28 = arith.constant 28 : index
    %20 = vector.load %arg20[%c8_17, %c28] : memref<96x144xf32, #tpu.memory_space<vmem>>, vector<64x4xf32>
    tpu.vector_store %arg20[%c8_17, %c28], %12 {strides = array<i32>} : memref<96x144xf32, #tpu.memory_space<vmem>>, vector<64x4xf32>,
    %c7 = arith.constant 7 : index
    %c32 = arith.constant 32 : index
    %21 = vector.load %arg20[%c7, %c32] : memref<96x144xf32, #tpu.memory_space<vmem>>, vector<64x4xf32>
    tpu.vector_store %arg20[%c7, %c32], %12 {strides = array<i32>} : memref<96x144xf32, #tpu.memory_space<vmem>>, vector<64x4xf32>,
    %c16_18 = arith.constant 16 : index
    %c0_19 = arith.constant 0 : index
    %22 = vector.load %arg20[%c16_18, %c0_19] : memref<96x144xf32, #tpu.memory_space<vmem>>, vector<64x36xf32>
    %c0_20 = arith.constant 0 : index
    %c0_21 = arith.constant 0 : index
    %23 = vector.load %arg3[%c0_20, %c0_21] : memref<64x36xf32, #tpu.memory_space<vmem>>, vector<64x36xf32>
    %24 = arith.mulf %22, %23 : vector<64x36xf32>
    %25 = arith.truncf %24 : vector<64x36xf32> to vector<64x36xbf16>
    %c0_22 = arith.constant 0 : index
    %c0_23 = arith.constant 0 : index
    %26 = vector.load %arg8[%c0_22, %c0_23] : memref<36x8xbf16, #tpu.memory_space<vmem>>, vector<36x8xbf16>
    %cst_24 = arith.constant dense<0.000000e+00> : vector<64x8xf32>
    %27 = tpu.matmul %25, %26, %cst_24 {dimension_numbers = #tpu.dot_dimension_numbers<[1], [0], [0], [1], [0, 0, 1, 1], [], []>} : vector<64x36xbf16>, vector<36x8xbf16>, vector<64x8xf32> -> vector<64x8xf32>
    %cst_25 = arith.constant 0.000000e+00 : f32
    %28 = vector.broadcast %cst_25 : f32 to vector<64x8xf32>
    %29 = arith.maximumf %27, %28 : vector<64x8xf32>
    %30 = arith.truncf %7 : vector<64x32xf32> to vector<64x32xbf16>
    %c0_26 = arith.constant 0 : index
    %c0_27 = arith.constant 0 : index
    %31 = vector.load %arg9[%c0_26, %c0_27] : memref<32x80xbf16, #tpu.memory_space<vmem>>, vector<32x80xbf16>
    %cst_28 = arith.constant dense<0.000000e+00> : vector<64x80xf32>
    %32 = tpu.matmul %30, %31, %cst_28 {dimension_numbers = #tpu.dot_dimension_numbers<[1], [0], [0], [1], [0, 0, 1, 1], [], []>} : vector<64x32xbf16>, vector<32x80xbf16>, vector<64x80xf32> -> vector<64x80xf32>
    %33 = arith.truncf %29 : vector<64x8xf32> to vector<64x8xbf16>
    %c0_29 = arith.constant 0 : index
    %c0_30 = arith.constant 0 : index
    %34 = vector.load %arg10[%c0_29, %c0_30] : memref<8x80xbf16, #tpu.memory_space<vmem>>, vector<8x80xbf16>
    %cst_31 = arith.constant dense<0.000000e+00> : vector<64x80xf32>
    %35 = tpu.matmul %33, %34, %cst_31 {dimension_numbers = #tpu.dot_dimension_numbers<[1], [0], [0], [1], [0, 0, 1, 1], [], []>} : vector<64x8xbf16>, vector<8x80xbf16>, vector<64x80xf32> -> vector<64x80xf32>
    %36 = arith.addf %32, %35 : vector<64x80xf32>
    %37 = vector.extract_strided_slice %36 {offsets = [0, 0], sizes = [64, 16], strides = [1, 1]} : vector<64x80xf32> to vector<64x16xf32>
    %cst_32 = arith.constant 0.000000e+00 : f32
    %38 = vector.broadcast %cst_32 : f32 to vector<64x16xf32>
    %39 = arith.maximumf %37, %38 : vector<64x16xf32>
    %40 = vector.extract_strided_slice %36 {offsets = [0, 16], sizes = [64, 64], strides = [1, 1]} : vector<64x80xf32> to vector<64x64xf32>
    %c25_33 = arith.constant 25 : index
    %c0_34 = arith.constant 0 : index
    %41 = vector.load %arg20[%c25_33, %c0_34] : memref<96x144xf32, #tpu.memory_space<vmem>>, vector<64x16xf32>
    tpu.vector_store %arg20[%c25_33, %c0_34], %39 {strides = array<i32>} : memref<96x144xf32, #tpu.memory_space<vmem>>, vector<64x16xf32>,
    %c24_35 = arith.constant 24 : index
    %c16_36 = arith.constant 16 : index
    %42 = vector.load %arg20[%c24_35, %c16_36] : memref<96x144xf32, #tpu.memory_space<vmem>>, vector<64x16xf32>
    tpu.vector_store %arg20[%c24_35, %c16_36], %39 {strides = array<i32>} : memref<96x144xf32, #tpu.memory_space<vmem>>, vector<64x16xf32>,
    %c23_37 = arith.constant 23 : index
    %c32_38 = arith.constant 32 : index
    %43 = vector.load %arg20[%c23_37, %c32_38] : memref<96x144xf32, #tpu.memory_space<vmem>>, vector<64x16xf32>
    tpu.vector_store %arg20[%c23_37, %c32_38], %39 {strides = array<i32>} : memref<96x144xf32, #tpu.memory_space<vmem>>, vector<64x16xf32>,
    %c17_39 = arith.constant 17 : index
    %c48 = arith.constant 48 : index
    %44 = vector.load %arg20[%c17_39, %c48] : memref<96x144xf32, #tpu.memory_space<vmem>>, vector<64x16xf32>
    tpu.vector_store %arg20[%c17_39, %c48], %39 {strides = array<i32>} : memref<96x144xf32, #tpu.memory_space<vmem>>, vector<64x16xf32>,
    %c16_40 = arith.constant 16 : index
    %c64 = arith.constant 64 : index
    %45 = vector.load %arg20[%c16_40, %c64] : memref<96x144xf32, #tpu.memory_space<vmem>>, vector<64x16xf32>
    tpu.vector_store %arg20[%c16_40, %c64], %39 {strides = array<i32>} : memref<96x144xf32, #tpu.memory_space<vmem>>, vector<64x16xf32>,
    %c15_41 = arith.constant 15 : index
    %c80 = arith.constant 80 : index
    %46 = vector.load %arg20[%c15_41, %c80] : memref<96x144xf32, #tpu.memory_space<vmem>>, vector<64x16xf32>
    tpu.vector_store %arg20[%c15_41, %c80], %39 {strides = array<i32>} : memref<96x144xf32, #tpu.memory_space<vmem>>, vector<64x16xf32>,
    %c9_42 = arith.constant 9 : index
    %c96 = arith.constant 96 : index
    %47 = vector.load %arg20[%c9_42, %c96] : memref<96x144xf32, #tpu.memory_space<vmem>>, vector<64x16xf32>
    tpu.vector_store %arg20[%c9_42, %c96], %39 {strides = array<i32>} : memref<96x144xf32, #tpu.memory_space<vmem>>, vector<64x16xf32>,
    %c8_43 = arith.constant 8 : index
    %c112 = arith.constant 112 : index
    %48 = vector.load %arg20[%c8_43, %c112] : memref<96x144xf32, #tpu.memory_space<vmem>>, vector<64x16xf32>
    tpu.vector_store %arg20[%c8_43, %c112], %39 {strides = array<i32>} : memref<96x144xf32, #tpu.memory_space<vmem>>, vector<64x16xf32>,
    %c7_44 = arith.constant 7 : index
    %c128 = arith.constant 128 : index
    %49 = vector.load %arg20[%c7_44, %c128] : memref<96x144xf32, #tpu.memory_space<vmem>>, vector<64x16xf32>
    tpu.vector_store %arg20[%c7_44, %c128], %39 {strides = array<i32>} : memref<96x144xf32, #tpu.memory_space<vmem>>, vector<64x16xf32>,
    %c16_45 = arith.constant 16 : index
    %c0_46 = arith.constant 0 : index
    %50 = vector.load %arg20[%c16_45, %c0_46] : memref<96x144xf32, #tpu.memory_space<vmem>>, vector<64x144xf32>
    %c0_47 = arith.constant 0 : index
    %c0_48 = arith.constant 0 : index
    %51 = vector.load %arg4[%c0_47, %c0_48] : memref<64x144xf32, #tpu.memory_space<vmem>>, vector<64x144xf32>
    %52 = arith.mulf %50, %51 : vector<64x144xf32>
    %53 = arith.truncf %52 : vector<64x144xf32> to vector<64x144xbf16>
    %c0_49 = arith.constant 0 : index
    %c0_50 = arith.constant 0 : index
    %54 = vector.load %arg11[%c0_49, %c0_50] : memref<144x16xbf16, #tpu.memory_space<vmem>>, vector<144x16xbf16>
    %cst_51 = arith.constant dense<0.000000e+00> : vector<64x16xf32>
    %55 = tpu.matmul %53, %54, %cst_51 {dimension_numbers = #tpu.dot_dimension_numbers<[1], [0], [0], [1], [0, 0, 1, 1], [], []>} : vector<64x144xbf16>, vector<144x16xbf16>, vector<64x16xf32> -> vector<64x16xf32>
    %cst_52 = arith.constant 0.000000e+00 : f32
    %56 = vector.broadcast %cst_52 : f32 to vector<64x16xf32>
    %57 = arith.maximumf %55, %56 : vector<64x16xf32>
    %58 = arith.truncf %57 : vector<64x16xf32> to vector<64x16xbf16>
    %c0_53 = arith.constant 0 : index
    %c0_54 = arith.constant 0 : index
    %59 = vector.load %arg12[%c0_53, %c0_54] : memref<16x64xbf16, #tpu.memory_space<vmem>>, vector<16x64xbf16>
    %cst_55 = arith.constant dense<0.000000e+00> : vector<64x64xf32>
    %60 = tpu.matmul %58, %59, %cst_55 {dimension_numbers = #tpu.dot_dimension_numbers<[1], [0], [0], [1], [0, 0, 1, 1], [], []>} : vector<64x16xbf16>, vector<16x64xbf16>, vector<64x64xf32> -> vector<64x64xf32>
    %61 = arith.addf %60, %40 : vector<64x64xf32>
    %cst_56 = arith.constant 0.000000e+00 : f32
    %62 = vector.broadcast %cst_56 : f32 to vector<64x64xf32>
    %63 = arith.maximumf %61, %62 : vector<64x64xf32>
    %64 = arith.truncf %12 : vector<64x4xf32> to vector<64x4xbf16>
    %c0_57 = arith.constant 0 : index
    %c0_58 = arith.constant 0 : index
    %65 = vector.load %arg13[%c0_57, %c0_58] : memref<4x16xbf16, #tpu.memory_space<vmem>>, vector<4x16xbf16>
    %cst_59 = arith.constant dense<0.000000e+00> : vector<64x16xf32>
    %66 = tpu.matmul %64, %65, %cst_59 {dimension_numbers = #tpu.dot_dimension_numbers<[1], [0], [0], [1], [0, 0, 1, 1], [], []>} : vector<64x4xbf16>, vector<4x16xbf16>, vector<64x16xf32> -> vector<64x16xf32>
    %67 = vector.extract_strided_slice %66 {offsets = [0, 0], sizes = [64, 8], strides = [1, 1]} : vector<64x16xf32> to vector<64x8xf32>
    %cst_60 = arith.constant 0.000000e+00 : f32
    %68 = vector.broadcast %cst_60 : f32 to vector<64x8xf32>
    %69 = arith.maximumf %67, %68 : vector<64x8xf32>
    %70 = vector.extract_strided_slice %66 {offsets = [0, 8], sizes = [64, 8], strides = [1, 1]} : vector<64x16xf32> to vector<64x8xf32>
    %c25_61 = arith.constant 25 : index
    %c0_62 = arith.constant 0 : index
    %71 = vector.load %arg20[%c25_61, %c0_62] : memref<96x144xf32, #tpu.memory_space<vmem>>, vector<64x8xf32>
    tpu.vector_store %arg20[%c25_61, %c0_62], %69 {strides = array<i32>} : memref<96x144xf32, #tpu.memory_space<vmem>>, vector<64x8xf32>,
    %c24_63 = arith.constant 24 : index
    %c8_64 = arith.constant 8 : index
    %72 = vector.load %arg20[%c24_63, %c8_64] : memref<96x144xf32, #tpu.memory_space<vmem>>, vector<64x8xf32>
    tpu.vector_store %arg20[%c24_63, %c8_64], %69 {strides = array<i32>} : memref<96x144xf32, #tpu.memory_space<vmem>>, vector<64x8xf32>,
    %c23_65 = arith.constant 23 : index
    %c16_66 = arith.constant 16 : index
    %73 = vector.load %arg20[%c23_65, %c16_66] : memref<96x144xf32, #tpu.memory_space<vmem>>, vector<64x8xf32>
    tpu.vector_store %arg20[%c23_65, %c16_66], %69 {strides = array<i32>} : memref<96x144xf32, #tpu.memory_space<vmem>>, vector<64x8xf32>,
    %c17_67 = arith.constant 17 : index
    %c24_68 = arith.constant 24 : index
    %74 = vector.load %arg20[%c17_67, %c24_68] : memref<96x144xf32, #tpu.memory_space<vmem>>, vector<64x8xf32>
    tpu.vector_store %arg20[%c17_67, %c24_68], %69 {strides = array<i32>} : memref<96x144xf32, #tpu.memory_space<vmem>>, vector<64x8xf32>,
    %c16_69 = arith.constant 16 : index
    %c32_70 = arith.constant 32 : index
    %75 = vector.load %arg20[%c16_69, %c32_70] : memref<96x144xf32, #tpu.memory_space<vmem>>, vector<64x8xf32>
    tpu.vector_store %arg20[%c16_69, %c32_70], %69 {strides = array<i32>} : memref<96x144xf32, #tpu.memory_space<vmem>>, vector<64x8xf32>,
    %c15_71 = arith.constant 15 : index
    %c40 = arith.constant 40 : index
    %76 = vector.load %arg20[%c15_71, %c40] : memref<96x144xf32, #tpu.memory_space<vmem>>, vector<64x8xf32>
    tpu.vector_store %arg20[%c15_71, %c40], %69 {strides = array<i32>} : memref<96x144xf32, #tpu.memory_space<vmem>>, vector<64x8xf32>,
    %c9_72 = arith.constant 9 : index
    %c48_73 = arith.constant 48 : index
    %77 = vector.load %arg20[%c9_72, %c48_73] : memref<96x144xf32, #tpu.memory_space<vmem>>, vector<64x8xf32>
    tpu.vector_store %arg20[%c9_72, %c48_73], %69 {strides = array<i32>} : memref<96x144xf32, #tpu.memory_space<vmem>>, vector<64x8xf32>,
    %c8_74 = arith.constant 8 : index
    %c56 = arith.constant 56 : index
    %78 = vector.load %arg20[%c8_74, %c56] : memref<96x144xf32, #tpu.memory_space<vmem>>, vector<64x8xf32>
    tpu.vector_store %arg20[%c8_74, %c56], %69 {strides = array<i32>} : memref<96x144xf32, #tpu.memory_space<vmem>>, vector<64x8xf32>,
    %c7_75 = arith.constant 7 : index
    %c64_76 = arith.constant 64 : index
    %79 = vector.load %arg20[%c7_75, %c64_76] : memref<96x144xf32, #tpu.memory_space<vmem>>, vector<64x8xf32>
    tpu.vector_store %arg20[%c7_75, %c64_76], %69 {strides = array<i32>} : memref<96x144xf32, #tpu.memory_space<vmem>>, vector<64x8xf32>,
    %c16_77 = arith.constant 16 : index
    %c0_78 = arith.constant 0 : index
    %80 = vector.load %arg20[%c16_77, %c0_78] : memref<96x144xf32, #tpu.memory_space<vmem>>, vector<64x72xf32>
    %c0_79 = arith.constant 0 : index
    %c0_80 = arith.constant 0 : index
    %81 = vector.load %arg5[%c0_79, %c0_80] : memref<64x72xf32, #tpu.memory_space<vmem>>, vector<64x72xf32>
    %82 = arith.mulf %80, %81 : vector<64x72xf32>
    %83 = arith.truncf %82 : vector<64x72xf32> to vector<64x72xbf16>
    %c0_81 = arith.constant 0 : index
    %c0_82 = arith.constant 0 : index
    %84 = vector.load %arg14[%c0_81, %c0_82] : memref<72x8xbf16, #tpu.memory_space<vmem>>, vector<72x8xbf16>
    %cst_83 = arith.constant dense<0.000000e+00> : vector<64x8xf32>
    %85 = tpu.matmul %83, %84, %cst_83 {dimension_numbers = #tpu.dot_dimension_numbers<[1], [0], [0], [1], [0, 0, 1, 1], [], []>} : vector<64x72xbf16>, vector<72x8xbf16>, vector<64x8xf32> -> vector<64x8xf32>
    %cst_84 = arith.constant 0.000000e+00 : f32
    %86 = vector.broadcast %cst_84 : f32 to vector<64x8xf32>
    %87 = arith.maximumf %85, %86 : vector<64x8xf32>
    %88 = arith.truncf %87 : vector<64x8xf32> to vector<64x8xbf16>
    %c0_85 = arith.constant 0 : index
    %c0_86 = arith.constant 0 : index
    %89 = vector.load %arg15[%c0_85, %c0_86] : memref<8x8xbf16, #tpu.memory_space<vmem>>, vector<8x8xbf16>
    %cst_87 = arith.constant dense<0.000000e+00> : vector<64x8xf32>
    %90 = tpu.matmul %88, %89, %cst_87 {dimension_numbers = #tpu.dot_dimension_numbers<[1], [0], [0], [1], [0, 0, 1, 1], [], []>} : vector<64x8xbf16>, vector<8x8xbf16>, vector<64x8xf32> -> vector<64x8xf32>
    %91 = arith.addf %90, %70 : vector<64x8xf32>
    %cst_88 = arith.constant 0.000000e+00 : f32
    %92 = vector.broadcast %cst_88 : f32 to vector<64x8xf32>
    %93 = arith.maximumf %91, %92 : vector<64x8xf32>
    %c0_89 = arith.constant 0 : index
    %c0_90 = arith.constant 0 : index
    %94 = vector.load %arg16[%c0_89, %c0_90] : memref<64x3xf32, #tpu.memory_space<vmem>>, vector<64x3xf32>
    %cst_91 = arith.constant dense<0.000000e+00> : vector<64x3xf32>
    %95 = tpu.matmul %63, %94, %cst_91 {dimension_numbers = #tpu.dot_dimension_numbers<[1], [0], [0], [1], [0, 0, 1, 1], [], []>} : vector<64x64xf32>, vector<64x3xf32>, vector<64x3xf32> -> vector<64x3xf32>
    %c0_92 = arith.constant 0 : index
    %c0_93 = arith.constant 0 : index
    %96 = vector.load %arg17[%c0_92, %c0_93] : memref<8x3xf32, #tpu.memory_space<vmem>>, vector<8x3xf32>
    %cst_94 = arith.constant dense<0.000000e+00> : vector<64x3xf32>
    %97 = tpu.matmul %93, %96, %cst_94 {dimension_numbers = #tpu.dot_dimension_numbers<[1], [0], [0], [1], [0, 0, 1, 1], [], []>} : vector<64x8xf32>, vector<8x3xf32>, vector<64x3xf32> -> vector<64x3xf32>
    %98 = arith.addf %95, %97 : vector<64x3xf32>
    %cst_95 = arith.constant dense<0.000000e+00> : vector<3xf32>
    %99 = vector.multi_reduction <add>, %98, %cst_95 [0] : vector<64x3xf32> to vector<3xf32>
    %100 = vector.shape_cast %99 : vector<3xf32> to vector<1x3xf32>
    %cst_96 = arith.constant 1.562500e-02 : f32
    %101 = vector.broadcast %cst_96 : f32 to vector<1x3xf32>
    %102 = arith.mulf %100, %101 : vector<1x3xf32>
    %c0_97 = arith.constant 0 : index
    %c0_98 = arith.constant 0 : index
    %103 = vector.load %arg18[%c0_97, %c0_98] : memref<1x3xf32, #tpu.memory_space<vmem>>, vector<1x3xf32>
    %104 = arith.addf %102, %103 : vector<1x3xf32>
    %105 = vector.shape_cast %104 : vector<1x3xf32> to vector<1x1x3xf32>
    %c0_99 = arith.constant 0 : index
    %c0_100 = arith.constant 0 : index
    %c0_101 = arith.constant 0 : index
    %106 = vector.load %arg19[%c0_99, %c0_100, %c0_101] : memref<1x1x3xf32, #tpu.memory_space<vmem>>, vector<1x1x3xf32>
    tpu.vector_store %arg19[%c0_99, %c0_100, %c0_101], %105 {strides = array<i32>} : memref<1x1x3xf32, #tpu.memory_space<vmem>>, vector<1x1x3xf32>,
    return
  }
  func.func @transform_0(%arg0: i32) -> (i32, i32) {
    %c0_i32 = arith.constant 0 : i32
    %c0_i32_0 = arith.constant 0 : i32
    return %arg0, %c0_i32 : i32, i32
  }
  func.func @transform_1(%arg0: i32) -> (i32, i32) {
    %c0_i32 = arith.constant 0 : i32
    %c0_i32_0 = arith.constant 0 : i32
    return %arg0, %c0_i32 : i32, i32
  }
  func.func @transform_2(%arg0: i32) -> (i32, i32) {
    %c0_i32 = arith.constant 0 : i32
    %c0_i32_0 = arith.constant 0 : i32
    %c0_i32_1 = arith.constant 0 : i32
    return %c0_i32, %c0_i32_0 : i32, i32
  }
  func.func @transform_3(%arg0: i32) -> (i32, i32) {
    %c0_i32 = arith.constant 0 : i32
    %c0_i32_0 = arith.constant 0 : i32
    %c0_i32_1 = arith.constant 0 : i32
    return %c0_i32, %c0_i32_0 : i32, i32
  }
  func.func @transform_4(%arg0: i32) -> (i32, i32) {
    %c0_i32 = arith.constant 0 : i32
    %c0_i32_0 = arith.constant 0 : i32
    %c0_i32_1 = arith.constant 0 : i32
    return %c0_i32, %c0_i32_0 : i32, i32
  }
  func.func @transform_5(%arg0: i32) -> (i32, i32) {
    %c0_i32 = arith.constant 0 : i32
    %c0_i32_0 = arith.constant 0 : i32
    %c0_i32_1 = arith.constant 0 : i32
    return %c0_i32, %c0_i32_0 : i32, i32
  }
  func.func @transform_6(%arg0: i32) -> (i32, i32) {
    %c0_i32 = arith.constant 0 : i32
    %c0_i32_0 = arith.constant 0 : i32
    %c0_i32_1 = arith.constant 0 : i32
    return %c0_i32, %c0_i32_0 : i32, i32
  }
  func.func @transform_7(%arg0: i32) -> (i32, i32) {
    %c0_i32 = arith.constant 0 : i32
    %c0_i32_0 = arith.constant 0 : i32
    %c0_i32_1 = arith.constant 0 : i32
    return %c0_i32, %c0_i32_0 : i32, i32
  }
  func.func @transform_8(%arg0: i32) -> (i32, i32) {
    %c0_i32 = arith.constant 0 : i32
    %c0_i32_0 = arith.constant 0 : i32
    %c0_i32_1 = arith.constant 0 : i32
    return %c0_i32, %c0_i32_0 : i32, i32
  }
  func.func @transform_9(%arg0: i32) -> (i32, i32) {
    %c0_i32 = arith.constant 0 : i32
    %c0_i32_0 = arith.constant 0 : i32
    %c0_i32_1 = arith.constant 0 : i32
    return %c0_i32, %c0_i32_0 : i32, i32
  }
  func.func @transform_10(%arg0: i32) -> (i32, i32) {
    %c0_i32 = arith.constant 0 : i32
    %c0_i32_0 = arith.constant 0 : i32
    %c0_i32_1 = arith.constant 0 : i32
    return %c0_i32, %c0_i32_0 : i32, i32
  }
  func.func @transform_11(%arg0: i32) -> (i32, i32) {
    %c0_i32 = arith.constant 0 : i32
    %c0_i32_0 = arith.constant 0 : i32
    %c0_i32_1 = arith.constant 0 : i32
    return %c0_i32, %c0_i32_0 : i32, i32
  }
  func.func @transform_12(%arg0: i32) -> (i32, i32) {
    %c0_i32 = arith.constant 0 : i32
    %c0_i32_0 = arith.constant 0 : i32
    %c0_i32_1 = arith.constant 0 : i32
    return %c0_i32, %c0_i32_0 : i32, i32
  }
  func.func @transform_13(%arg0: i32) -> (i32, i32) {
    %c0_i32 = arith.constant 0 : i32
    %c0_i32_0 = arith.constant 0 : i32
    %c0_i32_1 = arith.constant 0 : i32
    return %c0_i32, %c0_i32_0 : i32, i32
  }
  func.func @transform_14(%arg0: i32) -> (i32, i32) {
    %c0_i32 = arith.constant 0 : i32
    %c0_i32_0 = arith.constant 0 : i32
    %c0_i32_1 = arith.constant 0 : i32
    return %c0_i32, %c0_i32_0 : i32, i32
  }
  func.func @transform_15(%arg0: i32) -> (i32, i32) {
    %c0_i32 = arith.constant 0 : i32
    %c0_i32_0 = arith.constant 0 : i32
    %c0_i32_1 = arith.constant 0 : i32
    return %c0_i32, %c0_i32_0 : i32, i32
  }
  func.func @transform_16(%arg0: i32) -> (i32, i32) {
    %c0_i32 = arith.constant 0 : i32
    %c0_i32_0 = arith.constant 0 : i32
    %c0_i32_1 = arith.constant 0 : i32
    return %c0_i32, %c0_i32_0 : i32, i32
  }
  func.func @transform_17(%arg0: i32) -> (i32, i32) {
    %c0_i32 = arith.constant 0 : i32
    %c0_i32_0 = arith.constant 0 : i32
    %c0_i32_1 = arith.constant 0 : i32
    return %c0_i32, %c0_i32_0 : i32, i32
  }
  func.func @transform_18(%arg0: i32) -> (i32, i32, i32) {
    %c0_i32 = arith.constant 0 : i32
    %c0_i32_0 = arith.constant 0 : i32
    %c0_i32_1 = arith.constant 0 : i32
    return %arg0, %c0_i32, %c0_i32_0 : i32, i32, i32
  }
}

</mosaic_0001>

<llo_original>
// kernel: formulanet_forward.1
$region0: #{formulanet_forward.1}
  #allocation0 [shape = 'u32[]', space=smem, size = 0x4, offset = 0x4, fixed_abs, tag = 'smem constant byte address 0x4 - core index']
  #allocation1 [shape = 'u32[144,128]{1,0:T(1,128)}', space=vmem, size = 0x12000, scoped, tag = 'internal scratch']
  #allocation2 [shape = 'f32[96,144]{1,0:T(8,128)}', space=vmem, size = 0x18000, scoped, tag = 'scratch operand']
  %s0 = inlined_call_operand.vmem [shape: bf16[128,32], index: 0, kind: input, shape index: {}]
  %s1 = inlined_call_operand.vmem [shape: bf16[128,32], index: 1, kind: input, shape index: {}]
  %s2 = inlined_call_operand.vmem [shape: f32[64,36], index: 2, kind: input, shape index: {}]
  %s3 = inlined_call_operand.vmem [shape: f32[64,144], index: 3, kind: input, shape index: {}]
  %s4 = inlined_call_operand.vmem [shape: f32[64,72], index: 4, kind: input, shape index: {}]
  %s5 = inlined_call_operand.vmem [shape: bf16[32,32], index: 5, kind: input, shape index: {}]
  %s6 = inlined_call_operand.vmem [shape: bf16[32,4], index: 6, kind: input, shape index: {}]
  %s7 = inlined_call_operand.vmem [shape: bf16[36,8], index: 7, kind: input, shape index: {}]
  %s8 = inlined_call_operand.vmem [shape: bf16[32,80], index: 8, kind: input, shape index: {}]
  %s9 = inlined_call_operand.vmem [shape: bf16[8,80], index: 9, kind: input, shape index: {}]
  %s10 = inlined_call_operand.vmem [shape: bf16[144,16], index: 10, kind: input, shape index: {}]
  %s11 = inlined_call_operand.vmem [shape: bf16[16,64], index: 11, kind: input, shape index: {}]
  %s12 = inlined_call_operand.vmem [shape: bf16[4,16], index: 12, kind: input, shape index: {}]
  %s13 = inlined_call_operand.vmem [shape: bf16[72,8], index: 13, kind: input, shape index: {}]
  %s14 = inlined_call_operand.vmem [shape: bf16[8,8], index: 14, kind: input, shape index: {}]
  %s15 = inlined_call_operand.vmem [shape: f32[64,3], index: 15, kind: input, shape index: {}]
  %s16 = inlined_call_operand.vmem [shape: f32[8,3], index: 16, kind: input, shape index: {}]
  %s17 = inlined_call_operand.vmem [shape: f32[1,3], index: 17, kind: input, shape index: {}]
  %s18 = inlined_call_operand.hbm [shape: f32[2,1,3], index: 18, kind: output, shape index: {}]
  %s19 = sld [smem:[#allocation0]]
  $region105: #{formulanet_forward.1} parent=0
    _
  %s21 = ssub.s32 1, %s19
  %s22 = scalar_select 0, %s21, %s19
  $region1: #{formulanet_forward.1} parent=0
    #allocation3 [shape = 'u8[1024]{0}', space=vmem, size = 0x400, scoped, tag = 'output window, operand 0']
    #allocation4 [shape = 's32[2]{0}', space=sflag, size = 0x8, scoped, tag = 'scoped memory for formulanet_forward.1']
    %23 = vsyncpa [#allocation4], 0
    %s24 = scalar_lea.sflag [#allocation4], 1
    %25 = vsyncpa %s24, 0
    loop: start=0, step=1, limit=4
    $region2: #{formulanet_forward.1} parent=1 // loop_pre_header
      _
    $region3: #{formulanet_forward.1} parent=1 // loop_header
      %s27 = sphi 0, %s31
      %p28 = scmp.ge.s32.totalorder %s27, 4
      %s37 = sphi 0, %s39
      %s40 = sphi 0, %s37
      %s41 = sphi 0, %s40
      %s57 = sphi 0, %s41
      %s63 = sphi 0, %s65
      %s66 = sphi 0, %s63
      %s67 = sphi 0, %s66
      %s83 = sphi 0, %s67
      %s87 = sphi 0, %s87
      %s89 = sphi 0, %s87
      %s90 = sphi 0, %s89
      %s104 = sphi 0, %s90
      %s108 = sphi 0, %s108
      %s110 = sphi 0, %s108
      %s111 = sphi 0, %s110
      %s125 = sphi 0, %s111
      %s129 = sphi 0, %s129
      %s131 = sphi 0, %s129
      %s132 = sphi 0, %s131
      %s146 = sphi 0, %s132
      %s150 = sphi 0, %s150
      %s152 = sphi 0, %s150
      %s153 = sphi 0, %s152
      %s167 = sphi 0, %s153
      %s171 = sphi 0, %s171
      %s173 = sphi 0, %s171
      %s174 = sphi 0, %s173
      %s188 = sphi 0, %s174
      %s192 = sphi 0, %s192
      %s194 = sphi 0, %s192
      %s195 = sphi 0, %s194
      %s209 = sphi 0, %s195
      %s213 = sphi 0, %s213
      %s215 = sphi 0, %s213
      %s216 = sphi 0, %s215
      %s230 = sphi 0, %s216
      %s234 = sphi 0, %s234
      %s236 = sphi 0, %s234
      %s237 = sphi 0, %s236
      %s251 = sphi 0, %s237
      %s255 = sphi 0, %s255
      %s257 = sphi 0, %s255
      %s258 = sphi 0, %s257
      %s272 = sphi 0, %s258
      %s276 = sphi 0, %s276
      %s278 = sphi 0, %s276
      %s279 = sphi 0, %s278
      %s293 = sphi 0, %s279
      %s297 = sphi 0, %s297
      %s299 = sphi 0, %s297
      %s300 = sphi 0, %s299
      %s314 = sphi 0, %s300
      %s318 = sphi 0, %s318
      %s320 = sphi 0, %s318
      %s321 = sphi 0, %s320
      %s335 = sphi 0, %s321
      %s339 = sphi 0, %s339
      %s341 = sphi 0, %s339
      %s342 = sphi 0, %s341
      %s356 = sphi 0, %s342
      %s360 = sphi 0, %s360
      %s362 = sphi 0, %s360
      %s363 = sphi 0, %s362
      %s377 = sphi 0, %s363
      %s381 = sphi 0, %s381
      %s383 = sphi 0, %s381
      %s384 = sphi 0, %s383
      %s398 = sphi 0, %s384
      %s402 = sphi 0, %s402
      %s404 = sphi 0, %s402
      %s405 = sphi 0, %s404
      %s419 = sphi 0, %s405
      %s425 = sphi 0, %s427
      %s428 = sphi 0, %s425
      %s429 = sphi 0, %s428
      %s445 = sphi 0, %s429
    $region4: #{formulanet_forward.1} parent=1 // loop_header_branch
      %30 = sbr.rel (%p28) target = $region8
    $region5: #{formulanet_forward.1} parent=1 // loop_body
      %s32 = ssub.s32 %s27, 1
      %s33 = ssub.s32 %s27, 2
      %s34 = sadd.s32 %s27, 1
      %s35 = ssub.s32 %s27, %s34
      %p36 = scmp.eq.s32.totalorder %s35, 0
      %s38 = sadd.s32 %s37, 1
      %s39 = scalar_select %p36, %s37, %s38
      %p42 = pneg %p36
      %p43 = scmp.eq.s32.totalorder %s27, 1
      %p44 = por %p42, %p43
      %p45 = scmp.ne.s32.totalorder %s37, %s40
      %p46 = scmp.eq.s32.totalorder %s27, 0
      %p47 = por %p45, %p46
      %p48 = scmp.ne.s32.totalorder %s37, %s40
      %p49 = scmp.eq.s32.totalorder %s32, 1
      %p50 = por %p48, %p49
      %p51 = scmp.ne.s32.totalorder %s40, %s41
      %p52 = scmp.eq.s32.totalorder %s32, 0
      %p53 = por %p51, %p52
      %p54 = scmp.ne.s32.totalorder %s40, %s41
      %p55 = scmp.eq.s32.totalorder %s33, 1
      %p56 = por %p54, %p55
      %p58 = scmp.ne.s32.totalorder %s41, %s57
      %p59 = scmp.eq.s32.totalorder %s33, 0
      %p60 = por %p58, %p59
      %s61 = ssub.s32 %s27, %s34
      %p62 = scmp.eq.s32.totalorder %s61, 0
      %s64 = sadd.s32 %s63, 1
      %s65 = scalar_select %p62, %s63, %s64
      %p68 = pneg %p62
      %p69 = scmp.eq.s32.totalorder %s27, 1
      %p70 = por %p68, %p69
      %p71 = scmp.ne.s32.totalorder %s63, %s66
      %p72 = scmp.eq.s32.totalorder %s27, 0
      %p73 = por %p71, %p72
      %p74 = scmp.ne.s32.totalorder %s63, %s66
      %p75 = scmp.eq.s32.totalorder %s32, 1
      %p76 = por %p74, %p75
      %p77 = scmp.ne.s32.totalorder %s66, %s67
      %p78 = scmp.eq.s32.totalorder %s32, 0
      %p79 = por %p77, %p78
      %p80 = scmp.ne.s32.totalorder %s66, %s67
      %p81 = scmp.eq.s32.totalorder %s33, 1
      %p82 = por %p80, %p81
      %p84 = scmp.ne.s32.totalorder %s67, %s83
      %p85 = scmp.eq.s32.totalorder %s33, 0
      %p86 = por %p84, %p85
      %s88 = sadd.s32 %s87, 1
      %p91 = scmp.eq.s32.totalorder %s27, 1
      %p92 = scmp.ne.s32.totalorder %s87, %s89
      %p93 = scmp.eq.s32.totalorder %s27, 0
      %p94 = por %p92, %p93
      %p95 = scmp.ne.s32.totalorder %s87, %s89
      %p96 = scmp.eq.s32.totalorder %s32, 1
      %p97 = por %p95, %p96
      %p98 = scmp.ne.s32.totalorder %s89, %s90
      %p99 = scmp.eq.s32.totalorder %s32, 0
      %p100 = por %p98, %p99
      %p101 = scmp.ne.s32.totalorder %s89, %s90
      %p102 = scmp.eq.s32.totalorder %s33, 1
      %p103 = por %p101, %p102
      %p105 = scmp.ne.s32.totalorder %s90, %s104
      %p106 = scmp.eq.s32.totalorder %s33, 0
      %p107 = por %p105, %p106
      %s109 = sadd.s32 %s108, 1
      %p112 = scmp.eq.s32.totalorder %s27, 1
      %p113 = scmp.ne.s32.totalorder %s108, %s110
      %p114 = scmp.eq.s32.totalorder %s27, 0
      %p115 = por %p113, %p114
      %p116 = scmp.ne.s32.totalorder %s108, %s110
      %p117 = scmp.eq.s32.totalorder %s32, 1
      %p118 = por %p116, %p117
      %p119 = scmp.ne.s32.totalorder %s110, %s111
      %p120 = scmp.eq.s32.totalorder %s32, 0
      %p121 = por %p119, %p120
      %p122 = scmp.ne.s32.totalorder %s110, %s111
      %p123 = scmp.eq.s32.totalorder %s33, 1
      %p124 = por %p122, %p123
      %p126 = scmp.ne.s32.totalorder %s111, %s125
      %p127 = scmp.eq.s32.totalorder %s33, 0
      %p128 = por %p126, %p127
      %s130 = sadd.s32 %s129, 1
      %p133 = scmp.eq.s32.totalorder %s27, 1
      %p134 = scmp.ne.s32.totalorder %s129, %s131
      %p135 = scmp.eq.s32.totalorder %s27, 0
      %p136 = por %p134, %p135
      %p137 = scmp.ne.s32.totalorder %s129, %s131
      %p138 = scmp.eq.s32.totalorder %s32, 1
      %p139 = por %p137, %p138
      %p140 = scmp.ne.s32.totalorder %s131, %s132
      %p141 = scmp.eq.s32.totalorder %s32, 0
      %p142 = por %p140, %p141
      %p143 = scmp.ne.s32.totalorder %s131, %s132
      %p144 = scmp.eq.s32.totalorder %s33, 1
      %p145 = por %p143, %p144
      %p147 = scmp.ne.s32.totalorder %s132, %s146
      %p148 = scmp.eq.s32.totalorder %s33, 0
      %p149 = por %p147, %p148
      %s151 = sadd.s32 %s150, 1
      %p154 = scmp.eq.s32.totalorder %s27, 1
      %p155 = scmp.ne.s32.totalorder %s150, %s152
      %p156 = scmp.eq.s32.totalorder %s27, 0
      %p157 = por %p155, %p156
      %p158 = scmp.ne.s32.totalorder %s150, %s152
      %p159 = scmp.eq.s32.totalorder %s32, 1
      %p160 = por %p158, %p159
      %p161 = scmp.ne.s32.totalorder %s152, %s153
      %p162 = scmp.eq.s32.totalorder %s32, 0
      %p163 = por %p161, %p162
      %p164 = scmp.ne.s32.totalorder %s152, %s153
      %p165 = scmp.eq.s32.totalorder %s33, 1
      %p166 = por %p164, %p165
      %p168 = scmp.ne.s32.totalorder %s153, %s167
      %p169 = scmp.eq.s32.totalorder %s33, 0
      %p170 = por %p168, %p169
      %s172 = sadd.s32 %s171, 1
      %p175 = scmp.eq.s32.totalorder %s27, 1
      %p176 = scmp.ne.s32.totalorder %s171, %s173
      %p177 = scmp.eq.s32.totalorder %s27, 0
      %p178 = por %p176, %p177
      %p179 = scmp.ne.s32.totalorder %s171, %s173
      %p180 = scmp.eq.s32.totalorder %s32, 1
      %p181 = por %p179, %p180
      %p182 = scmp.ne.s32.totalorder %s173, %s174
      %p183 = scmp.eq.s32.totalorder %s32, 0
      %p184 = por %p182, %p183
      %p185 = scmp.ne.s32.totalorder %s173, %s174
      %p186 = scmp.eq.s32.totalorder %s33, 1
      %p187 = por %p185, %p186
      %p189 = scmp.ne.s32.totalorder %s174, %s188
      %p190 = scmp.eq.s32.totalorder %s33, 0
      %p191 = por %p189, %p190
      %s193 = sadd.s32 %s192, 1
      %p196 = scmp.eq.s32.totalorder %s27, 1
      %p197 = scmp.ne.s32.totalorder %s192, %s194
      %p198 = scmp.eq.s32.totalorder %s27, 0
      %p199 = por %p197, %p198
      %p200 = scmp.ne.s32.totalorder %s192, %s194
      %p201 = scmp.eq.s32.totalorder %s32, 1
      %p202 = por %p200, %p201
      %p203 = scmp.ne.s32.totalorder %s194, %s195
      %p204 = scmp.eq.s32.totalorder %s32, 0
      %p205 = por %p203, %p204
      %p206 = scmp.ne.s32.totalorder %s194, %s195
      %p207 = scmp.eq.s32.totalorder %s33, 1
      %p208 = por %p206, %p207
      %p210 = scmp.ne.s32.totalorder %s195, %s209
      %p211 = scmp.eq.s32.totalorder %s33, 0
      %p212 = por %p210, %p211
      %s214 = sadd.s32 %s213, 1
      %p217 = scmp.eq.s32.totalorder %s27, 1
      %p218 = scmp.ne.s32.totalorder %s213, %s215
      %p219 = scmp.eq.s32.totalorder %s27, 0
      %p220 = por %p218, %p219
      %p221 = scmp.ne.s32.totalorder %s213, %s215
      %p222 = scmp.eq.s32.totalorder %s32, 1
      %p223 = por %p221, %p222
      %p224 = scmp.ne.s32.totalorder %s215, %s216
      %p225 = scmp.eq.s32.totalorder %s32, 0
      %p226 = por %p224, %p225
      %p227 = scmp.ne.s32.totalorder %s215, %s216
      %p228 = scmp.eq.s32.totalorder %s33, 1
      %p229 = por %p227, %p228
      %p231 = scmp.ne.s32.totalorder %s216, %s230
      %p232 = scmp.eq.s32.totalorder %s33, 0
      %p233 = por %p231, %p232
      %s235 = sadd.s32 %s234, 1
      %p238 = scmp.eq.s32.totalorder %s27, 1
      %p239 = scmp.ne.s32.totalorder %s234, %s236
      %p240 = scmp.eq.s32.totalorder %s27, 0
      %p241 = por %p239, %p240
      %p242 = scmp.ne.s32.totalorder %s234, %s236
      %p243 = scmp.eq.s32.totalorder %s32, 1
      %p244 = por %p242, %p243
      %p245 = scmp.ne.s32.totalorder %s236, %s237
      %p246 = scmp.eq.s32.totalorder %s32, 0
      %p247 = por %p245, %p246
      %p248 = scmp.ne.s32.totalorder %s236, %s237
      %p249 = scmp.eq.s32.totalorder %s33, 1
      %p250 = por %p248, %p249
      %p252 = scmp.ne.s32.totalorder %s237, %s251
      %p253 = scmp.eq.s32.totalorder %s33, 0
      %p254 = por %p252, %p253
      %s256 = sadd.s32 %s255, 1
      %p259 = scmp.eq.s32.totalorder %s27, 1
      %p260 = scmp.ne.s32.totalorder %s255, %s257
      %p261 = scmp.eq.s32.totalorder %s27, 0
      %p262 = por %p260, %p261
      %p263 = scmp.ne.s32.totalorder %s255, %s257
      %p264 = scmp.eq.s32.totalorder %s32, 1
      %p265 = por %p263, %p264
      %p266 = scmp.ne.s32.totalorder %s257, %s258
      %p267 = scmp.eq.s32.totalorder %s32, 0
      %p268 = por %p266, %p267
      %p269 = scmp.ne.s32.totalorder %s257, %s258
      %p270 = scmp.eq.s32.totalorder %s33, 1
      %p271 = por %p269, %p270
      %p273 = scmp.ne.s32.totalorder %s258, %s272
      %p274 = scmp.eq.s32.totalorder %s33, 0
      %p275 = por %p273, %p274
      %s277 = sadd.s32 %s276, 1
      %p280 = scmp.eq.s32.totalorder %s27, 1
      %p281 = scmp.ne.s32.totalorder %s276, %s278
      %p282 = scmp.eq.s32.totalorder %s27, 0
      %p283 = por %p281, %p282
      %p284 = scmp.ne.s32.totalorder %s276, %s278
      %p285 = scmp.eq.s32.totalorder %s32, 1
      %p286 = por %p284, %p285
      %p287 = scmp.ne.s32.totalorder %s278, %s279
      %p288 = scmp.eq.s32.totalorder %s32, 0
      %p289 = por %p287, %p288
      %p290 = scmp.ne.s32.totalorder %s278, %s279
      %p291 = scmp.eq.s32.totalorder %s33, 1
      %p292 = por %p290, %p291
      %p294 = scmp.ne.s32.totalorder %s279, %s293
      %p295 = scmp.eq.s32.totalorder %s33, 0
      %p296 = por %p294, %p295
      %s298 = sadd.s32 %s297, 1
      %p301 = scmp.eq.s32.totalorder %s27, 1
      %p302 = scmp.ne.s32.totalorder %s297, %s299
      %p303 = scmp.eq.s32.totalorder %s27, 0
      %p304 = por %p302, %p303
      %p305 = scmp.ne.s32.totalorder %s297, %s299
      %p306 = scmp.eq.s32.totalorder %s32, 1
      %p307 = por %p305, %p306
      %p308 = scmp.ne.s32.totalorder %s299, %s300
      %p309 = scmp.eq.s32.totalorder %s32, 0
      %p310 = por %p308, %p309
      %p311 = scmp.ne.s32.totalorder %s299, %s300
      %p312 = scmp.eq.s32.totalorder %s33, 1
      %p313 = por %p311, %p312
      %p315 = scmp.ne.s32.totalorder %s300, %s314
      %p316 = scmp.eq.s32.totalorder %s33, 0
      %p317 = por %p315, %p316
      %s319 = sadd.s32 %s318, 1
      %p322 = scmp.eq.s32.totalorder %s27, 1
      %p323 = scmp.ne.s32.totalorder %s318, %s320
      %p324 = scmp.eq.s32.totalorder %s27, 0
      %p325 = por %p323, %p324
      %p326 = scmp.ne.s32.totalorder %s318, %s320
      %p327 = scmp.eq.s32.totalorder %s32, 1
      %p328 = por %p326, %p327
      %p329 = scmp.ne.s32.totalorder %s320, %s321
      %p330 = scmp.eq.s32.totalorder %s32, 0
      %p331 = por %p329, %p330
      %p332 = scmp.ne.s32.totalorder %s320, %s321
      %p333 = scmp.eq.s32.totalorder %s33, 1
      %p334 = por %p332, %p333
      %p336 = scmp.ne.s32.totalorder %s321, %s335
      %p337 = scmp.eq.s32.totalorder %s33, 0
      %p338 = por %p336, %p337
      %s340 = sadd.s32 %s339, 1
      %p343 = scmp.eq.s32.totalorder %s27, 1
      %p344 = scmp.ne.s32.totalorder %s339, %s341
      %p345 = scmp.eq.s32.totalorder %s27, 0
      %p346 = por %p344, %p345
      %p347 = scmp.ne.s32.totalorder %s339, %s341
      %p348 = scmp.eq.s32.totalorder %s32, 1
      %p349 = por %p347, %p348
      %p350 = scmp.ne.s32.totalorder %s341, %s342
      %p351 = scmp.eq.s32.totalorder %s32, 0
      %p352 = por %p350, %p351
      %p353 = scmp.ne.s32.totalorder %s341, %s342
      %p354 = scmp.eq.s32.totalorder %s33, 1
      %p355 = por %p353, %p354
      %p357 = scmp.ne.s32.totalorder %s342, %s356
      %p358 = scmp.eq.s32.totalorder %s33, 0
      %p359 = por %p357, %p358
      %s361 = sadd.s32 %s360, 1
      %p364 = scmp.eq.s32.totalorder %s27, 1
      %p365 = scmp.ne.s32.totalorder %s360, %s362
      %p366 = scmp.eq.s32.totalorder %s27, 0
      %p367 = por %p365, %p366
      %p368 = scmp.ne.s32.totalorder %s360, %s362
      %p369 = scmp.eq.s32.totalorder %s32, 1
      %p370 = por %p368, %p369
      %p371 = scmp.ne.s32.totalorder %s362, %s363
      %p372 = scmp.eq.s32.totalorder %s32, 0
      %p373 = por %p371, %p372
      %p374 = scmp.ne.s32.totalorder %s362, %s363
      %p375 = scmp.eq.s32.totalorder %s33, 1
      %p376 = por %p374, %p375
      %p378 = scmp.ne.s32.totalorder %s363, %s377
      %p379 = scmp.eq.s32.totalorder %s33, 0
      %p380 = por %p378, %p379
      %s382 = sadd.s32 %s381, 1
      %p385 = scmp.eq.s32.totalorder %s27, 1
      %p386 = scmp.ne.s32.totalorder %s381, %s383
      %p387 = scmp.eq.s32.totalorder %s27, 0
      %p388 = por %p386, %p387
      %p389 = scmp.ne.s32.totalorder %s381, %s383
      %p390 = scmp.eq.s32.totalorder %s32, 1
      %p391 = por %p389, %p390
      %p392 = scmp.ne.s32.totalorder %s383, %s384
      %p393 = scmp.eq.s32.totalorder %s32, 0
      %p394 = por %p392, %p393
      %p395 = scmp.ne.s32.totalorder %s383, %s384
      %p396 = scmp.eq.s32.totalorder %s33, 1
      %p397 = por %p395, %p396
      %p399 = scmp.ne.s32.totalorder %s384, %s398
      %p400 = scmp.eq.s32.totalorder %s33, 0
      %p401 = por %p399, %p400
      %s403 = sadd.s32 %s402, 1
      %p406 = scmp.eq.s32.totalorder %s27, 1
      %p407 = scmp.ne.s32.totalorder %s402, %s404
      %p408 = scmp.eq.s32.totalorder %s27, 0
      %p409 = por %p407, %p408
      %p410 = scmp.ne.s32.totalorder %s402, %s404
      %p411 = scmp.eq.s32.totalorder %s32, 1
      %p412 = por %p410, %p411
      %p413 = scmp.ne.s32.totalorder %s404, %s405
      %p414 = scmp.eq.s32.totalorder %s32, 0
      %p415 = por %p413, %p414
      %p416 = scmp.ne.s32.totalorder %s404, %s405
      %p417 = scmp.eq.s32.totalorder %s33, 1
      %p418 = por %p416, %p417
      %p420 = scmp.ne.s32.totalorder %s405, %s419
      %p421 = scmp.eq.s32.totalorder %s33, 0
      %p422 = por %p420, %p421
      %s423 = ssub.s32 %s27, %s34
      %p424 = scmp.eq.s32.totalorder %s423, 0
      %s426 = sadd.s32 %s425, 1
      %s427 = scalar_select %p424, %s425, %s426
      %p430 = pneg %p424
      %p431 = scmp.eq.s32.totalorder %s27, 1
      %p432 = por %p430, %p431
      %p433 = scmp.ne.s32.totalorder %s425, %s428
      %p434 = scmp.eq.s32.totalorder %s27, 0
      %p435 = por %p433, %p434
      %p436 = scmp.ne.s32.totalorder %s425, %s428
      %p437 = scmp.eq.s32.totalorder %s32, 1
      %p438 = por %p436, %p437
      %p439 = scmp.ne.s32.totalorder %s428, %s429
      %p440 = scmp.eq.s32.totalorder %s32, 0
      %p441 = por %p439, %p440
      %p442 = scmp.ne.s32.totalorder %s428, %s429
      %p443 = scmp.eq.s32.totalorder %s33, 1
      %p444 = por %p442, %p443
      %p446 = scmp.ne.s32.totalorder %s429, %s445
      %p447 = scmp.eq.s32.totalorder %s33, 0
      %p448 = por %p446, %p447
      %p449 = scmp.le.s32.totalorder 1, %s27
      %p450 = scmp.lt.s32.totalorder %s27, 3
      %p451 = pnand %p449, %p450
      %p452 = pneg %p451
      // Predicated region
      $region9: #{formulanet_forward.1} parent=5 // pred_check
        _
      $region10: #{formulanet_forward.1} parent=5 // pred_check_branch
        %454 = sbr.rel (%p451) target = $region12
      $region11: #{formulanet_forward.1} parent=5 // pred_region
        %s455 = ssub.s32 %s27, 1
        // Predicated region
        $region13: #{formulanet_forward.1} parent=11 // pred_check
          %p456 = pneg %p100
        $region14: #{formulanet_forward.1} parent=11 // pred_check_branch
          %458 = sbr.rel (%p456) target = $region16
        $region15: #{formulanet_forward.1} parent=11 // pred_region
          _
        $region16: #{formulanet_forward.1} parent=11 // pred_fallthru
          _
        // Predicated region
        $region17: #{formulanet_forward.1} parent=11 // pred_check
          %p459 = pneg %p121
        $region18: #{formulanet_forward.1} parent=11 // pred_check_branch
          %461 = sbr.rel (%p459) target = $region20
        $region19: #{formulanet_forward.1} parent=11 // pred_region
          _
        $region20: #{formulanet_forward.1} parent=11 // pred_fallthru
          _
        // Predicated region
        $region21: #{formulanet_forward.1} parent=11 // pred_check
          %p462 = pneg %p142
        $region22: #{formulanet_forward.1} parent=11 // pred_check_branch
          %464 = sbr.rel (%p462) target = $region24
        $region23: #{formulanet_forward.1} parent=11 // pred_region
          _
        $region24: #{formulanet_forward.1} parent=11 // pred_fallthru
          _
        // Predicated region
        $region25: #{formulanet_forward.1} parent=11 // pred_check
          %p465 = pneg %p163
        $region26: #{formulanet_forward.1} parent=11 // pred_check_branch
          %467 = sbr.rel (%p465) target = $region28
        $region27: #{formulanet_forward.1} parent=11 // pred_region
          _
        $region28: #{formulanet_forward.1} parent=11 // pred_fallthru
          _
        // Predicated region
        $region29: #{formulanet_forward.1} parent=11 // pred_check
          %p468 = pneg %p184
        $region30: #{formulanet_forward.1} parent=11 // pred_check_branch
          %470 = sbr.rel (%p468) target = $region32
        $region31: #{formulanet_forward.1} parent=11 // pred_region
          _
        $region32: #{formulanet_forward.1} parent=11 // pred_fallthru
          _
        // Predicated region
        $region33: #{formulanet_forward.1} parent=11 // pred_check
          %p471 = pneg %p205
        $region34: #{formulanet_forward.1} parent=11 // pred_check_branch
          %473 = sbr.rel (%p471) target = $region36
        $region35: #{formulanet_forward.1} parent=11 // pred_region
          _
        $region36: #{formulanet_forward.1} parent=11 // pred_fallthru
          _
        // Predicated region
        $region37: #{formulanet_forward.1} parent=11 // pred_check
          %p474 = pneg %p226
        $region38: #{formulanet_forward.1} parent=11 // pred_check_branch
          %476 = sbr.rel (%p474) target = $region40
        $region39: #{formulanet_forward.1} parent=11 // pred_region
          _
        $region40: #{formulanet_forward.1} parent=11 // pred_fallthru
          _
        // Predicated region
        $region41: #{formulanet_forward.1} parent=11 // pred_check
          %p477 = pneg %p247
        $region42: #{formulanet_forward.1} parent=11 // pred_check_branch
          %479 = sbr.rel (%p477) target = $region44
        $region43: #{formulanet_forward.1} parent=11 // pred_region
          _
        $region44: #{formulanet_forward.1} parent=11 // pred_fallthru
          _
        // Predicated region
        $region45: #{formulanet_forward.1} parent=11 // pred_check
          %p480 = pneg %p268
        $region46: #{formulanet_forward.1} parent=11 // pred_check_branch
          %482 = sbr.rel (%p480) target = $region48
        $region47: #{formulanet_forward.1} parent=11 // pred_region
          _
        $region48: #{formulanet_forward.1} parent=11 // pred_fallthru
          _
        // Predicated region
        $region49: #{formulanet_forward.1} parent=11 // pred_check
          %p483 = pneg %p289
        $region50: #{formulanet_forward.1} parent=11 // pred_check_branch
          %485 = sbr.rel (%p483) target = $region52
        $region51: #{formulanet_forward.1} parent=11 // pred_region
          _
        $region52: #{formulanet_forward.1} parent=11 // pred_fallthru
          _
        // Predicated region
        $region53: #{formulanet_forward.1} parent=11 // pred_check
          %p486 = pneg %p310
        $region54: #{formulanet_forward.1} parent=11 // pred_check_branch
          %488 = sbr.rel (%p486) target = $region56
        $region55: #{formulanet_forward.1} parent=11 // pred_region
          _
        $region56: #{formulanet_forward.1} parent=11 // pred_fallthru
          _
        // Predicated region
        $region57: #{formulanet_forward.1} parent=11 // pred_check
          %p489 = pneg %p331
        $region58: #{formulanet_forward.1} parent=11 // pred_check_branch
          %491 = sbr.rel (%p489) target = $region60
        $region59: #{formulanet_forward.1} parent=11 // pred_region
          _
        $region60: #{formulanet_forward.1} parent=11 // pred_fallthru
          _
        // Predicated region
        $region61: #{formulanet_forward.1} parent=11 // pred_check
          %p492 = pneg %p352
        $region62: #{formulanet_forward.1} parent=11 // pred_check_branch
          %494 = sbr.rel (%p492) target = $region64
        $region63: #{formulanet_forward.1} parent=11 // pred_region
          _
        $region64: #{formulanet_forward.1} parent=11 // pred_fallthru
          _
        // Predicated region
        $region65: #{formulanet_forward.1} parent=11 // pred_check
          %p495 = pneg %p373
        $region66: #{formulanet_forward.1} parent=11 // pred_check_branch
          %497 = sbr.rel (%p495) target = $region68
        $region67: #{formulanet_forward.1} parent=11 // pred_region
          _
        $region68: #{formulanet_forward.1} parent=11 // pred_fallthru
          _
        // Predicated region
        $region69: #{formulanet_forward.1} parent=11 // pred_check
          %p498 = pneg %p394
        $region70: #{formulanet_forward.1} parent=11 // pred_check_branch
          %500 = sbr.rel (%p498) target = $region72
        $region71: #{formulanet_forward.1} parent=11 // pred_region
          _
        $region72: #{formulanet_forward.1} parent=11 // pred_fallthru
          _
        // Predicated region
        $region73: #{formulanet_forward.1} parent=11 // pred_check
          %p501 = pneg %p415
        $region74: #{formulanet_forward.1} parent=11 // pred_check_branch
          %503 = sbr.rel (%p501) target = $region76
        $region75: #{formulanet_forward.1} parent=11 // pred_region
          _
        $region76: #{formulanet_forward.1} parent=11 // pred_fallthru
          _
      $region12: #{formulanet_forward.1} parent=5 // pred_fallthru
        _
      %p504 = scmp.lt.s32.totalorder %s27, 2
      // Predicated region
      $region77: #{formulanet_forward.1} parent=5 // pred_check
        %p505 = pneg %p504
      $region78: #{formulanet_forward.1} parent=5 // pred_check_branch
        %507 = sbr.rel (%p505) target = $region80
      $region79: #{formulanet_forward.1} parent=5 // pred_region
        // Predicated region
        $region81: #{formulanet_forward.1} parent=79 // pred_check
          %p508 = pneg %p47
        $region82: #{formulanet_forward.1} parent=79 // pred_check_branch
          %510 = sbr.rel (%p508) target = $region84
        $region83: #{formulanet_forward.1} parent=79 // pred_region
          %s511 = smul.u32 8, %s27
          %p512 = scmp.lt.s32.totalorder %s511, 15
          %s513 = scalar_select %p512, %s511, 15
          %s514 = smul.addr %s513, 4
          %s515 = scalar_lea.vmem %s0, %s514
          %s516 = smul.u32 8, %s27
        $region84: #{formulanet_forward.1} parent=79 // pred_fallthru
          _
        // Predicated region
        $region85: #{formulanet_forward.1} parent=79 // pred_check
          %p517 = pneg %p73
        $region86: #{formulanet_forward.1} parent=79 // pred_check_branch
          %519 = sbr.rel (%p517) target = $region88
        $region87: #{formulanet_forward.1} parent=79 // pred_region
          %s520 = smul.u32 8, %s27
          %p521 = scmp.lt.s32.totalorder %s520, 15
          %s522 = scalar_select %p521, %s520, 15
          %s523 = smul.addr %s522, 4
          %s524 = scalar_lea.vmem %s1, %s523
          %s525 = smul.u32 8, %s27
        $region88: #{formulanet_forward.1} parent=79 // pred_fallthru
          _
      $region80: #{formulanet_forward.1} parent=5 // pred_fallthru
        _
      %p526 = scmp.le.s32.totalorder 1, %s27
      %p527 = scmp.lt.s32.totalorder %s27, 3
      %p528 = pnand %p526, %p527
      %p529 = pneg %p528
      // Predicated region
      $region89: #{formulanet_forward.1} parent=5 // pred_check
        _
      $region90: #{formulanet_forward.1} parent=5 // pred_check_branch
        %531 = sbr.rel (%p528) target = $region92
      $region91: #{formulanet_forward.1} parent=5 // pred_region
        %s532 = ssub.s32 %s27, 1
        %s533 = smul.u32 8, %s32
        %p534 = scmp.lt.s32.totalorder %s533, 15
        %s535 = scalar_select %p534, %s533, 15
        %s536 = smul.addr %s535, 4
        %s537 = scalar_lea.vmem %s0, %s536
        %p538 = pneg %p53
        %p539 = pneg %p50
        %s540 = smul.u32 8, %s32
        %p541 = scmp.lt.s32.totalorder %s540, 15
        %s542 = scalar_select %p541, %s540, 15
        %s543 = smul.addr %s542, 4
        %s544 = scalar_lea.vmem %s1, %s543
        %p545 = pneg %p79
        %p546 = pneg %p76
        %p547 = pneg %p100
        %p548 = pneg %p97
        %p549 = pneg %p121
        %p550 = pneg %p118
        %p551 = pneg %p142
        %p552 = pneg %p139
        %p553 = pneg %p163
        %p554 = pneg %p160
        %p555 = pneg %p184
        %p556 = pneg %p181
        %p557 = pneg %p205
        %p558 = pneg %p202
        %p559 = pneg %p226
        %p560 = pneg %p223
        %p561 = pneg %p247
        %p562 = pneg %p244
        %p563 = pneg %p268
        %p564 = pneg %p265
        %p565 = pneg %p289
        %p566 = pneg %p286
        %p567 = pneg %p310
        %p568 = pneg %p307
        %p569 = pneg %p331
        %p570 = pneg %p328
        %p571 = pneg %p352
        %p572 = pneg %p349
        %p573 = pneg %p373
        %p574 = pneg %p370
        %p575 = pneg %p394
        %p576 = pneg %p391
        %p577 = pneg %p415
        %p578 = pneg %p412
        %p579 = pneg %p441
        %p580 = pneg %p438
        %s581 = sand.u32 %s428, 1
        %s582 = scalar_lea.sflag [#allocation4], %s581
        %s583 = sand.u32 %s428, 1
        %s584 = scalar_lea.vmem [#allocation3], %s583
        %s585 = smul.u32 8, %s32
        %p586 = scmp.lt.s32.totalorder %s585, 15
        %s587 = scalar_select %p586, %s585, 15
        %s588 = smul.addr %s587, 4
        %s589 = scalar_lea.vmem %s0, %s588
        %s590 = smul.u32 8, %s32
        %s591 = smul.u32 8, %s32
        %p592 = scmp.lt.s32.totalorder %s591, 15
        %s593 = scalar_select %p592, %s591, 15
        %s594 = smul.addr %s593, 4
        %s595 = scalar_lea.vmem %s1, %s594
        %s596 = smul.u32 8, %s32
        %598 = vst [vmem:[#allocation2 + $0x20] sm:$0xff] 0.0
        %vm599 = vcmask 130048
        %600 = vst.msk [vmem:[#allocation2 + $0x28] sm:$0xff] %vm599, 0.0
        %601 = vst [vmem:[#allocation2 + $0x30] sm:$0x1] 0.0
        %vm602 = vcmask 122880
        %603 = vst.msk [vmem:[#allocation2 + $0x38] sm:$0x1] %vm602, 0.0
        %604 = vst [vmem:[#allocation2 + $0x80] sm:$0x80] 0.0
        %vm605 = vcmask 130055
        %606 = vst.msk [vmem:[#allocation2 + $0x88] sm:$0x80] %vm605, 0.0
        %607 = vst [vmem:[#allocation2 + $0x90] sm:$0xff] 0.0
        %608 = vst.msk [vmem:[#allocation2 + $0x98] sm:$0xff] %vm599, 0.0
        %v609 = vld [vmem:[%s589] sm:$0xf]
        %v610 = vld [vmem:[%s589 + $0x4] sm:$0xf]
        %v611 = vld [vmem:[%s589 + $0x8] sm:$0xf]
        %v612 = vld [vmem:[%s589 + $0xc] sm:$0xf]
        %v613 = vld [vmem:[%s589 + $0x10] sm:$0xf]
        %v614 = vld [vmem:[%s589 + $0x14] sm:$0xf]
        %v615 = vld [vmem:[%s589 + $0x18] sm:$0xf]
        %v616 = vld [vmem:[%s589 + $0x1c] sm:$0xf]
        %v617 = vld [vmem:[%s5] sm:$0xf]
        %v618 = vld [vmem:[%s5 + $0x4] sm:$0xf]
        %v619 = vld [vmem:[%s5 + $0x8] sm:$0xf]
        %v620 = vld [vmem:[%s5 + $0xc] sm:$0xf]
        %v629 = vunpack.c.l.b16 %v609
        %v630 = vunpack.c.l.b16 %v610
        %v631 = vunpack.c.l.b16 %v611
        %v632 = vunpack.c.l.b16 %v612
        %v633 = vunpack.c.l.b16 %v613
        %v634 = vunpack.c.l.b16 %v614
        %v635 = vunpack.c.l.b16 %v615
        %v636 = vunpack.c.l.b16 %v616
        %v637 = vpack.c.b16 %v630, %v629
        %v638 = vpack.c.b16 %v632, %v631
        %v639 = vpack.c.b16 %v634, %v633
        %v640 = vpack.c.b16 %v636, %v635
        %v645 = vunpack.c.l.b16 %v617
        %v646 = vunpack.c.l.b16 %v618
        %v647 = vunpack.c.l.b16 %v619
        %v648 = vunpack.c.l.b16 %v620
        %v649 = vpack.c.b16 %v646, %v645
        %v650 = vpack.c.b16 %v648, %v647
        %vm653 = vcmask 261120
        %v655 = vsel %vm653, %v637, 0
        %v658 = vsel %vm653, %v638, 0
        %v661 = vsel %vm653, %v639, 0
        %v664 = vsel %vm653, %v640, 0
        %666 = vmatprep.subr.bf16.mxu0 0
        %667 = vmatpush1.bf16.msra.mxu0 %v649
        %668 = vmatprep.subr.bf16.mxu0 0
        %669 = vmatpush1.bf16.msra.mxu0 %v650
        %670 = vmatprep.subr.bf16.mxu0 0
        %671 = vmatpush1.bf16.msra.mxu0 0
        %672 = vmatprep.subr.bf16.mxu0 0
        %673 = vmatpush1.bf16.msra.mxu0 0
        %674 = vmatprep.subr.bf16.mxu0 0
        %675 = vmatpush1.bf16.msra.mxu0 0
        %676 = vmatprep.subr.bf16.mxu0 0
        %677 = vmatpush1.bf16.msra.mxu0 0
        %678 = vmatprep.subr.bf16.mxu0 0
        %679 = vmatpush1.bf16.msra.mxu0 0
        %680 = vmatprep.subr.bf16.mxu0 0
        %681 = vmatpush1.bf16.msra.mxu0 0
        %682 = vmatprep.subr.bf16.mxu0 0
        %683 = vmatpush1.bf16.msra.mxu0 0
        %684 = vmatprep.subr.bf16.mxu0 0
        %685 = vmatpush1.bf16.msra.mxu0 0
        %686 = vmatprep.subr.bf16.mxu0 0
        %687 = vmatpush1.bf16.msra.mxu0 0
        %688 = vmatprep.subr.bf16.mxu0 0
        %689 = vmatpush1.bf16.msra.mxu0 0
        %690 = vmatprep.subr.bf16.mxu0 0
        %691 = vmatpush1.bf16.msra.mxu0 0
        %692 = vmatprep.subr.bf16.mxu0 0
        %693 = vmatpush1.bf16.msra.mxu0 0
        %694 = vmatprep.subr.bf16.mxu0 0
        %695 = vmatpush1.bf16.msra.mxu0 0
        %696 = vmatprep.subr.bf16.mxu0 0
        %697 = vmatpush1.bf16.msra.mxu0 0
        %698 = vmatprep.mubr.bf16.mxu0 0
        %699 = vmatmul.mubr.bf16.gmra.mrb[0].mxu0 %v655
        %v700 = vpop.f32.mrb[0].mxu0
        %v701 = vadd.f32 0.0, %v700
        %v702 = vpop.f32.mrb[0].mxu0
        %v703 = vpop.f32.mrb[0].mxu0
        %v704 = vadd.f32 0.0, %v703
        %v705 = vpop.f32.mrb[0].mxu0
        %706 = vmatprep.mubr.bf16.mxu0 0
        %707 = vmatmul.mubr.bf16.gmra.mrb[0].mxu0 %v658
        %v708 = vpop.f32.mrb[0].mxu0
        %v709 = vadd.f32 0.0, %v708
        %v710 = vpop.f32.mrb[0].mxu0
        %v711 = vpop.f32.mrb[0].mxu0
        %v712 = vadd.f32 0.0, %v711
        %v713 = vpop.f32.mrb[0].mxu0
        %714 = vmatprep.mubr.bf16.mxu0 0
        %715 = vmatmul.mubr.bf16.gmra.mrb[0].mxu0 %v661
        %v716 = vpop.f32.mrb[0].mxu0
        %v717 = vadd.f32 0.0, %v716
        %v718 = vpop.f32.mrb[0].mxu0
        %v719 = vpop.f32.mrb[0].mxu0
        %v720 = vadd.f32 0.0, %v719
        %v721 = vpop.f32.mrb[0].mxu0
        %722 = vmatprep.mubr.bf16.mxu0 0
        %723 = vmatmul.mubr.bf16.gmra.mrb[0].mxu0 %v664
        %v724 = vpop.f32.mrb[0].mxu0
        %v725 = vadd.f32 0.0, %v724
        %v726 = vpop.f32.mrb[0].mxu0
        %v727 = vpop.f32.mrb[0].mxu0
        %v728 = vadd.f32 0.0, %v727
        %v729 = vpop.f32.mrb[0].mxu0
        %730 = vdwg.mxu0
        %v731 = vmax.f32 %v701, 0.0
        %v732 = vmax.f32 %v704, 0.0
        %v733 = vmax.f32 %v709, 0.0
        %v734 = vmax.f32 %v712, 0.0
        %v735 = vmax.f32 %v717, 0.0
        %v736 = vmax.f32 %v720, 0.0
        %v737 = vmax.f32 %v725, 0.0
        %v738 = vmax.f32 %v728, 0.0
        %v739 = vld [vmem:[%s595] sm:$0xf]
        %v740 = vld [vmem:[%s595 + $0x4] sm:$0xf]
        %v741 = vld [vmem:[%s595 + $0x8] sm:$0xf]
        %v742 = vld [vmem:[%s595 + $0xc] sm:$0xf]
        %v743 = vld [vmem:[%s595 + $0x10] sm:$0xf]
        %v744 = vld [vmem:[%s595 + $0x14] sm:$0xf]
        %v745 = vld [vmem:[%s595 + $0x18] sm:$0xf]
        %v746 = vld [vmem:[%s595 + $0x1c] sm:$0xf]
        %v747 = vld [vmem:[%s6] sm:$0xf]
        %v748 = vld [vmem:[%s6 + $0x4] sm:$0xf]
        %v749 = vld [vmem:[%s6 + $0x8] sm:$0xf]
        %v750 = vld [vmem:[%s6 + $0xc] sm:$0xf]
        %v759 = vunpack.c.l.b16 %v739
        %v760 = vunpack.c.l.b16 %v740
        %v761 = vunpack.c.l.b16 %v741
        %v762 = vunpack.c.l.b16 %v742
        %v763 = vunpack.c.l.b16 %v743
        %v764 = vunpack.c.l.b16 %v744
        %v765 = vunpack.c.l.b16 %v745
        %v766 = vunpack.c.l.b16 %v746
        %v767 = vpack.c.b16 %v760, %v759
        %v768 = vpack.c.b16 %v762, %v761
        %v769 = vpack.c.b16 %v764, %v763
        %v770 = vpack.c.b16 %v766, %v765
        %v775 = vunpack.c.l.b16 %v747
        %v776 = vunpack.c.l.b16 %v748
        %v777 = vunpack.c.l.b16 %v749
        %v778 = vunpack.c.l.b16 %v750
        %v779 = vpack.c.b16 %v776, %v775
        %v780 = vpack.c.b16 %v778, %v777
        %v784 = vsel %vm653, %v767, 0
        %v787 = vsel %vm653, %v768, 0
        %v790 = vsel %vm653, %v769, 0
        %v793 = vsel %vm653, %v770, 0
        %795 = vmatprep.subr.bf16.mxu0 0
        %796 = vmatpush1.bf16.msra.mxu0 %v779
        %797 = vmatprep.subr.bf16.mxu0 0
        %798 = vmatpush1.bf16.msra.mxu0 %v780
        %799 = vmatprep.subr.bf16.mxu0 0
        %800 = vmatpush1.bf16.msra.mxu0 0
        %801 = vmatprep.subr.bf16.mxu0 0
        %802 = vmatpush1.bf16.msra.mxu0 0
        %803 = vmatprep.subr.bf16.mxu0 0
        %804 = vmatpush1.bf16.msra.mxu0 0
        %805 = vmatprep.subr.bf16.mxu0 0
        %806 = vmatpush1.bf16.msra.mxu0 0
        %807 = vmatprep.subr.bf16.mxu0 0
        %808 = vmatpush1.bf16.msra.mxu0 0
        %809 = vmatprep.subr.bf16.mxu0 0
        %810 = vmatpush1.bf16.msra.mxu0 0
        %811 = vmatprep.subr.bf16.mxu0 0
        %812 = vmatpush1.bf16.msra.mxu0 0
        %813 = vmatprep.subr.bf16.mxu0 0
        %814 = vmatpush1.bf16.msra.mxu0 0
        %815 = vmatprep.subr.bf16.mxu0 0
        %816 = vmatpush1.bf16.msra.mxu0 0
        %817 = vmatprep.subr.bf16.mxu0 0
        %818 = vmatpush1.bf16.msra.mxu0 0
        %819 = vmatprep.subr.bf16.mxu0 0
        %820 = vmatpush1.bf16.msra.mxu0 0
        %821 = vmatprep.subr.bf16.mxu0 0
        %822 = vmatpush1.bf16.msra.mxu0 0
        %823 = vmatprep.subr.bf16.mxu0 0
        %824 = vmatpush1.bf16.msra.mxu0 0
        %825 = vmatprep.subr.bf16.mxu0 0
        %826 = vmatpush1.bf16.msra.mxu0 0
        %827 = vmatprep.mubr.bf16.mxu0 0
        %828 = vmatmul.mubr.bf16.gmra.mrb[0].mxu0 %v784
        %v829 = vpop.f32.mrb[0].mxu0
        %v830 = vadd.f32 0.0, %v829
        %v831 = vpop.f32.mrb[0].mxu0
        %v832 = vpop.f32.mrb[0].mxu0
        %v833 = vadd.f32 0.0, %v832
        %v834 = vpop.f32.mrb[0].mxu0
        %835 = vmatprep.mubr.bf16.mxu0 0
        %836 = vmatmul.mubr.bf16.gmra.mrb[0].mxu0 %v787
        %v837 = vpop.f32.mrb[0].mxu0
        %v838 = vadd.f32 0.0, %v837
        %v839 = vpop.f32.mrb[0].mxu0
        %v840 = vpop.f32.mrb[0].mxu0
        %v841 = vadd.f32 0.0, %v840
        %v842 = vpop.f32.mrb[0].mxu0
        %843 = vmatprep.mubr.bf16.mxu0 0
        %844 = vmatmul.mubr.bf16.gmra.mrb[0].mxu0 %v790
        %v845 = vpop.f32.mrb[0].mxu0
        %v846 = vadd.f32 0.0, %v845
        %v847 = vpop.f32.mrb[0].mxu0
        %v848 = vpop.f32.mrb[0].mxu0
        %v849 = vadd.f32 0.0, %v848
        %v850 = vpop.f32.mrb[0].mxu0
        %851 = vmatprep.mubr.bf16.mxu0 0
        %852 = vmatmul.mubr.bf16.gmra.mrb[0].mxu0 %v793
        %v853 = vpop.f32.mrb[0].mxu0
        %v854 = vadd.f32 0.0, %v853
        %v855 = vpop.f32.mrb[0].mxu0
        %v856 = vpop.f32.mrb[0].mxu0
        %v857 = vadd.f32 0.0, %v856
        %v858 = vpop.f32.mrb[0].mxu0
        %859 = vdwg.mxu0
        %v860 = vmax.f32 %v830, 0.0
        %v861 = vmax.f32 %v833, 0.0
        %v862 = vmax.f32 %v838, 0.0
        %v863 = vmax.f32 %v841, 0.0
        %v864 = vmax.f32 %v846, 0.0
        %v865 = vmax.f32 %v849, 0.0
        %v866 = vmax.f32 %v854, 0.0
        %v867 = vmax.f32 %v857, 0.0
        %vm876 = vcmask 1040384
        %v877 = vrot.slane %v860, 7
        %v878 = vrot.slane %v861, 7
        %v879 = vsel %vm876, %v877, %v878
        %v880 = vrot.slane %v862, 7
        %v881 = vsel %vm876, %v878, %v880
        %v882 = vrot.slane %v863, 7
        %v883 = vsel %vm876, %v880, %v882
        %v884 = vrot.slane %v864, 7
        %v885 = vsel %vm876, %v882, %v884
        %v886 = vrot.slane %v865, 7
        %v887 = vsel %vm876, %v884, %v886
        %v888 = vrot.slane %v866, 7
        %v889 = vsel %vm876, %v886, %v888
        %v890 = vrot.slane %v867, 7
        %v891 = vsel %vm876, %v888, %v890
        %vm901 = vcmask 31745
        %902 = vst.msk [vmem:[#allocation2 + $0x30] sm:$0xfe] %vm901, %v877
        %vm903 = vcmask 31744
        %904 = vst.msk [vmem:[#allocation2 + $0x40] sm:$0xff] %vm903, %v879
        %905 = vst.msk [vmem:[#allocation2 + $0x50] sm:$0xff] %vm903, %v881
        %906 = vst.msk [vmem:[#allocation2 + $0x60] sm:$0xff] %vm903, %v883
        %907 = vst.msk [vmem:[#allocation2 + $0x70] sm:$0xff] %vm903, %v885
        %908 = vst.msk [vmem:[#allocation2 + $0x80] sm:$0xff] %vm903, %v887
        %909 = vst.msk [vmem:[#allocation2 + $0x90] sm:$0xff] %vm903, %v889
        %910 = vst.msk [vmem:[#allocation2 + $0xa0] sm:$0xff] %vm903, %v891
        %vm911 = vcmask 24576
        %912 = vst.msk [vmem:[#allocation2 + $0xb0] sm:$0x1] %vm911, %v890
        %913 = vrot.lane.b32.xlu0 %v860, 4
        %v914 = vpop.permute.xlu0 %913
        %915 = vrot.lane.b32.xlu0 %v861, 4
        %v916 = vpop.permute.xlu0 %915
        %917 = vrot.lane.b32.xlu0 %v862, 4
        %v918 = vpop.permute.xlu0 %917
        %919 = vrot.lane.b32.xlu0 %v863, 4
        %v920 = vpop.permute.xlu0 %919
        %921 = vrot.lane.b32.xlu0 %v864, 4
        %v922 = vpop.permute.xlu0 %921
        %923 = vrot.lane.b32.xlu0 %v865, 4
        %v924 = vpop.permute.xlu0 %923
        %925 = vrot.lane.b32.xlu0 %v866, 4
        %v926 = vpop.permute.xlu0 %925
        %927 = vrot.lane.b32.xlu0 %v867, 4
        %v928 = vpop.permute.xlu0 %927
        %vm937 = vcmask 64544
        %938 = vst.msk [vmem:[#allocation2 + $0x30] sm:$0xff] %vm937, %v914
        %939 = vst.msk [vmem:[#allocation2 + $0x40] sm:$0xff] %vm937, %v916
        %940 = vst.msk [vmem:[#allocation2 + $0x50] sm:$0xff] %vm937, %v918
        %941 = vst.msk [vmem:[#allocation2 + $0x60] sm:$0xff] %vm937, %v920
        %942 = vst.msk [vmem:[#allocation2 + $0x70] sm:$0xff] %vm937, %v922
        %943 = vst.msk [vmem:[#allocation2 + $0x80] sm:$0xff] %vm937, %v924
        %944 = vst.msk [vmem:[#allocation2 + $0x90] sm:$0xff] %vm937, %v926
        %945 = vst.msk [vmem:[#allocation2 + $0xa0] sm:$0xff] %vm937, %v928
        %vm946 = vcmask 1046528
        %v947 = vrot.slane %v860, 1
        %v948 = vrot.slane %v861, 1
        %v949 = vsel %vm946, %v947, %v948
        %v950 = vrot.slane %v862, 1
        %v951 = vsel %vm946, %v948, %v950
        %v952 = vrot.slane %v863, 1
        %v953 = vsel %vm946, %v950, %v952
        %v954 = vrot.slane %v864, 1
        %v955 = vsel %vm946, %v952, %v954
        %v956 = vrot.slane %v865, 1
        %v957 = vsel %vm946, %v954, %v956
        %v958 = vrot.slane %v866, 1
        %v959 = vsel %vm946, %v956, %v958
        %v960 = vrot.slane %v867, 1
        %v961 = vsel %vm946, %v958, %v960
        %962 = vrot.lane.b32.xlu0 %v947, 8
        %v963 = vpop.permute.xlu0 %962
        %964 = vrot.lane.b32.xlu0 %v949, 8
        %v965 = vpop.permute.xlu0 %964
        %966 = vrot.lane.b32.xlu0 %v951, 8
        %v967 = vpop.permute.xlu0 %966
        %968 = vrot.lane.b32.xlu0 %v953, 8
        %v969 = vpop.permute.xlu0 %968
        %970 = vrot.lane.b32.xlu0 %v955, 8
        %v971 = vpop.permute.xlu0 %970
        %972 = vrot.lane.b32.xlu0 %v957, 8
        %v973 = vpop.permute.xlu0 %972
        %974 = vrot.lane.b32.xlu0 %v959, 8
        %v975 = vpop.permute.xlu0 %974
        %976 = vrot.lane.b32.xlu0 %v961, 8
        %v977 = vpop.permute.xlu0 %976
        %978 = vrot.lane.b32.xlu0 %v960, 8
        %v979 = vpop.permute.xlu0 %978
        %vm989 = vcmask 97351
        %990 = vst.msk [vmem:[#allocation2 + $0x20] sm:$0x80] %vm989, %v963
        %vm991 = vcmask 97344
        %992 = vst.msk [vmem:[#allocation2 + $0x30] sm:$0xff] %vm991, %v965
        %993 = vst.msk [vmem:[#allocation2 + $0x40] sm:$0xff] %vm991, %v967
        %994 = vst.msk [vmem:[#allocation2 + $0x50] sm:$0xff] %vm991, %v969
        %995 = vst.msk [vmem:[#allocation2 + $0x60] sm:$0xff] %vm991, %v971
        %996 = vst.msk [vmem:[#allocation2 + $0x70] sm:$0xff] %vm991, %v973
        %997 = vst.msk [vmem:[#allocation2 + $0x80] sm:$0xff] %vm991, %v975
        %998 = vst.msk [vmem:[#allocation2 + $0x90] sm:$0xff] %vm991, %v977
        %vm999 = vcmask 96320
        %1000 = vst.msk [vmem:[#allocation2 + $0xa0] sm:$0x7f] %vm999, %v979
        %1001 = vrot.lane.b32.xlu0 %v877, 12
        %v1002 = vpop.permute.xlu0 %1001
        %1003 = vrot.lane.b32.xlu0 %v879, 12
        %v1004 = vpop.permute.xlu0 %1003
        %1005 = vrot.lane.b32.xlu0 %v881, 12
        %v1006 = vpop.permute.xlu0 %1005
        %1007 = vrot.lane.b32.xlu0 %v883, 12
        %v1008 = vpop.permute.xlu0 %1007
        %1009 = vrot.lane.b32.xlu0 %v885, 12
        %v1010 = vpop.permute.xlu0 %1009
        %1011 = vrot.lane.b32.xlu0 %v887, 12
        %v1012 = vpop.permute.xlu0 %1011
        %1013 = vrot.lane.b32.xlu0 %v889, 12
        %v1014 = vpop.permute.xlu0 %1013
        %1015 = vrot.lane.b32.xlu0 %v891, 12
        %v1016 = vpop.permute.xlu0 %1015
        %1017 = vrot.lane.b32.xlu0 %v890, 12
        %v1018 = vpop.permute.xlu0 %1017
        %vm1028 = vcmask 130145
        %1029 = vst.msk [vmem:[#allocation2 + $0x20] sm:$0xfe] %vm1028, %v1002
        %vm1030 = vcmask 130144
        %1031 = vst.msk [vmem:[#allocation2 + $0x30] sm:$0xff] %vm1030, %v1004
        %1032 = vst.msk [vmem:[#allocation2 + $0x40] sm:$0xff] %vm1030, %v1006
        %1033 = vst.msk [vmem:[#allocation2 + $0x50] sm:$0xff] %vm1030, %v1008
        %1034 = vst.msk [vmem:[#allocation2 + $0x60] sm:$0xff] %vm1030, %v1010
        %1035 = vst.msk [vmem:[#allocation2 + $0x70] sm:$0xff] %vm1030, %v1012
        %1036 = vst.msk [vmem:[#allocation2 + $0x80] sm:$0xff] %vm1030, %v1014
        %1037 = vst.msk [vmem:[#allocation2 + $0x90] sm:$0xff] %vm1030, %v1016
        %vm1038 = vcmask 122976
        %1039 = vst.msk [vmem:[#allocation2 + $0xa0] sm:$0x1] %vm1038, %v1018
        %1040 = vrot.lane.b32.xlu0 %v860, 16
        %v1041 = vpop.permute.xlu0 %1040
        %1042 = vrot.lane.b32.xlu0 %v861, 16
        %v1043 = vpop.permute.xlu0 %1042
        %1044 = vrot.lane.b32.xlu0 %v862, 16
        %v1045 = vpop.permute.xlu0 %1044
        %1046 = vrot.lane.b32.xlu0 %v863, 16
        %v1047 = vpop.permute.xlu0 %1046
        %1048 = vrot.lane.b32.xlu0 %v864, 16
        %v1049 = vpop.permute.xlu0 %1048
        %1050 = vrot.lane.b32.xlu0 %v865, 16
        %v1051 = vpop.permute.xlu0 %1050
        %1052 = vrot.lane.b32.xlu0 %v866, 16
        %v1053 = vpop.permute.xlu0 %1052
        %1054 = vrot.lane.b32.xlu0 %v867, 16
        %v1055 = vpop.permute.xlu0 %1054
        %vm1064 = vcmask 162944
        %1065 = vst.msk [vmem:[#allocation2 + $0x20] sm:$0xff] %vm1064, %v1041
        %1066 = vst.msk [vmem:[#allocation2 + $0x30] sm:$0xff] %vm1064, %v1043
        %1067 = vst.msk [vmem:[#allocation2 + $0x40] sm:$0xff] %vm1064, %v1045
        %1068 = vst.msk [vmem:[#allocation2 + $0x50] sm:$0xff] %vm1064, %v1047
        %1069 = vst.msk [vmem:[#allocation2 + $0x60] sm:$0xff] %vm1064, %v1049
        %1070 = vst.msk [vmem:[#allocation2 + $0x70] sm:$0xff] %vm1064, %v1051
        %1071 = vst.msk [vmem:[#allocation2 + $0x80] sm:$0xff] %vm1064, %v1053
        %1072 = vst.msk [vmem:[#allocation2 + $0x90] sm:$0xff] %vm1064, %v1055
        %1073 = vrot.lane.b32.xlu0 %v947, 20
        %v1074 = vpop.permute.xlu0 %1073
        %1075 = vrot.lane.b32.xlu0 %v949, 20
        %v1076 = vpop.permute.xlu0 %1075
        %1077 = vrot.lane.b32.xlu0 %v951, 20
        %v1078 = vpop.permute.xlu0 %1077
        %1079 = vrot.lane.b32.xlu0 %v953, 20
        %v1080 = vpop.permute.xlu0 %1079
        %1081 = vrot.lane.b32.xlu0 %v955, 20
        %v1082 = vpop.permute.xlu0 %1081
        %1083 = vrot.lane.b32.xlu0 %v957, 20
        %v1084 = vpop.permute.xlu0 %1083
        %1085 = vrot.lane.b32.xlu0 %v959, 20
        %v1086 = vpop.permute.xlu0 %1085
        %1087 = vrot.lane.b32.xlu0 %v961, 20
        %v1088 = vpop.permute.xlu0 %1087
        %1089 = vrot.lane.b32.xlu0 %v960, 20
        %v1090 = vpop.permute.xlu0 %1089
        %vm1100 = vcmask 195751
        %1101 = vst.msk [vmem:[#allocation2 + $0x10] sm:$0x80] %vm1100, %v1074
        %vm1102 = vcmask 195744
        %1103 = vst.msk [vmem:[#allocation2 + $0x20] sm:$0xff] %vm1102, %v1076
        %1104 = vst.msk [vmem:[#allocation2 + $0x30] sm:$0xff] %vm1102, %v1078
        %1105 = vst.msk [vmem:[#allocation2 + $0x40] sm:$0xff] %vm1102, %v1080
        %1106 = vst.msk [vmem:[#allocation2 + $0x50] sm:$0xff] %vm1102, %v1082
        %1107 = vst.msk [vmem:[#allocation2 + $0x60] sm:$0xff] %vm1102, %v1084
        %1108 = vst.msk [vmem:[#allocation2 + $0x70] sm:$0xff] %vm1102, %v1086
        %1109 = vst.msk [vmem:[#allocation2 + $0x80] sm:$0xff] %vm1102, %v1088
        %vm1110 = vcmask 194720
        %1111 = vst.msk [vmem:[#allocation2 + $0x90] sm:$0x7f] %vm1110, %v1090
        %1112 = vrot.lane.b32.xlu0 %v877, 24
        %v1113 = vpop.permute.xlu0 %1112
        %1114 = vrot.lane.b32.xlu0 %v879, 24
        %v1115 = vpop.permute.xlu0 %1114
        %1116 = vrot.lane.b32.xlu0 %v881, 24
        %v1117 = vpop.permute.xlu0 %1116
        %1118 = vrot.lane.b32.xlu0 %v883, 24
        %v1119 = vpop.permute.xlu0 %1118
        %1120 = vrot.lane.b32.xlu0 %v885, 24
        %v1121 = vpop.permute.xlu0 %1120
        %1122 = vrot.lane.b32.xlu0 %v887, 24
        %v1123 = vpop.permute.xlu0 %1122
        %1124 = vrot.lane.b32.xlu0 %v889, 24
        %v1125 = vpop.permute.xlu0 %1124
        %1126 = vrot.lane.b32.xlu0 %v891, 24
        %v1127 = vpop.permute.xlu0 %1126
        %1128 = vrot.lane.b32.xlu0 %v890, 24
        %v1129 = vpop.permute.xlu0 %1128
        %vm1139 = vcmask 228545
        %1140 = vst.msk [vmem:[#allocation2 + $0x10] sm:$0xfe] %vm1139, %v1113
        %vm1141 = vcmask 228544
        %1142 = vst.msk [vmem:[#allocation2 + $0x20] sm:$0xff] %vm1141, %v1115
        %1143 = vst.msk [vmem:[#allocation2 + $0x30] sm:$0xff] %vm1141, %v1117
        %1144 = vst.msk [vmem:[#allocation2 + $0x40] sm:$0xff] %vm1141, %v1119
        %1145 = vst.msk [vmem:[#allocation2 + $0x50] sm:$0xff] %vm1141, %v1121
        %1146 = vst.msk [vmem:[#allocation2 + $0x60] sm:$0xff] %vm1141, %v1123
        %1147 = vst.msk [vmem:[#allocation2 + $0x70] sm:$0xff] %vm1141, %v1125
        %1148 = vst.msk [vmem:[#allocation2 + $0x80] sm:$0xff] %vm1141, %v1127
        %vm1149 = vcmask 221376
        %1150 = vst.msk [vmem:[#allocation2 + $0x90] sm:$0x1] %vm1149, %v1129
        %1151 = vrot.lane.b32.xlu0 %v860, 28
        %v1152 = vpop.permute.xlu0 %1151
        %1153 = vrot.lane.b32.xlu0 %v861, 28
        %v1154 = vpop.permute.xlu0 %1153
        %1155 = vrot.lane.b32.xlu0 %v862, 28
        %v1156 = vpop.permute.xlu0 %1155
        %1157 = vrot.lane.b32.xlu0 %v863, 28
        %v1158 = vpop.permute.xlu0 %1157
        %1159 = vrot.lane.b32.xlu0 %v864, 28
        %v1160 = vpop.permute.xlu0 %1159
        %1161 = vrot.lane.b32.xlu0 %v865, 28
        %v1162 = vpop.permute.xlu0 %1161
        %1163 = vrot.lane.b32.xlu0 %v866, 28
        %v1164 = vpop.permute.xlu0 %1163
        %1165 = vrot.lane.b32.xlu0 %v867, 28
        %v1166 = vpop.permute.xlu0 %1165
        %vm1175 = vcmask 261344
        %1176 = vst.msk [vmem:[#allocation2 + $0x10] sm:$0xff] %vm1175, %v1152
        %1177 = vst.msk [vmem:[#allocation2 + $0x20] sm:$0xff] %vm1175, %v1154
        %1178 = vst.msk [vmem:[#allocation2 + $0x30] sm:$0xff] %vm1175, %v1156
        %1179 = vst.msk [vmem:[#allocation2 + $0x40] sm:$0xff] %vm1175, %v1158
        %1180 = vst.msk [vmem:[#allocation2 + $0x50] sm:$0xff] %vm1175, %v1160
        %1181 = vst.msk [vmem:[#allocation2 + $0x60] sm:$0xff] %vm1175, %v1162
        %1182 = vst.msk [vmem:[#allocation2 + $0x70] sm:$0xff] %vm1175, %v1164
        %1183 = vst.msk [vmem:[#allocation2 + $0x80] sm:$0xff] %vm1175, %v1166
        %1184 = vrot.lane.b32.xlu0 %v947, 32
        %v1185 = vpop.permute.xlu0 %1184
        %1186 = vrot.lane.b32.xlu0 %v949, 32
        %v1187 = vpop.permute.xlu0 %1186
        %1188 = vrot.lane.b32.xlu0 %v951, 32
        %v1189 = vpop.permute.xlu0 %1188
        %1190 = vrot.lane.b32.xlu0 %v953, 32
        %v1191 = vpop.permute.xlu0 %1190
        %1192 = vrot.lane.b32.xlu0 %v955, 32
        %v1193 = vpop.permute.xlu0 %1192
        %1194 = vrot.lane.b32.xlu0 %v957, 32
        %v1195 = vpop.permute.xlu0 %1194
        %1196 = vrot.lane.b32.xlu0 %v959, 32
        %v1197 = vpop.permute.xlu0 %1196
        %1198 = vrot.lane.b32.xlu0 %v961, 32
        %v1199 = vpop.permute.xlu0 %1198
        %1200 = vrot.lane.b32.xlu0 %v960, 32
        %v1201 = vpop.permute.xlu0 %1200
        %vm1211 = vcmask 294151
        %1212 = vst.msk [vmem:[#allocation2] sm:$0x80] %vm1211, %v1185
        %vm1213 = vcmask 294144
        %1214 = vst.msk [vmem:[#allocation2 + $0x10] sm:$0xff] %vm1213, %v1187
        %1215 = vst.msk [vmem:[#allocation2 + $0x20] sm:$0xff] %vm1213, %v1189
        %1216 = vst.msk [vmem:[#allocation2 + $0x30] sm:$0xff] %vm1213, %v1191
        %1217 = vst.msk [vmem:[#allocation2 + $0x40] sm:$0xff] %vm1213, %v1193
        %1218 = vst.msk [vmem:[#allocation2 + $0x50] sm:$0xff] %vm1213, %v1195
        %1219 = vst.msk [vmem:[#allocation2 + $0x60] sm:$0xff] %vm1213, %v1197
        %1220 = vst.msk [vmem:[#allocation2 + $0x70] sm:$0xff] %vm1213, %v1199
        %vm1221 = vcmask 293120
        %1222 = vst.msk [vmem:[#allocation2 + $0x80] sm:$0x7f] %vm1221, %v1201
        %v1223 = vld [vmem:[#allocation2 + $0x20] sm:$0xff]
        %v1224 = vld [vmem:[#allocation2 + $0x30] sm:$0xff]
        %v1225 = vld [vmem:[#allocation2 + $0x40] sm:$0xff]
        %v1226 = vld [vmem:[#allocation2 + $0x50] sm:$0xff]
        %v1227 = vld [vmem:[#allocation2 + $0x60] sm:$0xff]
        %v1228 = vld [vmem:[#allocation2 + $0x70] sm:$0xff]
        %v1229 = vld [vmem:[#allocation2 + $0x80] sm:$0xff]
        %v1230 = vld [vmem:[#allocation2 + $0x90] sm:$0xff]
        %v1231 = vld [vmem:[%s2] sm:$0xff]
        %v1232 = vld [vmem:[%s2 + $0x8] sm:$0xff]
        %v1233 = vld [vmem:[%s2 + $0x10] sm:$0xff]
        %v1234 = vld [vmem:[%s2 + $0x18] sm:$0xff]
        %v1235 = vld [vmem:[%s2 + $0x20] sm:$0xff]
        %v1236 = vld [vmem:[%s2 + $0x28] sm:$0xff]
        %v1237 = vld [vmem:[%s2 + $0x30] sm:$0xff]
        %v1238 = vld [vmem:[%s2 + $0x38] sm:$0xff]
        %v1239 = vmul.f32 %v1223, %v1231
        %v1240 = vmul.f32 %v1224, %v1232
        %v1241 = vmul.f32 %v1225, %v1233
        %v1242 = vmul.f32 %v1226, %v1234
        %v1243 = vmul.f32 %v1227, %v1235
        %v1244 = vmul.f32 %v1228, %v1236
        %v1245 = vmul.f32 %v1229, %v1237
        %v1246 = vmul.f32 %v1230, %v1238
        %v1247 = vpack.c.bf16 %v1240, %v1239
        %v1248 = vpack.c.bf16 %v1242, %v1241
        %v1249 = vpack.c.bf16 %v1244, %v1243
        %v1250 = vpack.c.bf16 %v1246, %v1245
        %v1251 = vld [vmem:[%s7] sm:$0xf]
        %v1252 = vld [vmem:[%s7 + $0x4] sm:$0xf]
        %v1253 = vld [vmem:[%s7 + $0x8] sm:$0xf]
        %v1254 = vld [vmem:[%s7 + $0xc] sm:$0xf]
        %v1255 = vld [vmem:[%s7 + $0x10] sm:$0x3]
        %v1261 = vunpack.c.l.b16 %v1251
        %v1262 = vunpack.c.l.b16 %v1252
        %v1263 = vunpack.c.l.b16 %v1253
        %v1264 = vunpack.c.l.b16 %v1254
        %v1265 = vunpack.c.l.b16 %v1255
        %v1266 = vpack.c.b16 %v1262, %v1261
        %v1267 = vpack.c.b16 %v1264, %v1263
        %v1268 = vpack.c.b16 %v1265, %v1265
        %vm1271 = vcmask 293888
        %v1273 = vsel %vm1271, %v1247, 0
        %v1276 = vsel %vm1271, %v1248, 0
        %v1279 = vsel %vm1271, %v1249, 0
        %v1282 = vsel %vm1271, %v1250, 0
        %vm1284 = vcmask 1041408
        %v1286 = vsel %vm1284, %v1268, 0
        %1288 = vmatprep.subr.bf16.mxu0 0
        %1289 = vmatpush1.bf16.msra.mxu0 %v1266
        %1290 = vmatprep.subr.bf16.mxu0 0
        %1291 = vmatpush1.bf16.msra.mxu0 %v1267
        %1292 = vmatprep.subr.bf16.mxu0 0
        %1293 = vmatpush1.bf16.msra.mxu0 %v1286
        %1294 = vmatprep.subr.bf16.mxu0 0
        %1295 = vmatpush1.bf16.msra.mxu0 0
        %1296 = vmatprep.subr.bf16.mxu0 0
        %1297 = vmatpush1.bf16.msra.mxu0 0
        %1298 = vmatprep.subr.bf16.mxu0 0
        %1299 = vmatpush1.bf16.msra.mxu0 0
        %1300 = vmatprep.subr.bf16.mxu0 0
        %1301 = vmatpush1.bf16.msra.mxu0 0
        %1302 = vmatprep.subr.bf16.mxu0 0
        %1303 = vmatpush1.bf16.msra.mxu0 0
        %1304 = vmatprep.subr.bf16.mxu0 0
        %1305 = vmatpush1.bf16.msra.mxu0 0
        %1306 = vmatprep.subr.bf16.mxu0 0
        %1307 = vmatpush1.bf16.msra.mxu0 0
        %1308 = vmatprep.subr.bf16.mxu0 0
        %1309 = vmatpush1.bf16.msra.mxu0 0
        %1310 = vmatprep.subr.bf16.mxu0 0
        %1311 = vmatpush1.bf16.msra.mxu0 0
        %1312 = vmatprep.subr.bf16.mxu0 0
        %1313 = vmatpush1.bf16.msra.mxu0 0
        %1314 = vmatprep.subr.bf16.mxu0 0
        %1315 = vmatpush1.bf16.msra.mxu0 0
        %1316 = vmatprep.subr.bf16.mxu0 0
        %1317 = vmatpush1.bf16.msra.mxu0 0
        %1318 = vmatprep.subr.bf16.mxu0 0
        %1319 = vmatpush1.bf16.msra.mxu0 0
        %1320 = vmatprep.mubr.bf16.mxu0 0
        %1321 = vmatmul.mubr.bf16.gmra.mrb[0].mxu0 %v1273
        %v1322 = vpop.f32.mrb[0].mxu0
        %v1323 = vadd.f32 0.0, %v1322
        %v1324 = vpop.f32.mrb[0].mxu0
        %v1325 = vpop.f32.mrb[0].mxu0
        %v1326 = vadd.f32 0.0, %v1325
        %v1327 = vpop.f32.mrb[0].mxu0
        %1328 = vmatprep.mubr.bf16.mxu0 0
        %1329 = vmatmul.mubr.bf16.gmra.mrb[0].mxu0 %v1276
        %v1330 = vpop.f32.mrb[0].mxu0
        %v1331 = vadd.f32 0.0, %v1330
        %v1332 = vpop.f32.mrb[0].mxu0
        %v1333 = vpop.f32.mrb[0].mxu0
        %v1334 = vadd.f32 0.0, %v1333
        %v1335 = vpop.f32.mrb[0].mxu0
        %1336 = vmatprep.mubr.bf16.mxu0 0
        %1337 = vmatmul.mubr.bf16.gmra.mrb[0].mxu0 %v1279
        %v1338 = vpop.f32.mrb[0].mxu0
        %v1339 = vadd.f32 0.0, %v1338
        %v1340 = vpop.f32.mrb[0].mxu0
        %v1341 = vpop.f32.mrb[0].mxu0
        %v1342 = vadd.f32 0.0, %v1341
        %v1343 = vpop.f32.mrb[0].mxu0
        %1344 = vmatprep.mubr.bf16.mxu0 0
        %1345 = vmatmul.mubr.bf16.gmra.mrb[0].mxu0 %v1282
        %v1346 = vpop.f32.mrb[0].mxu0
        %v1347 = vadd.f32 0.0, %v1346
        %v1348 = vpop.f32.mrb[0].mxu0
        %v1349 = vpop.f32.mrb[0].mxu0
        %v1350 = vadd.f32 0.0, %v1349
        %v1351 = vpop.f32.mrb[0].mxu0
        %1352 = vdwg.mxu0
        %v1353 = vmax.f32 %v1323, 0.0
        %v1354 = vmax.f32 %v1326, 0.0
        %v1355 = vmax.f32 %v1331, 0.0
        %v1356 = vmax.f32 %v1334, 0.0
        %v1357 = vmax.f32 %v1339, 0.0
        %v1358 = vmax.f32 %v1342, 0.0
        %v1359 = vmax.f32 %v1347, 0.0
        %v1360 = vmax.f32 %v1350, 0.0
        %v1361 = vpack.c.bf16 %v732, %v731
        %v1362 = vpack.c.bf16 %v734, %v733
        %v1363 = vpack.c.bf16 %v736, %v735
        %v1364 = vpack.c.bf16 %v738, %v737
        %v1365 = vld [vmem:[%s8] sm:$0xf]
        %v1366 = vld [vmem:[%s8 + $0x4] sm:$0xf]
        %v1367 = vld [vmem:[%s8 + $0x8] sm:$0xf]
        %v1368 = vld [vmem:[%s8 + $0xc] sm:$0xf]
        %v1369 = vpack.c.bf16 %v1354, %v1353
        %v1370 = vpack.c.bf16 %v1356, %v1355
        %v1371 = vpack.c.bf16 %v1358, %v1357
        %v1372 = vpack.c.bf16 %v1360, %v1359
        %v1373 = vld [vmem:[%s9] sm:$0xf]
        %vm1374 = vcmask 64512
        %v1376 = vsel %vm1374, %v1369, 0
        %v1379 = vsel %vm1374, %v1370, 0
        %v1382 = vsel %vm1374, %v1371, 0
        %v1385 = vsel %vm1374, %v1372, 0
        %vm1387 = vcmask 1043456
        %v1389 = vsel %vm1387, %v1373, 0
        %1391 = vmatprep.subr.bf16.mxu0 0
        %1392 = vmatpush1.bf16.msra.mxu0 %v1389
        %1393 = vmatprep.subr.bf16.mxu0 0
        %1394 = vmatpush1.bf16.msra.mxu0 0
        %1395 = vmatprep.subr.bf16.mxu0 0
        %1396 = vmatpush1.bf16.msra.mxu0 0
        %1397 = vmatprep.subr.bf16.mxu0 0
        %1398 = vmatpush1.bf16.msra.mxu0 0
        %1399 = vmatprep.subr.bf16.mxu0 0
        %1400 = vmatpush1.bf16.msra.mxu0 0
        %1401 = vmatprep.subr.bf16.mxu0 0
        %1402 = vmatpush1.bf16.msra.mxu0 0
        %1403 = vmatprep.subr.bf16.mxu0 0
        %1404 = vmatpush1.bf16.msra.mxu0 0
        %1405 = vmatprep.subr.bf16.mxu0 0
        %1406 = vmatpush1.bf16.msra.mxu0 0
        %1407 = vmatprep.subr.bf16.mxu0 0
        %1408 = vmatpush1.bf16.msra.mxu0 0
        %1409 = vmatprep.subr.bf16.mxu0 0
        %1410 = vmatpush1.bf16.msra.mxu0 0
        %1411 = vmatprep.subr.bf16.mxu0 0
        %1412 = vmatpush1.bf16.msra.mxu0 0
        %1413 = vmatprep.subr.bf16.mxu0 0
        %1414 = vmatpush1.bf16.msra.mxu0 0
        %1415 = vmatprep.subr.bf16.mxu0 0
        %1416 = vmatpush1.bf16.msra.mxu0 0
        %1417 = vmatprep.subr.bf16.mxu0 0
        %1418 = vmatpush1.bf16.msra.mxu0 0
        %1419 = vmatprep.subr.bf16.mxu0 0
        %1420 = vmatpush1.bf16.msra.mxu0 0
        %1421 = vmatprep.subr.bf16.mxu0 0
        %1422 = vmatpush1.bf16.msra.mxu0 0
        %1423 = vmatprep.mubr.bf16.mxu0 0
        %1424 = vmatmul.mubr.bf16.gmra.mrb[0].mxu0 %v1376
        %v1425 = vpop.f32.mrb[0].mxu0
        %v1426 = vadd.f32 0.0, %v1425
        %v1427 = vpop.f32.mrb[0].mxu0
        %v1428 = vpop.f32.mrb[0].mxu0
        %v1429 = vadd.f32 0.0, %v1428
        %v1430 = vpop.f32.mrb[0].mxu0
        %1431 = vmatprep.mubr.bf16.mxu0 0
        %1432 = vmatmul.mubr.bf16.gmra.mrb[0].mxu0 %v1379
        %v1433 = vpop.f32.mrb[0].mxu0
        %v1434 = vadd.f32 0.0, %v1433
        %v1435 = vpop.f32.mrb[0].mxu0
        %v1436 = vpop.f32.mrb[0].mxu0
        %v1437 = vadd.f32 0.0, %v1436
        %v1438 = vpop.f32.mrb[0].mxu0
        %1439 = vmatprep.mubr.bf16.mxu0 0
        %1440 = vmatmul.mubr.bf16.gmra.mrb[0].mxu0 %v1382
        %v1441 = vpop.f32.mrb[0].mxu0
        %v1442 = vadd.f32 0.0, %v1441
        %v1443 = vpop.f32.mrb[0].mxu0
        %v1444 = vpop.f32.mrb[0].mxu0
        %v1445 = vadd.f32 0.0, %v1444
        %v1446 = vpop.f32.mrb[0].mxu0
        %1447 = vmatprep.mubr.bf16.mxu0 0
        %1448 = vmatmul.mubr.bf16.gmra.mrb[0].mxu0 %v1385
        %v1449 = vpop.f32.mrb[0].mxu0
        %v1450 = vadd.f32 0.0, %v1449
        %v1451 = vpop.f32.mrb[0].mxu0
        %v1452 = vpop.f32.mrb[0].mxu0
        %v1453 = vadd.f32 0.0, %v1452
        %v1454 = vpop.f32.mrb[0].mxu0
        %1455 = vdwg.mxu0
        %v1460 = vunpack.c.l.b16 %v1365
        %v1461 = vunpack.c.l.b16 %v1366
        %v1462 = vunpack.c.l.b16 %v1367
        %v1463 = vunpack.c.l.b16 %v1368
        %v1464 = vpack.c.b16 %v1461, %v1460
        %v1465 = vpack.c.b16 %v1463, %v1462
        %v1469 = vsel %vm653, %v1361, 0
        %v1472 = vsel %vm653, %v1362, 0
        %v1475 = vsel %vm653, %v1363, 0
        %v1478 = vsel %vm653, %v1364, 0
        %1480 = vmatprep.subr.bf16.mxu0 0
        %1481 = vmatpush1.bf16.msra.mxu0 %v1464
        %1482 = vmatprep.subr.bf16.mxu0 0
        %1483 = vmatpush1.bf16.msra.mxu0 %v1465
        %1484 = vmatprep.subr.bf16.mxu0 0
        %1485 = vmatpush1.bf16.msra.mxu0 0
        %1486 = vmatprep.subr.bf16.mxu0 0
        %1487 = vmatpush1.bf16.msra.mxu0 0
        %1488 = vmatprep.subr.bf16.mxu0 0
        %1489 = vmatpush1.bf16.msra.mxu0 0
        %1490 = vmatprep.subr.bf16.mxu0 0
        %1491 = vmatpush1.bf16.msra.mxu0 0
        %1492 = vmatprep.subr.bf16.mxu0 0
        %1493 = vmatpush1.bf16.msra.mxu0 0
        %1494 = vmatprep.subr.bf16.mxu0 0
        %1495 = vmatpush1.bf16.msra.mxu0 0
        %1496 = vmatprep.subr.bf16.mxu0 0
        %1497 = vmatpush1.bf16.msra.mxu0 0
        %1498 = vmatprep.subr.bf16.mxu0 0
        %1499 = vmatpush1.bf16.msra.mxu0 0
        %1500 = vmatprep.subr.bf16.mxu0 0
        %1501 = vmatpush1.bf16.msra.mxu0 0
        %1502 = vmatprep.subr.bf16.mxu0 0
        %1503 = vmatpush1.bf16.msra.mxu0 0
        %1504 = vmatprep.subr.bf16.mxu0 0
        %1505 = vmatpush1.bf16.msra.mxu0 0
        %1506 = vmatprep.subr.bf16.mxu0 0
        %1507 = vmatpush1.bf16.msra.mxu0 0
        %1508 = vmatprep.subr.bf16.mxu0 0
        %1509 = vmatpush1.bf16.msra.mxu0 0
        %1510 = vmatprep.subr.bf16.mxu0 0
        %1511 = vmatpush1.bf16.msra.mxu0 0
        %1512 = vmatprep.mubr.bf16.mxu0 0
        %1513 = vmatmul.mubr.bf16.gmra.mrb[0].mxu0 %v1469
        %v1514 = vpop.f32.mrb[0].mxu0
        %v1515 = vadd.f32 %v1426, %v1514
        %v1516 = vpop.f32.mrb[0].mxu0
        %v1517 = vpop.f32.mrb[0].mxu0
        %v1518 = vadd.f32 %v1429, %v1517
        %v1519 = vpop.f32.mrb[0].mxu0
        %1520 = vmatprep.mubr.bf16.mxu0 0
        %1521 = vmatmul.mubr.bf16.gmra.mrb[0].mxu0 %v1472
        %v1522 = vpop.f32.mrb[0].mxu0
        %v1523 = vadd.f32 %v1434, %v1522
        %v1524 = vpop.f32.mrb[0].mxu0
        %v1525 = vpop.f32.mrb[0].mxu0
        %v1526 = vadd.f32 %v1437, %v1525
        %v1527 = vpop.f32.mrb[0].mxu0
        %1528 = vmatprep.mubr.bf16.mxu0 0
        %1529 = vmatmul.mubr.bf16.gmra.mrb[0].mxu0 %v1475
        %v1530 = vpop.f32.mrb[0].mxu0
        %v1531 = vadd.f32 %v1442, %v1530
        %v1532 = vpop.f32.mrb[0].mxu0
        %v1533 = vpop.f32.mrb[0].mxu0
        %v1534 = vadd.f32 %v1445, %v1533
        %v1535 = vpop.f32.mrb[0].mxu0
        %1536 = vmatprep.mubr.bf16.mxu0 0
        %1537 = vmatmul.mubr.bf16.gmra.mrb[0].mxu0 %v1478
        %v1538 = vpop.f32.mrb[0].mxu0
        %v1539 = vadd.f32 %v1450, %v1538
        %v1540 = vpop.f32.mrb[0].mxu0
        %v1541 = vpop.f32.mrb[0].mxu0
        %v1542 = vadd.f32 %v1453, %v1541
        %v1543 = vpop.f32.mrb[0].mxu0
        %1544 = vdwg.mxu0
        %v1545 = vmax.f32 %v1515, 0.0
        %v1546 = vmax.f32 %v1518, 0.0
        %v1547 = vmax.f32 %v1523, 0.0
        %v1548 = vmax.f32 %v1526, 0.0
        %v1549 = vmax.f32 %v1531, 0.0
        %v1550 = vmax.f32 %v1534, 0.0
        %v1551 = vmax.f32 %v1539, 0.0
        %v1552 = vmax.f32 %v1542, 0.0
        %v1561 = vrot.slane %v1545, 7
        %v1562 = vrot.slane %v1546, 7
        %v1563 = vsel %vm876, %v1561, %v1562
        %v1564 = vrot.slane %v1547, 7
        %v1565 = vsel %vm876, %v1562, %v1564
        %v1566 = vrot.slane %v1548, 7
        %v1567 = vsel %vm876, %v1564, %v1566
        %v1568 = vrot.slane %v1549, 7
        %v1569 = vsel %vm876, %v1566, %v1568
        %v1570 = vrot.slane %v1550, 7
        %v1571 = vsel %vm876, %v1568, %v1570
        %v1572 = vrot.slane %v1551, 7
        %v1573 = vsel %vm876, %v1570, %v1572
        %v1574 = vrot.slane %v1552, 7
        %v1575 = vsel %vm876, %v1572, %v1574
        %vm1585 = vcmask 130049
        %1586 = vst.msk [vmem:[#allocation2 + $0x30] sm:$0xfe] %vm1585, %v1561
        %1587 = vst.msk [vmem:[#allocation2 + $0x40] sm:$0xff] %vm599, %v1563
        %1588 = vst.msk [vmem:[#allocation2 + $0x50] sm:$0xff] %vm599, %v1565
        %1589 = vst.msk [vmem:[#allocation2 + $0x60] sm:$0xff] %vm599, %v1567
        %1590 = vst.msk [vmem:[#allocation2 + $0x70] sm:$0xff] %vm599, %v1569
        %1591 = vst.msk [vmem:[#allocation2 + $0x80] sm:$0xff] %vm599, %v1571
        %1592 = vst.msk [vmem:[#allocation2 + $0x90] sm:$0xff] %vm599, %v1573
        %1593 = vst.msk [vmem:[#allocation2 + $0xa0] sm:$0xff] %vm599, %v1575
        %1594 = vst.msk [vmem:[#allocation2 + $0xb0] sm:$0x1] %vm602, %v1574
        %1595 = vrot.lane.b32.xlu0 %v1545, 16
        %v1596 = vpop.permute.xlu0 %1595
        %1597 = vrot.lane.b32.xlu0 %v1546, 16
        %v1598 = vpop.permute.xlu0 %1597
        %1599 = vrot.lane.b32.xlu0 %v1547, 16
        %v1600 = vpop.permute.xlu0 %1599
        %1601 = vrot.lane.b32.xlu0 %v1548, 16
        %v1602 = vpop.permute.xlu0 %1601
        %1603 = vrot.lane.b32.xlu0 %v1549, 16
        %v1604 = vpop.permute.xlu0 %1603
        %1605 = vrot.lane.b32.xlu0 %v1550, 16
        %v1606 = vpop.permute.xlu0 %1605
        %1607 = vrot.lane.b32.xlu0 %v1551, 16
        %v1608 = vpop.permute.xlu0 %1607
        %1609 = vrot.lane.b32.xlu0 %v1552, 16
        %v1610 = vpop.permute.xlu0 %1609
        %vm1619 = vcmask 261248
        %1620 = vst.msk [vmem:[#allocation2 + $0x30] sm:$0xff] %vm1619, %v1596
        %1621 = vst.msk [vmem:[#allocation2 + $0x40] sm:$0xff] %vm1619, %v1598
        %1622 = vst.msk [vmem:[#allocation2 + $0x50] sm:$0xff] %vm1619, %v1600
        %1623 = vst.msk [vmem:[#allocation2 + $0x60] sm:$0xff] %vm1619, %v1602
        %1624 = vst.msk [vmem:[#allocation2 + $0x70] sm:$0xff] %vm1619, %v1604
        %1625 = vst.msk [vmem:[#allocation2 + $0x80] sm:$0xff] %vm1619, %v1606
        %1626 = vst.msk [vmem:[#allocation2 + $0x90] sm:$0xff] %vm1619, %v1608
        %1627 = vst.msk [vmem:[#allocation2 + $0xa0] sm:$0xff] %vm1619, %v1610
        %v1628 = vrot.slane %v1545, 1
        %v1629 = vrot.slane %v1546, 1
        %v1630 = vsel %vm946, %v1628, %v1629
        %v1631 = vrot.slane %v1547, 1
        %v1632 = vsel %vm946, %v1629, %v1631
        %v1633 = vrot.slane %v1548, 1
        %v1634 = vsel %vm946, %v1631, %v1633
        %v1635 = vrot.slane %v1549, 1
        %v1636 = vsel %vm946, %v1633, %v1635
        %v1637 = vrot.slane %v1550, 1
        %v1638 = vsel %vm946, %v1635, %v1637
        %v1639 = vrot.slane %v1551, 1
        %v1640 = vsel %vm946, %v1637, %v1639
        %v1641 = vrot.slane %v1552, 1
        %v1642 = vsel %vm946, %v1639, %v1641
        %1643 = vrot.lane.b32.xlu0 %v1628, 32
        %v1644 = vpop.permute.xlu0 %1643
        %1645 = vrot.lane.b32.xlu0 %v1630, 32
        %v1646 = vpop.permute.xlu0 %1645
        %1647 = vrot.lane.b32.xlu0 %v1632, 32
        %v1648 = vpop.permute.xlu0 %1647
        %1649 = vrot.lane.b32.xlu0 %v1634, 32
        %v1650 = vpop.permute.xlu0 %1649
        %1651 = vrot.lane.b32.xlu0 %v1636, 32
        %v1652 = vpop.permute.xlu0 %1651
        %1653 = vrot.lane.b32.xlu0 %v1638, 32
        %v1654 = vpop.permute.xlu0 %1653
        %1655 = vrot.lane.b32.xlu0 %v1640, 32
        %v1656 = vpop.permute.xlu0 %1655
        %1657 = vrot.lane.b32.xlu0 %v1642, 32
        %v1658 = vpop.permute.xlu0 %1657
        %1659 = vrot.lane.b32.xlu0 %v1641, 32
        %v1660 = vpop.permute.xlu0 %1659
        %vm1670 = vcmask 392455
        %1671 = vst.msk [vmem:[#allocation2 + $0x20] sm:$0x80] %vm1670, %v1644
        %vm1672 = vcmask 392448
        %1673 = vst.msk [vmem:[#allocation2 + $0x30] sm:$0xff] %vm1672, %v1646
        %1674 = vst.msk [vmem:[#allocation2 + $0x40] sm:$0xff] %vm1672, %v1648
        %1675 = vst.msk [vmem:[#allocation2 + $0x50] sm:$0xff] %vm1672, %v1650
        %1676 = vst.msk [vmem:[#allocation2 + $0x60] sm:$0xff] %vm1672, %v1652
        %1677 = vst.msk [vmem:[#allocation2 + $0x70] sm:$0xff] %vm1672, %v1654
        %1678 = vst.msk [vmem:[#allocation2 + $0x80] sm:$0xff] %vm1672, %v1656
        %1679 = vst.msk [vmem:[#allocation2 + $0x90] sm:$0xff] %vm1672, %v1658
        %vm1680 = vcmask 391424
        %1681 = vst.msk [vmem:[#allocation2 + $0xa0] sm:$0x7f] %vm1680, %v1660
        %1682 = vrot.lane.b32.xlu0 %v1561, 48
        %v1683 = vpop.permute.xlu0 %1682
        %1684 = vrot.lane.b32.xlu0 %v1563, 48
        %v1685 = vpop.permute.xlu0 %1684
        %1686 = vrot.lane.b32.xlu0 %v1565, 48
        %v1687 = vpop.permute.xlu0 %1686
        %1688 = vrot.lane.b32.xlu0 %v1567, 48
        %v1689 = vpop.permute.xlu0 %1688
        %1690 = vrot.lane.b32.xlu0 %v1569, 48
        %v1691 = vpop.permute.xlu0 %1690
        %1692 = vrot.lane.b32.xlu0 %v1571, 48
        %v1693 = vpop.permute.xlu0 %1692
        %1694 = vrot.lane.b32.xlu0 %v1573, 48
        %v1695 = vpop.permute.xlu0 %1694
        %1696 = vrot.lane.b32.xlu0 %v1575, 48
        %v1697 = vpop.permute.xlu0 %1696
        %1698 = vrot.lane.b32.xlu0 %v1574, 48
        %v1699 = vpop.permute.xlu0 %1698
        %vm1709 = vcmask 523649
        %1710 = vst.msk [vmem:[#allocation2 + $0x20] sm:$0xfe] %vm1709, %v1683
        %vm1711 = vcmask 523648
        %1712 = vst.msk [vmem:[#allocation2 + $0x30] sm:$0xff] %vm1711, %v1685
        %1713 = vst.msk [vmem:[#allocation2 + $0x40] sm:$0xff] %vm1711, %v1687
        %1714 = vst.msk [vmem:[#allocation2 + $0x50] sm:$0xff] %vm1711, %v1689
        %1715 = vst.msk [vmem:[#allocation2 + $0x60] sm:$0xff] %vm1711, %v1691
        %1716 = vst.msk [vmem:[#allocation2 + $0x70] sm:$0xff] %vm1711, %v1693
        %1717 = vst.msk [vmem:[#allocation2 + $0x80] sm:$0xff] %vm1711, %v1695
        %1718 = vst.msk [vmem:[#allocation2 + $0x90] sm:$0xff] %vm1711, %v1697
        %vm1719 = vcmask 516480
        %1720 = vst.msk [vmem:[#allocation2 + $0xa0] sm:$0x1] %vm1719, %v1699
        %1721 = vrot.lane.b32.xlu0 %v1545, 64
        %v1722 = vpop.permute.xlu0 %1721
        %1723 = vrot.lane.b32.xlu0 %v1546, 64
        %v1724 = vpop.permute.xlu0 %1723
        %1725 = vrot.lane.b32.xlu0 %v1547, 64
        %v1726 = vpop.permute.xlu0 %1725
        %1727 = vrot.lane.b32.xlu0 %v1548, 64
        %v1728 = vpop.permute.xlu0 %1727
        %1729 = vrot.lane.b32.xlu0 %v1549, 64
        %v1730 = vpop.permute.xlu0 %1729
        %1731 = vrot.lane.b32.xlu0 %v1550, 64
        %v1732 = vpop.permute.xlu0 %1731
        %1733 = vrot.lane.b32.xlu0 %v1551, 64
        %v1734 = vpop.permute.xlu0 %1733
        %1735 = vrot.lane.b32.xlu0 %v1552, 64
        %v1736 = vpop.permute.xlu0 %1735
        %vm1745 = vcmask 654848
        %1746 = vst.msk [vmem:[#allocation2 + $0x20] sm:$0xff] %vm1745, %v1722
        %1747 = vst.msk [vmem:[#allocation2 + $0x30] sm:$0xff] %vm1745, %v1724
        %1748 = vst.msk [vmem:[#allocation2 + $0x40] sm:$0xff] %vm1745, %v1726
        %1749 = vst.msk [vmem:[#allocation2 + $0x50] sm:$0xff] %vm1745, %v1728
        %1750 = vst.msk [vmem:[#allocation2 + $0x60] sm:$0xff] %vm1745, %v1730
        %1751 = vst.msk [vmem:[#allocation2 + $0x70] sm:$0xff] %vm1745, %v1732
        %1752 = vst.msk [vmem:[#allocation2 + $0x80] sm:$0xff] %vm1745, %v1734
        %1753 = vst.msk [vmem:[#allocation2 + $0x90] sm:$0xff] %vm1745, %v1736
        %1754 = vrot.lane.b32.xlu0 %v1628, 80
        %v1755 = vpop.permute.xlu0 %1754
        %1756 = vrot.lane.b32.xlu0 %v1630, 80
        %v1757 = vpop.permute.xlu0 %1756
        %1758 = vrot.lane.b32.xlu0 %v1632, 80
        %v1759 = vpop.permute.xlu0 %1758
        %1760 = vrot.lane.b32.xlu0 %v1634, 80
        %v1761 = vpop.permute.xlu0 %1760
        %1762 = vrot.lane.b32.xlu0 %v1636, 80
        %v1763 = vpop.permute.xlu0 %1762
        %1764 = vrot.lane.b32.xlu0 %v1638, 80
        %v1765 = vpop.permute.xlu0 %1764
        %1766 = vrot.lane.b32.xlu0 %v1640, 80
        %v1767 = vpop.permute.xlu0 %1766
        %1768 = vrot.lane.b32.xlu0 %v1642, 80
        %v1769 = vpop.permute.xlu0 %1768
        %1770 = vrot.lane.b32.xlu0 %v1641, 80
        %v1771 = vpop.permute.xlu0 %1770
        %vm1781 = vcmask 786055
        %1782 = vst.msk [vmem:[#allocation2 + $0x10] sm:$0x80] %vm1781, %v1755
        %vm1783 = vcmask 786048
        %1784 = vst.msk [vmem:[#allocation2 + $0x20] sm:$0xff] %vm1783, %v1757
        %1785 = vst.msk [vmem:[#allocation2 + $0x30] sm:$0xff] %vm1783, %v1759
        %1786 = vst.msk [vmem:[#allocation2 + $0x40] sm:$0xff] %vm1783, %v1761
        %1787 = vst.msk [vmem:[#allocation2 + $0x50] sm:$0xff] %vm1783, %v1763
        %1788 = vst.msk [vmem:[#allocation2 + $0x60] sm:$0xff] %vm1783, %v1765
        %1789 = vst.msk [vmem:[#allocation2 + $0x70] sm:$0xff] %vm1783, %v1767
        %1790 = vst.msk [vmem:[#allocation2 + $0x80] sm:$0xff] %vm1783, %v1769
        %vm1791 = vcmask 785024
        %1792 = vst.msk [vmem:[#allocation2 + $0x90] sm:$0x7f] %vm1791, %v1771
        %1793 = vrot.lane.b32.xlu0 %v1561, 96
        %v1794 = vpop.permute.xlu0 %1793
        %1795 = vrot.lane.b32.xlu0 %v1563, 96
        %v1796 = vpop.permute.xlu0 %1795
        %1797 = vrot.lane.b32.xlu0 %v1565, 96
        %v1798 = vpop.permute.xlu0 %1797
        %1799 = vrot.lane.b32.xlu0 %v1567, 96
        %v1800 = vpop.permute.xlu0 %1799
        %1801 = vrot.lane.b32.xlu0 %v1569, 96
        %v1802 = vpop.permute.xlu0 %1801
        %1803 = vrot.lane.b32.xlu0 %v1571, 96
        %v1804 = vpop.permute.xlu0 %1803
        %1805 = vrot.lane.b32.xlu0 %v1573, 96
        %v1806 = vpop.permute.xlu0 %1805
        %1807 = vrot.lane.b32.xlu0 %v1575, 96
        %v1808 = vpop.permute.xlu0 %1807
        %1809 = vrot.lane.b32.xlu0 %v1574, 96
        %v1810 = vpop.permute.xlu0 %1809
        %vm1820 = vcmask 917249
        %1821 = vst.msk [vmem:[#allocation2 + $0x10] sm:$0xfe] %vm1820, %v1794
        %vm1822 = vcmask 917248
        %1823 = vst.msk [vmem:[#allocation2 + $0x20] sm:$0xff] %vm1822, %v1796
        %1824 = vst.msk [vmem:[#allocation2 + $0x30] sm:$0xff] %vm1822, %v1798
        %1825 = vst.msk [vmem:[#allocation2 + $0x40] sm:$0xff] %vm1822, %v1800
        %1826 = vst.msk [vmem:[#allocation2 + $0x50] sm:$0xff] %vm1822, %v1802
        %1827 = vst.msk [vmem:[#allocation2 + $0x60] sm:$0xff] %vm1822, %v1804
        %1828 = vst.msk [vmem:[#allocation2 + $0x70] sm:$0xff] %vm1822, %v1806
        %1829 = vst.msk [vmem:[#allocation2 + $0x80] sm:$0xff] %vm1822, %v1808
        %vm1830 = vcmask 910080
        %1831 = vst.msk [vmem:[#allocation2 + $0x90] sm:$0x1] %vm1830, %v1810
        %1832 = vrot.lane.b32.xlu0 %v1545, 112
        %v1833 = vpop.permute.xlu0 %1832
        %1834 = vrot.lane.b32.xlu0 %v1546, 112
        %v1835 = vpop.permute.xlu0 %1834
        %1836 = vrot.lane.b32.xlu0 %v1547, 112
        %v1837 = vpop.permute.xlu0 %1836
        %1838 = vrot.lane.b32.xlu0 %v1548, 112
        %v1839 = vpop.permute.xlu0 %1838
        %1840 = vrot.lane.b32.xlu0 %v1549, 112
        %v1841 = vpop.permute.xlu0 %1840
        %1842 = vrot.lane.b32.xlu0 %v1550, 112
        %v1843 = vpop.permute.xlu0 %1842
        %1844 = vrot.lane.b32.xlu0 %v1551, 112
        %v1845 = vpop.permute.xlu0 %1844
        %1846 = vrot.lane.b32.xlu0 %v1552, 112
        %v1847 = vpop.permute.xlu0 %1846
        %vm1856 = vcmask 1048448
        %1857 = vst.msk [vmem:[#allocation2 + $0x10] sm:$0xff] %vm1856, %v1833
        %1858 = vst.msk [vmem:[#allocation2 + $0x20] sm:$0xff] %vm1856, %v1835
        %1859 = vst.msk [vmem:[#allocation2 + $0x30] sm:$0xff] %vm1856, %v1837
        %1860 = vst.msk [vmem:[#allocation2 + $0x40] sm:$0xff] %vm1856, %v1839
        %1861 = vst.msk [vmem:[#allocation2 + $0x50] sm:$0xff] %vm1856, %v1841
        %1862 = vst.msk [vmem:[#allocation2 + $0x60] sm:$0xff] %vm1856, %v1843
        %1863 = vst.msk [vmem:[#allocation2 + $0x70] sm:$0xff] %vm1856, %v1845
        %1864 = vst.msk [vmem:[#allocation2 + $0x80] sm:$0xff] %vm1856, %v1847
        %1874 = vst.msk [vmem:[#allocation2 + $0x8] sm:$0x80] %vm605, %v1628
        %1875 = vst.msk [vmem:[#allocation2 + $0x18] sm:$0xff] %vm599, %v1630
        %1876 = vst.msk [vmem:[#allocation2 + $0x28] sm:$0xff] %vm599, %v1632
        %1877 = vst.msk [vmem:[#allocation2 + $0x38] sm:$0xff] %vm599, %v1634
        %1878 = vst.msk [vmem:[#allocation2 + $0x48] sm:$0xff] %vm599, %v1636
        %1879 = vst.msk [vmem:[#allocation2 + $0x58] sm:$0xff] %vm599, %v1638
        %1880 = vst.msk [vmem:[#allocation2 + $0x68] sm:$0xff] %vm599, %v1640
        %1881 = vst.msk [vmem:[#allocation2 + $0x78] sm:$0xff] %vm599, %v1642
        %vm1882 = vcmask 129024
        %1883 = vst.msk [vmem:[#allocation2 + $0x88] sm:$0x7f] %vm1882, %v1641
        %v1884 = vld [vmem:[#allocation2 + $0x20] sm:$0xff]
        %v1885 = vld [vmem:[#allocation2 + $0x28] sm:$0xff]
        %v1886 = vld [vmem:[#allocation2 + $0x30] sm:$0xff]
        %v1887 = vld [vmem:[#allocation2 + $0x38] sm:$0xff]
        %v1888 = vld [vmem:[#allocation2 + $0x40] sm:$0xff]
        %v1889 = vld [vmem:[#allocation2 + $0x48] sm:$0xff]
        %v1890 = vld [vmem:[#allocation2 + $0x50] sm:$0xff]
        %v1891 = vld [vmem:[#allocation2 + $0x58] sm:$0xff]
        %v1892 = vld [vmem:[#allocation2 + $0x60] sm:$0xff]
        %v1893 = vld [vmem:[#allocation2 + $0x68] sm:$0xff]
        %v1894 = vld [vmem:[#allocation2 + $0x70] sm:$0xff]
        %v1895 = vld [vmem:[#allocation2 + $0x78] sm:$0xff]
        %v1896 = vld [vmem:[#allocation2 + $0x80] sm:$0xff]
        %v1897 = vld [vmem:[#allocation2 + $0x88] sm:$0xff]
        %v1898 = vld [vmem:[#allocation2 + $0x90] sm:$0xff]
        %v1899 = vld [vmem:[#allocation2 + $0x98] sm:$0xff]
        %v1900 = vld [vmem:[%s3] sm:$0xff]
        %v1901 = vld [vmem:[%s3 + $0x8] sm:$0xff]
        %v1902 = vld [vmem:[%s3 + $0x10] sm:$0xff]
        %v1903 = vld [vmem:[%s3 + $0x18] sm:$0xff]
        %v1904 = vld [vmem:[%s3 + $0x20] sm:$0xff]
        %v1905 = vld [vmem:[%s3 + $0x28] sm:$0xff]
        %v1906 = vld [vmem:[%s3 + $0x30] sm:$0xff]
        %v1907 = vld [vmem:[%s3 + $0x38] sm:$0xff]
        %v1908 = vld [vmem:[%s3 + $0x40] sm:$0xff]
        %v1909 = vld [vmem:[%s3 + $0x48] sm:$0xff]
        %v1910 = vld [vmem:[%s3 + $0x50] sm:$0xff]
        %v1911 = vld [vmem:[%s3 + $0x58] sm:$0xff]
        %v1912 = vld [vmem:[%s3 + $0x60] sm:$0xff]
        %v1913 = vld [vmem:[%s3 + $0x68] sm:$0xff]
        %v1914 = vld [vmem:[%s3 + $0x70] sm:$0xff]
        %v1915 = vld [vmem:[%s3 + $0x78] sm:$0xff]
        %v1916 = vmul.f32 %v1884, %v1900
        %v1917 = vmul.f32 %v1885, %v1901
        %v1918 = vmul.f32 %v1886, %v1902
        %v1919 = vmul.f32 %v1887, %v1903
        %v1920 = vmul.f32 %v1888, %v1904
        %v1921 = vmul.f32 %v1889, %v1905
        %v1922 = vmul.f32 %v1890, %v1906
        %v1923 = vmul.f32 %v1891, %v1907
        %v1924 = vmul.f32 %v1892, %v1908
        %v1925 = vmul.f32 %v1893, %v1909
        %v1926 = vmul.f32 %v1894, %v1910
        %v1927 = vmul.f32 %v1895, %v1911
        %v1928 = vmul.f32 %v1896, %v1912
        %v1929 = vmul.f32 %v1897, %v1913
        %v1930 = vmul.f32 %v1898, %v1914
        %v1931 = vmul.f32 %v1899, %v1915
        %v1932 = vpack.c.bf16 %v1918, %v1916
        %v1933 = vpack.c.bf16 %v1919, %v1917
        %v1934 = vpack.c.bf16 %v1922, %v1920
        %v1935 = vpack.c.bf16 %v1923, %v1921
        %v1936 = vpack.c.bf16 %v1926, %v1924
        %v1937 = vpack.c.bf16 %v1927, %v1925
        %v1938 = vpack.c.bf16 %v1930, %v1928
        %v1939 = vpack.c.bf16 %v1931, %v1929
        %v1940 = vld [vmem:[%s10] sm:$0xf]
        %v1941 = vld [vmem:[%s10 + $0x4] sm:$0xf]
        %v1942 = vld [vmem:[%s10 + $0x8] sm:$0xf]
        %v1943 = vld [vmem:[%s10 + $0xc] sm:$0xf]
        %v1944 = vld [vmem:[%s10 + $0x10] sm:$0xf]
        %v1945 = vld [vmem:[%s10 + $0x14] sm:$0xf]
        %v1946 = vld [vmem:[%s10 + $0x18] sm:$0xf]
        %v1947 = vld [vmem:[%s10 + $0x1c] sm:$0xf]
        %v1948 = vld [vmem:[%s10 + $0x20] sm:$0xf]
        %v1949 = vld [vmem:[%s10 + $0x24] sm:$0xf]
        %v1950 = vld [vmem:[%s10 + $0x28] sm:$0xf]
        %v1951 = vld [vmem:[%s10 + $0x2c] sm:$0xf]
        %v1952 = vld [vmem:[%s10 + $0x30] sm:$0xf]
        %v1953 = vld [vmem:[%s10 + $0x34] sm:$0xf]
        %v1954 = vld [vmem:[%s10 + $0x38] sm:$0xf]
        %v1955 = vld [vmem:[%s10 + $0x3c] sm:$0xf]
        %v1956 = vld [vmem:[%s10 + $0x40] sm:$0xf]
        %v1957 = vld [vmem:[%s10 + $0x44] sm:$0xf]
        %v1976 = vunpack.c.l.b16 %v1940
        %v1977 = vunpack.c.l.b16 %v1941
        %v1978 = vunpack.c.l.b16 %v1942
        %v1979 = vunpack.c.l.b16 %v1943
        %v1980 = vunpack.c.l.b16 %v1944
        %v1981 = vunpack.c.l.b16 %v1945
        %v1982 = vunpack.c.l.b16 %v1946
        %v1983 = vunpack.c.l.b16 %v1947
        %v1984 = vunpack.c.l.b16 %v1948
        %v1985 = vunpack.c.l.b16 %v1949
        %v1986 = vunpack.c.l.b16 %v1950
        %v1987 = vunpack.c.l.b16 %v1951
        %v1988 = vunpack.c.l.b16 %v1952
        %v1989 = vunpack.c.l.b16 %v1953
        %v1990 = vunpack.c.l.b16 %v1954
        %v1991 = vunpack.c.l.b16 %v1955
        %v1992 = vunpack.c.l.b16 %v1956
        %v1993 = vunpack.c.l.b16 %v1957
        %v1994 = vpack.c.b16 %v1977, %v1976
        %v1995 = vpack.c.b16 %v1979, %v1978
        %v1996 = vpack.c.b16 %v1981, %v1980
        %v1997 = vpack.c.b16 %v1983, %v1982
        %v1998 = vpack.c.b16 %v1985, %v1984
        %v1999 = vpack.c.b16 %v1987, %v1986
        %v2000 = vpack.c.b16 %v1989, %v1988
        %v2001 = vpack.c.b16 %v1991, %v1990
        %v2002 = vpack.c.b16 %v1993, %v1992
        %v2013 = vsel %vm599, %v1933, 0
        %v2016 = vsel %vm599, %v1935, 0
        %v2019 = vsel %vm599, %v1937, 0
        %v2022 = vsel %vm599, %v1939, 0
        %2024 = vmatprep.subr.bf16.mxu0 0
        %2025 = vmatpush1.bf16.msra.mxu0 %v1994
        %2026 = vmatprep.subr.bf16.mxu0 0
        %2027 = vmatpush1.bf16.msra.mxu0 %v1995
        %2028 = vmatprep.subr.bf16.mxu0 0
        %2029 = vmatpush1.bf16.msra.mxu0 %v1996
        %2030 = vmatprep.subr.bf16.mxu0 0
        %2031 = vmatpush1.bf16.msra.mxu0 %v1997
        %2032 = vmatprep.subr.bf16.mxu0 0
        %2033 = vmatpush1.bf16.msra.mxu0 %v1998
        %2034 = vmatprep.subr.bf16.mxu0 0
        %2035 = vmatpush1.bf16.msra.mxu0 %v1999
        %2036 = vmatprep.subr.bf16.mxu0 0
        %2037 = vmatpush1.bf16.msra.mxu0 %v2000
        %2038 = vmatprep.subr.bf16.mxu0 0
        %2039 = vmatpush1.bf16.msra.mxu0 %v2001
        %2040 = vmatprep.subr.bf16.mxu0 0
        %2041 = vmatpush1.bf16.msra.mxu0 %v2002
        %2042 = vmatprep.subr.bf16.mxu0 0
        %2043 = vmatpush1.bf16.msra.mxu0 0
        %2044 = vmatprep.subr.bf16.mxu0 0
        %2045 = vmatpush1.bf16.msra.mxu0 0
        %2046 = vmatprep.subr.bf16.mxu0 0
        %2047 = vmatpush1.bf16.msra.mxu0 0
        %2048 = vmatprep.subr.bf16.mxu0 0
        %2049 = vmatpush1.bf16.msra.mxu0 0
        %2050 = vmatprep.subr.bf16.mxu0 0
        %2051 = vmatpush1.bf16.msra.mxu0 0
        %2052 = vmatprep.subr.bf16.mxu0 0
        %2053 = vmatpush1.bf16.msra.mxu0 0
        %2054 = vmatprep.subr.bf16.mxu0 0
        %2055 = vmatpush1.bf16.msra.mxu0 0
        %2056 = vmatprep.mubr.bf16.mxu0 %v2013
        %2057 = vmatmul.mubr.bf16.gmra.mrb[0].mxu0 %v1932
        %v2058 = vpop.f32.mrb[0].mxu0
        %v2059 = vadd.f32 0.0, %v2058
        %v2060 = vpop.f32.mrb[0].mxu0
        %v2061 = vpop.f32.mrb[0].mxu0
        %v2062 = vadd.f32 0.0, %v2061
        %v2063 = vpop.f32.mrb[0].mxu0
        %2064 = vmatprep.mubr.bf16.mxu0 %v2016
        %2065 = vmatmul.mubr.bf16.gmra.mrb[0].mxu0 %v1934
        %v2066 = vpop.f32.mrb[0].mxu0
        %v2067 = vadd.f32 0.0, %v2066
        %v2068 = vpop.f32.mrb[0].mxu0
        %v2069 = vpop.f32.mrb[0].mxu0
        %v2070 = vadd.f32 0.0, %v2069
        %v2071 = vpop.f32.mrb[0].mxu0
        %2072 = vmatprep.mubr.bf16.mxu0 %v2019
        %2073 = vmatmul.mubr.bf16.gmra.mrb[0].mxu0 %v1936
        %v2074 = vpop.f32.mrb[0].mxu0
        %v2075 = vadd.f32 0.0, %v2074
        %v2076 = vpop.f32.mrb[0].mxu0
        %v2077 = vpop.f32.mrb[0].mxu0
        %v2078 = vadd.f32 0.0, %v2077
        %v2079 = vpop.f32.mrb[0].mxu0
        %2080 = vmatprep.mubr.bf16.mxu0 %v2022
        %2081 = vmatmul.mubr.bf16.gmra.mrb[0].mxu0 %v1938
        %v2082 = vpop.f32.mrb[0].mxu0
        %v2083 = vadd.f32 0.0, %v2082
        %v2084 = vpop.f32.mrb[0].mxu0
        %v2085 = vpop.f32.mrb[0].mxu0
        %v2086 = vadd.f32 0.0, %v2085
        %v2087 = vpop.f32.mrb[0].mxu0
        %2088 = vdwg.mxu0
        %v2089 = vmax.f32 %v2059, 0.0
        %v2090 = vmax.f32 %v2062, 0.0
        %v2091 = vmax.f32 %v2067, 0.0
        %v2092 = vmax.f32 %v2070, 0.0
        %v2093 = vmax.f32 %v2075, 0.0
        %v2094 = vmax.f32 %v2078, 0.0
        %v2095 = vmax.f32 %v2083, 0.0
        %v2096 = vmax.f32 %v2086, 0.0
        %v2097 = vpack.c.bf16 %v2090, %v2089
        %v2098 = vpack.c.bf16 %v2092, %v2091
        %v2099 = vpack.c.bf16 %v2094, %v2093
        %v2100 = vpack.c.bf16 %v2096, %v2095
        %v2101 = vld [vmem:[%s11] sm:$0xf]
        %v2102 = vld [vmem:[%s11 + $0x4] sm:$0xf]
        %v2105 = vunpack.c.l.b16 %v2101
        %v2106 = vunpack.c.l.b16 %v2102
        %v2107 = vpack.c.b16 %v2106, %v2105
        %2117 = vrot.lane.b32.xlu0 %v1515, 112
        %v2118 = vpop.permute.xlu0 %2117
        %2119 = vrot.lane.b32.xlu0 %v1518, 112
        %v2120 = vpop.permute.xlu0 %2119
        %2121 = vrot.lane.b32.xlu0 %v1523, 112
        %v2122 = vpop.permute.xlu0 %2121
        %2123 = vrot.lane.b32.xlu0 %v1526, 112
        %v2124 = vpop.permute.xlu0 %2123
        %2125 = vrot.lane.b32.xlu0 %v1531, 112
        %v2126 = vpop.permute.xlu0 %2125
        %2127 = vrot.lane.b32.xlu0 %v1534, 112
        %v2128 = vpop.permute.xlu0 %2127
        %2129 = vrot.lane.b32.xlu0 %v1539, 112
        %v2130 = vpop.permute.xlu0 %2129
        %2131 = vrot.lane.b32.xlu0 %v1542, 112
        %v2132 = vpop.permute.xlu0 %2131
        %v2142 = vsel %vm599, %v2097, 0
        %v2145 = vsel %vm599, %v2098, 0
        %v2148 = vsel %vm599, %v2099, 0
        %v2151 = vsel %vm599, %v2100, 0
        %2153 = vmatprep.subr.bf16.mxu0 0
        %2154 = vmatpush1.bf16.msra.mxu0 %v2107
        %2155 = vmatprep.subr.bf16.mxu0 0
        %2156 = vmatpush1.bf16.msra.mxu0 0
        %2157 = vmatprep.subr.bf16.mxu0 0
        %2158 = vmatpush1.bf16.msra.mxu0 0
        %2159 = vmatprep.subr.bf16.mxu0 0
        %2160 = vmatpush1.bf16.msra.mxu0 0
        %2161 = vmatprep.subr.bf16.mxu0 0
        %2162 = vmatpush1.bf16.msra.mxu0 0
        %2163 = vmatprep.subr.bf16.mxu0 0
        %2164 = vmatpush1.bf16.msra.mxu0 0
        %2165 = vmatprep.subr.bf16.mxu0 0
        %2166 = vmatpush1.bf16.msra.mxu0 0
        %2167 = vmatprep.subr.bf16.mxu0 0
        %2168 = vmatpush1.bf16.msra.mxu0 0
        %2169 = vmatprep.subr.bf16.mxu0 0
        %2170 = vmatpush1.bf16.msra.mxu0 0
        %2171 = vmatprep.subr.bf16.mxu0 0
        %2172 = vmatpush1.bf16.msra.mxu0 0
        %2173 = vmatprep.subr.bf16.mxu0 0
        %2174 = vmatpush1.bf16.msra.mxu0 0
        %2175 = vmatprep.subr.bf16.mxu0 0
        %2176 = vmatpush1.bf16.msra.mxu0 0
        %2177 = vmatprep.subr.bf16.mxu0 0
        %2178 = vmatpush1.bf16.msra.mxu0 0
        %2179 = vmatprep.subr.bf16.mxu0 0
        %2180 = vmatpush1.bf16.msra.mxu0 0
        %2181 = vmatprep.subr.bf16.mxu0 0
        %2182 = vmatpush1.bf16.msra.mxu0 0
        %2183 = vmatprep.subr.bf16.mxu0 0
        %2184 = vmatpush1.bf16.msra.mxu0 0
        %2185 = vmatprep.mubr.bf16.mxu0 0
        %2186 = vmatmul.mubr.bf16.gmra.mrb[0].mxu0 %v2142
        %v2187 = vpop.f32.mrb[0].mxu0
        %v2188 = vadd.f32 %v2118, %v2187
        %v2189 = vpop.f32.mrb[0].mxu0
        %v2190 = vpop.f32.mrb[0].mxu0
        %v2191 = vadd.f32 %v2120, %v2190
        %v2192 = vpop.f32.mrb[0].mxu0
        %2193 = vmatprep.mubr.bf16.mxu0 0
        %2194 = vmatmul.mubr.bf16.gmra.mrb[0].mxu0 %v2145
        %v2195 = vpop.f32.mrb[0].mxu0
        %v2196 = vadd.f32 %v2122, %v2195
        %v2197 = vpop.f32.mrb[0].mxu0
        %v2198 = vpop.f32.mrb[0].mxu0
        %v2199 = vadd.f32 %v2124, %v2198
        %v2200 = vpop.f32.mrb[0].mxu0
        %2201 = vmatprep.mubr.bf16.mxu0 0
        %2202 = vmatmul.mubr.bf16.gmra.mrb[0].mxu0 %v2148
        %v2203 = vpop.f32.mrb[0].mxu0
        %v2204 = vadd.f32 %v2126, %v2203
        %v2205 = vpop.f32.mrb[0].mxu0
        %v2206 = vpop.f32.mrb[0].mxu0
        %v2207 = vadd.f32 %v2128, %v2206
        %v2208 = vpop.f32.mrb[0].mxu0
        %2209 = vmatprep.mubr.bf16.mxu0 0
        %2210 = vmatmul.mubr.bf16.gmra.mrb[0].mxu0 %v2151
        %v2211 = vpop.f32.mrb[0].mxu0
        %v2212 = vadd.f32 %v2130, %v2211
        %v2213 = vpop.f32.mrb[0].mxu0
        %v2214 = vpop.f32.mrb[0].mxu0
        %v2215 = vadd.f32 %v2132, %v2214
        %v2216 = vpop.f32.mrb[0].mxu0
        %2217 = vdwg.mxu0
        %v2218 = vmax.f32 %v2188, 0.0
        %v2219 = vmax.f32 %v2191, 0.0
        %v2220 = vmax.f32 %v2196, 0.0
        %v2221 = vmax.f32 %v2199, 0.0
        %v2222 = vmax.f32 %v2204, 0.0
        %v2223 = vmax.f32 %v2207, 0.0
        %v2224 = vmax.f32 %v2212, 0.0
        %v2225 = vmax.f32 %v2215, 0.0
        %v2226 = vpack.c.bf16 %v861, %v860
        %v2227 = vpack.c.bf16 %v863, %v862
        %v2228 = vpack.c.bf16 %v865, %v864
        %v2229 = vpack.c.bf16 %v867, %v866
        %v2230 = vld [vmem:[%s12] sm:$0x3]
        %v2232 = vsel %vm903, %v2226, 0
        %v2235 = vsel %vm903, %v2227, 0
        %v2238 = vsel %vm903, %v2228, 0
        %v2241 = vsel %vm903, %v2229, 0
        %v2244 = vsel %vm1284, %v2230, 0
        %2246 = vmatprep.subr.bf16.mxu0 0
        %2247 = vmatpush1.bf16.msra.mxu0 %v2244
        %2248 = vmatprep.subr.bf16.mxu0 0
        %2249 = vmatpush1.bf16.msra.mxu0 0
        %2250 = vmatprep.subr.bf16.mxu0 0
        %2251 = vmatpush1.bf16.msra.mxu0 0
        %2252 = vmatprep.subr.bf16.mxu0 0
        %2253 = vmatpush1.bf16.msra.mxu0 0
        %2254 = vmatprep.subr.bf16.mxu0 0
        %2255 = vmatpush1.bf16.msra.mxu0 0
        %2256 = vmatprep.subr.bf16.mxu0 0
        %2257 = vmatpush1.bf16.msra.mxu0 0
        %2258 = vmatprep.subr.bf16.mxu0 0
        %2259 = vmatpush1.bf16.msra.mxu0 0
        %2260 = vmatprep.subr.bf16.mxu0 0
        %2261 = vmatpush1.bf16.msra.mxu0 0
        %2262 = vmatprep.subr.bf16.mxu0 0
        %2263 = vmatpush1.bf16.msra.mxu0 0
        %2264 = vmatprep.subr.bf16.mxu0 0
        %2265 = vmatpush1.bf16.msra.mxu0 0
        %2266 = vmatprep.subr.bf16.mxu0 0
        %2267 = vmatpush1.bf16.msra.mxu0 0
        %2268 = vmatprep.subr.bf16.mxu0 0
        %2269 = vmatpush1.bf16.msra.mxu0 0
        %2270 = vmatprep.subr.bf16.mxu0 0
        %2271 = vmatpush1.bf16.msra.mxu0 0
        %2272 = vmatprep.subr.bf16.mxu0 0
        %2273 = vmatpush1.bf16.msra.mxu0 0
        %2274 = vmatprep.subr.bf16.mxu0 0
        %2275 = vmatpush1.bf16.msra.mxu0 0
        %2276 = vmatprep.subr.bf16.mxu0 0
        %2277 = vmatpush1.bf16.msra.mxu0 0
        %2278 = vmatprep.mubr.bf16.mxu0 0
        %2279 = vmatmul.mubr.bf16.gmra.mrb[0].mxu0 %v2232
        %v2280 = vpop.f32.mrb[0].mxu0
        %v2281 = vadd.f32 0.0, %v2280
        %v2282 = vpop.f32.mrb[0].mxu0
        %v2283 = vpop.f32.mrb[0].mxu0
        %v2284 = vadd.f32 0.0, %v2283
        %v2285 = vpop.f32.mrb[0].mxu0
        %2286 = vmatprep.mubr.bf16.mxu0 0
        %2287 = vmatmul.mubr.bf16.gmra.mrb[0].mxu0 %v2235
        %v2288 = vpop.f32.mrb[0].mxu0
        %v2289 = vadd.f32 0.0, %v2288
        %v2290 = vpop.f32.mrb[0].mxu0
        %v2291 = vpop.f32.mrb[0].mxu0
        %v2292 = vadd.f32 0.0, %v2291
        %v2293 = vpop.f32.mrb[0].mxu0
        %2294 = vmatprep.mubr.bf16.mxu0 0
        %2295 = vmatmul.mubr.bf16.gmra.mrb[0].mxu0 %v2238
        %v2296 = vpop.f32.mrb[0].mxu0
        %v2297 = vadd.f32 0.0, %v2296
        %v2298 = vpop.f32.mrb[0].mxu0
        %v2299 = vpop.f32.mrb[0].mxu0
        %v2300 = vadd.f32 0.0, %v2299
        %v2301 = vpop.f32.mrb[0].mxu0
        %2302 = vmatprep.mubr.bf16.mxu0 0
        %2303 = vmatmul.mubr.bf16.gmra.mrb[0].mxu0 %v2241
        %v2304 = vpop.f32.mrb[0].mxu0
        %v2305 = vadd.f32 0.0, %v2304
        %v2306 = vpop.f32.mrb[0].mxu0
        %v2307 = vpop.f32.mrb[0].mxu0
        %v2308 = vadd.f32 0.0, %v2307
        %v2309 = vpop.f32.mrb[0].mxu0
        %2310 = vdwg.mxu0
        %v2311 = vmax.f32 %v2281, 0.0
        %v2312 = vmax.f32 %v2284, 0.0
        %v2313 = vmax.f32 %v2289, 0.0
        %v2314 = vmax.f32 %v2292, 0.0
        %v2315 = vmax.f32 %v2297, 0.0
        %v2316 = vmax.f32 %v2300, 0.0
        %v2317 = vmax.f32 %v2305, 0.0
        %v2318 = vmax.f32 %v2308, 0.0
        %v2327 = vrot.slane %v2311, 7
        %v2328 = vrot.slane %v2312, 7
        %v2329 = vsel %vm876, %v2327, %v2328
        %v2330 = vrot.slane %v2313, 7
        %v2331 = vsel %vm876, %v2328, %v2330
        %v2332 = vrot.slane %v2314, 7
        %v2333 = vsel %vm876, %v2330, %v2332
        %v2334 = vrot.slane %v2315, 7
        %v2335 = vsel %vm876, %v2332, %v2334
        %v2336 = vrot.slane %v2316, 7
        %v2337 = vsel %vm876, %v2334, %v2336
        %v2338 = vrot.slane %v2317, 7
        %v2339 = vsel %vm876, %v2336, %v2338
        %v2340 = vrot.slane %v2318, 7
        %v2341 = vsel %vm876, %v2338, %v2340
        %vm2351 = vcmask 64513
        %2352 = vst.msk [vmem:[#allocation2 + $0x30] sm:$0xfe] %vm2351, %v2327
        %2353 = vst.msk [vmem:[#allocation2 + $0x40] sm:$0xff] %vm1374, %v2329
        %2354 = vst.msk [vmem:[#allocation2 + $0x50] sm:$0xff] %vm1374, %v2331
        %2355 = vst.msk [vmem:[#allocation2 + $0x60] sm:$0xff] %vm1374, %v2333
        %2356 = vst.msk [vmem:[#allocation2 + $0x70] sm:$0xff] %vm1374, %v2335
        %2357 = vst.msk [vmem:[#allocation2 + $0x80] sm:$0xff] %vm1374, %v2337
        %2358 = vst.msk [vmem:[#allocation2 + $0x90] sm:$0xff] %vm1374, %v2339
        %2359 = vst.msk [vmem:[#allocation2 + $0xa0] sm:$0xff] %vm1374, %v2341
        %vm2360 = vcmask 57344
        %2361 = vst.msk [vmem:[#allocation2 + $0xb0] sm:$0x1] %vm2360, %v2340
        %2362 = vrot.lane.b32.xlu0 %v2311, 8
        %v2363 = vpop.permute.xlu0 %2362
        %2364 = vrot.lane.b32.xlu0 %v2312, 8
        %v2365 = vpop.permute.xlu0 %2364
        %2366 = vrot.lane.b32.xlu0 %v2313, 8
        %v2367 = vpop.permute.xlu0 %2366
        %2368 = vrot.lane.b32.xlu0 %v2314, 8
        %v2369 = vpop.permute.xlu0 %2368
        %2370 = vrot.lane.b32.xlu0 %v2315, 8
        %v2371 = vpop.permute.xlu0 %2370
        %2372 = vrot.lane.b32.xlu0 %v2316, 8
        %v2373 = vpop.permute.xlu0 %2372
        %2374 = vrot.lane.b32.xlu0 %v2317, 8
        %v2375 = vpop.permute.xlu0 %2374
        %2376 = vrot.lane.b32.xlu0 %v2318, 8
        %v2377 = vpop.permute.xlu0 %2376
        %vm2386 = vcmask 130112
        %2387 = vst.msk [vmem:[#allocation2 + $0x30] sm:$0xff] %vm2386, %v2363
        %2388 = vst.msk [vmem:[#allocation2 + $0x40] sm:$0xff] %vm2386, %v2365
        %2389 = vst.msk [vmem:[#allocation2 + $0x50] sm:$0xff] %vm2386, %v2367
        %2390 = vst.msk [vmem:[#allocation2 + $0x60] sm:$0xff] %vm2386, %v2369
        %2391 = vst.msk [vmem:[#allocation2 + $0x70] sm:$0xff] %vm2386, %v2371
        %2392 = vst.msk [vmem:[#allocation2 + $0x80] sm:$0xff] %vm2386, %v2373
        %2393 = vst.msk [vmem:[#allocation2 + $0x90] sm:$0xff] %vm2386, %v2375
        %2394 = vst.msk [vmem:[#allocation2 + $0xa0] sm:$0xff] %vm2386, %v2377
        %v2395 = vrot.slane %v2311, 1
        %v2396 = vrot.slane %v2312, 1
        %v2397 = vsel %vm946, %v2395, %v2396
        %v2398 = vrot.slane %v2313, 1
        %v2399 = vsel %vm946, %v2396, %v2398
        %v2400 = vrot.slane %v2314, 1
        %v2401 = vsel %vm946, %v2398, %v2400
        %v2402 = vrot.slane %v2315, 1
        %v2403 = vsel %vm946, %v2400, %v2402
        %v2404 = vrot.slane %v2316, 1
        %v2405 = vsel %vm946, %v2402, %v2404
        %v2406 = vrot.slane %v2317, 1
        %v2407 = vsel %vm946, %v2404, %v2406
        %v2408 = vrot.slane %v2318, 1
        %v2409 = vsel %vm946, %v2406, %v2408
        %2410 = vrot.lane.b32.xlu0 %v2395, 16
        %v2411 = vpop.permute.xlu0 %2410
        %2412 = vrot.lane.b32.xlu0 %v2397, 16
        %v2413 = vpop.permute.xlu0 %2412
        %2414 = vrot.lane.b32.xlu0 %v2399, 16
        %v2415 = vpop.permute.xlu0 %2414
        %2416 = vrot.lane.b32.xlu0 %v2401, 16
        %v2417 = vpop.permute.xlu0 %2416
        %2418 = vrot.lane.b32.xlu0 %v2403, 16
        %v2419 = vpop.permute.xlu0 %2418
        %2420 = vrot.lane.b32.xlu0 %v2405, 16
        %v2421 = vpop.permute.xlu0 %2420
        %2422 = vrot.lane.b32.xlu0 %v2407, 16
        %v2423 = vpop.permute.xlu0 %2422
        %2424 = vrot.lane.b32.xlu0 %v2409, 16
        %v2425 = vpop.permute.xlu0 %2424
        %2426 = vrot.lane.b32.xlu0 %v2408, 16
        %v2427 = vpop.permute.xlu0 %2426
        %vm2437 = vcmask 195719
        %2438 = vst.msk [vmem:[#allocation2 + $0x20] sm:$0x80] %vm2437, %v2411
        %vm2439 = vcmask 195712
        %2440 = vst.msk [vmem:[#allocation2 + $0x30] sm:$0xff] %vm2439, %v2413
        %2441 = vst.msk [vmem:[#allocation2 + $0x40] sm:$0xff] %vm2439, %v2415
        %2442 = vst.msk [vmem:[#allocation2 + $0x50] sm:$0xff] %vm2439, %v2417
        %2443 = vst.msk [vmem:[#allocation2 + $0x60] sm:$0xff] %vm2439, %v2419
        %2444 = vst.msk [vmem:[#allocation2 + $0x70] sm:$0xff] %vm2439, %v2421
        %2445 = vst.msk [vmem:[#allocation2 + $0x80] sm:$0xff] %vm2439, %v2423
        %2446 = vst.msk [vmem:[#allocation2 + $0x90] sm:$0xff] %vm2439, %v2425
        %vm2447 = vcmask 194688
        %2448 = vst.msk [vmem:[#allocation2 + $0xa0] sm:$0x7f] %vm2447, %v2427
        %2449 = vrot.lane.b32.xlu0 %v2327, 24
        %v2450 = vpop.permute.xlu0 %2449
        %2451 = vrot.lane.b32.xlu0 %v2329, 24
        %v2452 = vpop.permute.xlu0 %2451
        %2453 = vrot.lane.b32.xlu0 %v2331, 24
        %v2454 = vpop.permute.xlu0 %2453
        %2455 = vrot.lane.b32.xlu0 %v2333, 24
        %v2456 = vpop.permute.xlu0 %2455
        %2457 = vrot.lane.b32.xlu0 %v2335, 24
        %v2458 = vpop.permute.xlu0 %2457
        %2459 = vrot.lane.b32.xlu0 %v2337, 24
        %v2460 = vpop.permute.xlu0 %2459
        %2461 = vrot.lane.b32.xlu0 %v2339, 24
        %v2462 = vpop.permute.xlu0 %2461
        %2463 = vrot.lane.b32.xlu0 %v2341, 24
        %v2464 = vpop.permute.xlu0 %2463
        %2465 = vrot.lane.b32.xlu0 %v2340, 24
        %v2466 = vpop.permute.xlu0 %2465
        %vm2476 = vcmask 261313
        %2477 = vst.msk [vmem:[#allocation2 + $0x20] sm:$0xfe] %vm2476, %v2450
        %vm2478 = vcmask 261312
        %2479 = vst.msk [vmem:[#allocation2 + $0x30] sm:$0xff] %vm2478, %v2452
        %2480 = vst.msk [vmem:[#allocation2 + $0x40] sm:$0xff] %vm2478, %v2454
        %2481 = vst.msk [vmem:[#allocation2 + $0x50] sm:$0xff] %vm2478, %v2456
        %2482 = vst.msk [vmem:[#allocation2 + $0x60] sm:$0xff] %vm2478, %v2458
        %2483 = vst.msk [vmem:[#allocation2 + $0x70] sm:$0xff] %vm2478, %v2460
        %2484 = vst.msk [vmem:[#allocation2 + $0x80] sm:$0xff] %vm2478, %v2462
        %2485 = vst.msk [vmem:[#allocation2 + $0x90] sm:$0xff] %vm2478, %v2464
        %vm2486 = vcmask 254144
        %2487 = vst.msk [vmem:[#allocation2 + $0xa0] sm:$0x1] %vm2486, %v2466
        %2488 = vrot.lane.b32.xlu0 %v2311, 32
        %v2489 = vpop.permute.xlu0 %2488
        %2490 = vrot.lane.b32.xlu0 %v2312, 32
        %v2491 = vpop.permute.xlu0 %2490
        %2492 = vrot.lane.b32.xlu0 %v2313, 32
        %v2493 = vpop.permute.xlu0 %2492
        %2494 = vrot.lane.b32.xlu0 %v2314, 32
        %v2495 = vpop.permute.xlu0 %2494
        %2496 = vrot.lane.b32.xlu0 %v2315, 32
        %v2497 = vpop.permute.xlu0 %2496
        %2498 = vrot.lane.b32.xlu0 %v2316, 32
        %v2499 = vpop.permute.xlu0 %2498
        %2500 = vrot.lane.b32.xlu0 %v2317, 32
        %v2501 = vpop.permute.xlu0 %2500
        %2502 = vrot.lane.b32.xlu0 %v2318, 32
        %v2503 = vpop.permute.xlu0 %2502
        %vm2512 = vcmask 326912
        %2513 = vst.msk [vmem:[#allocation2 + $0x20] sm:$0xff] %vm2512, %v2489
        %2514 = vst.msk [vmem:[#allocation2 + $0x30] sm:$0xff] %vm2512, %v2491
        %2515 = vst.msk [vmem:[#allocation2 + $0x40] sm:$0xff] %vm2512, %v2493
        %2516 = vst.msk [vmem:[#allocation2 + $0x50] sm:$0xff] %vm2512, %v2495
        %2517 = vst.msk [vmem:[#allocation2 + $0x60] sm:$0xff] %vm2512, %v2497
        %2518 = vst.msk [vmem:[#allocation2 + $0x70] sm:$0xff] %vm2512, %v2499
        %2519 = vst.msk [vmem:[#allocation2 + $0x80] sm:$0xff] %vm2512, %v2501
        %2520 = vst.msk [vmem:[#allocation2 + $0x90] sm:$0xff] %vm2512, %v2503
        %2521 = vrot.lane.b32.xlu0 %v2395, 40
        %v2522 = vpop.permute.xlu0 %2521
        %2523 = vrot.lane.b32.xlu0 %v2397, 40
        %v2524 = vpop.permute.xlu0 %2523
        %2525 = vrot.lane.b32.xlu0 %v2399, 40
        %v2526 = vpop.permute.xlu0 %2525
        %2527 = vrot.lane.b32.xlu0 %v2401, 40
        %v2528 = vpop.permute.xlu0 %2527
        %2529 = vrot.lane.b32.xlu0 %v2403, 40
        %v2530 = vpop.permute.xlu0 %2529
        %2531 = vrot.lane.b32.xlu0 %v2405, 40
        %v2532 = vpop.permute.xlu0 %2531
        %2533 = vrot.lane.b32.xlu0 %v2407, 40
        %v2534 = vpop.permute.xlu0 %2533
        %2535 = vrot.lane.b32.xlu0 %v2409, 40
        %v2536 = vpop.permute.xlu0 %2535
        %2537 = vrot.lane.b32.xlu0 %v2408, 40
        %v2538 = vpop.permute.xlu0 %2537
        %vm2548 = vcmask 392519
        %2549 = vst.msk [vmem:[#allocation2 + $0x10] sm:$0x80] %vm2548, %v2522
        %vm2550 = vcmask 392512
        %2551 = vst.msk [vmem:[#allocation2 + $0x20] sm:$0xff] %vm2550, %v2524
        %2552 = vst.msk [vmem:[#allocation2 + $0x30] sm:$0xff] %vm2550, %v2526
        %2553 = vst.msk [vmem:[#allocation2 + $0x40] sm:$0xff] %vm2550, %v2528
        %2554 = vst.msk [vmem:[#allocation2 + $0x50] sm:$0xff] %vm2550, %v2530
        %2555 = vst.msk [vmem:[#allocation2 + $0x60] sm:$0xff] %vm2550, %v2532
        %2556 = vst.msk [vmem:[#allocation2 + $0x70] sm:$0xff] %vm2550, %v2534
        %2557 = vst.msk [vmem:[#allocation2 + $0x80] sm:$0xff] %vm2550, %v2536
        %vm2558 = vcmask 391488
        %2559 = vst.msk [vmem:[#allocation2 + $0x90] sm:$0x7f] %vm2558, %v2538
        %2560 = vrot.lane.b32.xlu0 %v2327, 48
        %v2561 = vpop.permute.xlu0 %2560
        %2562 = vrot.lane.b32.xlu0 %v2329, 48
        %v2563 = vpop.permute.xlu0 %2562
        %2564 = vrot.lane.b32.xlu0 %v2331, 48
        %v2565 = vpop.permute.xlu0 %2564
        %2566 = vrot.lane.b32.xlu0 %v2333, 48
        %v2567 = vpop.permute.xlu0 %2566
        %2568 = vrot.lane.b32.xlu0 %v2335, 48
        %v2569 = vpop.permute.xlu0 %2568
        %2570 = vrot.lane.b32.xlu0 %v2337, 48
        %v2571 = vpop.permute.xlu0 %2570
        %2572 = vrot.lane.b32.xlu0 %v2339, 48
        %v2573 = vpop.permute.xlu0 %2572
        %2574 = vrot.lane.b32.xlu0 %v2341, 48
        %v2575 = vpop.permute.xlu0 %2574
        %2576 = vrot.lane.b32.xlu0 %v2340, 48
        %v2577 = vpop.permute.xlu0 %2576
        %vm2587 = vcmask 458113
        %2588 = vst.msk [vmem:[#allocation2 + $0x10] sm:$0xfe] %vm2587, %v2561
        %vm2589 = vcmask 458112
        %2590 = vst.msk [vmem:[#allocation2 + $0x20] sm:$0xff] %vm2589, %v2563
        %2591 = vst.msk [vmem:[#allocation2 + $0x30] sm:$0xff] %vm2589, %v2565
        %2592 = vst.msk [vmem:[#allocation2 + $0x40] sm:$0xff] %vm2589, %v2567
        %2593 = vst.msk [vmem:[#allocation2 + $0x50] sm:$0xff] %vm2589, %v2569
        %2594 = vst.msk [vmem:[#allocation2 + $0x60] sm:$0xff] %vm2589, %v2571
        %2595 = vst.msk [vmem:[#allocation2 + $0x70] sm:$0xff] %vm2589, %v2573
        %2596 = vst.msk [vmem:[#allocation2 + $0x80] sm:$0xff] %vm2589, %v2575
        %vm2597 = vcmask 450944
        %2598 = vst.msk [vmem:[#allocation2 + $0x90] sm:$0x1] %vm2597, %v2577
        %2599 = vrot.lane.b32.xlu0 %v2311, 56
        %v2600 = vpop.permute.xlu0 %2599
        %2601 = vrot.lane.b32.xlu0 %v2312, 56
        %v2602 = vpop.permute.xlu0 %2601
        %2603 = vrot.lane.b32.xlu0 %v2313, 56
        %v2604 = vpop.permute.xlu0 %2603
        %2605 = vrot.lane.b32.xlu0 %v2314, 56
        %v2606 = vpop.permute.xlu0 %2605
        %2607 = vrot.lane.b32.xlu0 %v2315, 56
        %v2608 = vpop.permute.xlu0 %2607
        %2609 = vrot.lane.b32.xlu0 %v2316, 56
        %v2610 = vpop.permute.xlu0 %2609
        %2611 = vrot.lane.b32.xlu0 %v2317, 56
        %v2612 = vpop.permute.xlu0 %2611
        %2613 = vrot.lane.b32.xlu0 %v2318, 56
        %v2614 = vpop.permute.xlu0 %2613
        %vm2623 = vcmask 523712
        %2624 = vst.msk [vmem:[#allocation2 + $0x10] sm:$0xff] %vm2623, %v2600
        %2625 = vst.msk [vmem:[#allocation2 + $0x20] sm:$0xff] %vm2623, %v2602
        %2626 = vst.msk [vmem:[#allocation2 + $0x30] sm:$0xff] %vm2623, %v2604
        %2627 = vst.msk [vmem:[#allocation2 + $0x40] sm:$0xff] %vm2623, %v2606
        %2628 = vst.msk [vmem:[#allocation2 + $0x50] sm:$0xff] %vm2623, %v2608
        %2629 = vst.msk [vmem:[#allocation2 + $0x60] sm:$0xff] %vm2623, %v2610
        %2630 = vst.msk [vmem:[#allocation2 + $0x70] sm:$0xff] %vm2623, %v2612
        %2631 = vst.msk [vmem:[#allocation2 + $0x80] sm:$0xff] %vm2623, %v2614
        %2632 = vrot.lane.b32.xlu0 %v2395, 64
        %v2633 = vpop.permute.xlu0 %2632
        %2634 = vrot.lane.b32.xlu0 %v2397, 64
        %v2635 = vpop.permute.xlu0 %2634
        %2636 = vrot.lane.b32.xlu0 %v2399, 64
        %v2637 = vpop.permute.xlu0 %2636
        %2638 = vrot.lane.b32.xlu0 %v2401, 64
        %v2639 = vpop.permute.xlu0 %2638
        %2640 = vrot.lane.b32.xlu0 %v2403, 64
        %v2641 = vpop.permute.xlu0 %2640
        %2642 = vrot.lane.b32.xlu0 %v2405, 64
        %v2643 = vpop.permute.xlu0 %2642
        %2644 = vrot.lane.b32.xlu0 %v2407, 64
        %v2645 = vpop.permute.xlu0 %2644
        %2646 = vrot.lane.b32.xlu0 %v2409, 64
        %v2647 = vpop.permute.xlu0 %2646
        %2648 = vrot.lane.b32.xlu0 %v2408, 64
        %v2649 = vpop.permute.xlu0 %2648
        %vm2659 = vcmask 589319
        %2660 = vst.msk [vmem:[#allocation2] sm:$0x80] %vm2659, %v2633
        %vm2661 = vcmask 589312
        %2662 = vst.msk [vmem:[#allocation2 + $0x10] sm:$0xff] %vm2661, %v2635
        %2663 = vst.msk [vmem:[#allocation2 + $0x20] sm:$0xff] %vm2661, %v2637
        %2664 = vst.msk [vmem:[#allocation2 + $0x30] sm:$0xff] %vm2661, %v2639
        %2665 = vst.msk [vmem:[#allocation2 + $0x40] sm:$0xff] %vm2661, %v2641
        %2666 = vst.msk [vmem:[#allocation2 + $0x50] sm:$0xff] %vm2661, %v2643
        %2667 = vst.msk [vmem:[#allocation2 + $0x60] sm:$0xff] %vm2661, %v2645
        %2668 = vst.msk [vmem:[#allocation2 + $0x70] sm:$0xff] %vm2661, %v2647
        %vm2669 = vcmask 588288
        %2670 = vst.msk [vmem:[#allocation2 + $0x80] sm:$0x7f] %vm2669, %v2649
        %v2671 = vld [vmem:[#allocation2 + $0x20] sm:$0xff]
        %v2672 = vld [vmem:[#allocation2 + $0x30] sm:$0xff]
        %v2673 = vld [vmem:[#allocation2 + $0x40] sm:$0xff]
        %v2674 = vld [vmem:[#allocation2 + $0x50] sm:$0xff]
        %v2675 = vld [vmem:[#allocation2 + $0x60] sm:$0xff]
        %v2676 = vld [vmem:[#allocation2 + $0x70] sm:$0xff]
        %v2677 = vld [vmem:[#allocation2 + $0x80] sm:$0xff]
        %v2678 = vld [vmem:[#allocation2 + $0x90] sm:$0xff]
        %v2679 = vld [vmem:[%s4] sm:$0xff]
        %v2680 = vld [vmem:[%s4 + $0x8] sm:$0xff]
        %v2681 = vld [vmem:[%s4 + $0x10] sm:$0xff]
        %v2682 = vld [vmem:[%s4 + $0x18] sm:$0xff]
        %v2683 = vld [vmem:[%s4 + $0x20] sm:$0xff]
        %v2684 = vld [vmem:[%s4 + $0x28] sm:$0xff]
        %v2685 = vld [vmem:[%s4 + $0x30] sm:$0xff]
        %v2686 = vld [vmem:[%s4 + $0x38] sm:$0xff]
        %v2687 = vmul.f32 %v2671, %v2679
        %v2688 = vmul.f32 %v2672, %v2680
        %v2689 = vmul.f32 %v2673, %v2681
        %v2690 = vmul.f32 %v2674, %v2682
        %v2691 = vmul.f32 %v2675, %v2683
        %v2692 = vmul.f32 %v2676, %v2684
        %v2693 = vmul.f32 %v2677, %v2685
        %v2694 = vmul.f32 %v2678, %v2686
        %v2695 = vpack.c.bf16 %v2688, %v2687
        %v2696 = vpack.c.bf16 %v2690, %v2689
        %v2697 = vpack.c.bf16 %v2692, %v2691
        %v2698 = vpack.c.bf16 %v2694, %v2693
        %v2699 = vld [vmem:[%s13] sm:$0xf]
        %v2700 = vld [vmem:[%s13 + $0x4] sm:$0xf]
        %v2701 = vld [vmem:[%s13 + $0x8] sm:$0xf]
        %v2702 = vld [vmem:[%s13 + $0xc] sm:$0xf]
        %v2703 = vld [vmem:[%s13 + $0x10] sm:$0xf]
        %v2704 = vld [vmem:[%s13 + $0x14] sm:$0xf]
        %v2705 = vld [vmem:[%s13 + $0x18] sm:$0xf]
        %v2706 = vld [vmem:[%s13 + $0x1c] sm:$0xf]
        %v2707 = vld [vmem:[%s13 + $0x20] sm:$0xf]
        %v2717 = vunpack.c.l.b16 %v2699
        %v2718 = vunpack.c.l.b16 %v2700
        %v2719 = vunpack.c.l.b16 %v2701
        %v2720 = vunpack.c.l.b16 %v2702
        %v2721 = vunpack.c.l.b16 %v2703
        %v2722 = vunpack.c.l.b16 %v2704
        %v2723 = vunpack.c.l.b16 %v2705
        %v2724 = vunpack.c.l.b16 %v2706
        %v2725 = vunpack.c.l.b16 %v2707
        %v2726 = vpack.c.b16 %v2718, %v2717
        %v2727 = vpack.c.b16 %v2720, %v2719
        %v2728 = vpack.c.b16 %v2722, %v2721
        %v2729 = vpack.c.b16 %v2724, %v2723
        %v2730 = vpack.c.b16 %v2725, %v2725
        %vm2735 = vcmask 588800
        %v2737 = vsel %vm2735, %v2695, 0
        %v2740 = vsel %vm2735, %v2696, 0
        %v2743 = vsel %vm2735, %v2697, 0
        %v2746 = vsel %vm2735, %v2698, 0
        %v2749 = vsel %vm1387, %v2730, 0
        %2751 = vmatprep.subr.bf16.mxu0 0
        %2752 = vmatpush1.bf16.msra.mxu0 %v2726
        %2753 = vmatprep.subr.bf16.mxu0 0
        %2754 = vmatpush1.bf16.msra.mxu0 %v2727
        %2755 = vmatprep.subr.bf16.mxu0 0
        %2756 = vmatpush1.bf16.msra.mxu0 %v2728
        %2757 = vmatprep.subr.bf16.mxu0 0
        %2758 = vmatpush1.bf16.msra.mxu0 %v2729
        %2759 = vmatprep.subr.bf16.mxu0 0
        %2760 = vmatpush1.bf16.msra.mxu0 %v2749
        %2761 = vmatprep.subr.bf16.mxu0 0
        %2762 = vmatpush1.bf16.msra.mxu0 0
        %2763 = vmatprep.subr.bf16.mxu0 0
        %2764 = vmatpush1.bf16.msra.mxu0 0
        %2765 = vmatprep.subr.bf16.mxu0 0
        %2766 = vmatpush1.bf16.msra.mxu0 0
        %2767 = vmatprep.subr.bf16.mxu0 0
        %2768 = vmatpush1.bf16.msra.mxu0 0
        %2769 = vmatprep.subr.bf16.mxu0 0
        %2770 = vmatpush1.bf16.msra.mxu0 0
        %2771 = vmatprep.subr.bf16.mxu0 0
        %2772 = vmatpush1.bf16.msra.mxu0 0
        %2773 = vmatprep.subr.bf16.mxu0 0
        %2774 = vmatpush1.bf16.msra.mxu0 0
        %2775 = vmatprep.subr.bf16.mxu0 0
        %2776 = vmatpush1.bf16.msra.mxu0 0
        %2777 = vmatprep.subr.bf16.mxu0 0
        %2778 = vmatpush1.bf16.msra.mxu0 0
        %2779 = vmatprep.subr.bf16.mxu0 0
        %2780 = vmatpush1.bf16.msra.mxu0 0
        %2781 = vmatprep.subr.bf16.mxu0 0
        %2782 = vmatpush1.bf16.msra.mxu0 0
        %2783 = vmatprep.mubr.bf16.mxu0 0
        %2784 = vmatmul.mubr.bf16.gmra.mrb[0].mxu0 %v2737
        %v2785 = vpop.f32.mrb[0].mxu0
        %v2786 = vadd.f32 0.0, %v2785
        %v2787 = vpop.f32.mrb[0].mxu0
        %v2788 = vpop.f32.mrb[0].mxu0
        %v2789 = vadd.f32 0.0, %v2788
        %v2790 = vpop.f32.mrb[0].mxu0
        %2791 = vmatprep.mubr.bf16.mxu0 0
        %2792 = vmatmul.mubr.bf16.gmra.mrb[0].mxu0 %v2740
        %v2793 = vpop.f32.mrb[0].mxu0
        %v2794 = vadd.f32 0.0, %v2793
        %v2795 = vpop.f32.mrb[0].mxu0
        %v2796 = vpop.f32.mrb[0].mxu0
        %v2797 = vadd.f32 0.0, %v2796
        %v2798 = vpop.f32.mrb[0].mxu0
        %2799 = vmatprep.mubr.bf16.mxu0 0
        %2800 = vmatmul.mubr.bf16.gmra.mrb[0].mxu0 %v2743
        %v2801 = vpop.f32.mrb[0].mxu0
        %v2802 = vadd.f32 0.0, %v2801
        %v2803 = vpop.f32.mrb[0].mxu0
        %v2804 = vpop.f32.mrb[0].mxu0
        %v2805 = vadd.f32 0.0, %v2804
        %v2806 = vpop.f32.mrb[0].mxu0
        %2807 = vmatprep.mubr.bf16.mxu0 0
        %2808 = vmatmul.mubr.bf16.gmra.mrb[0].mxu0 %v2746
        %v2809 = vpop.f32.mrb[0].mxu0
        %v2810 = vadd.f32 0.0, %v2809
        %v2811 = vpop.f32.mrb[0].mxu0
        %v2812 = vpop.f32.mrb[0].mxu0
        %v2813 = vadd.f32 0.0, %v2812
        %v2814 = vpop.f32.mrb[0].mxu0
        %2815 = vdwg.mxu0
        %v2816 = vmax.f32 %v2786, 0.0
        %v2817 = vmax.f32 %v2789, 0.0
        %v2818 = vmax.f32 %v2794, 0.0
        %v2819 = vmax.f32 %v2797, 0.0
        %v2820 = vmax.f32 %v2802, 0.0
        %v2821 = vmax.f32 %v2805, 0.0
        %v2822 = vmax.f32 %v2810, 0.0
        %v2823 = vmax.f32 %v2813, 0.0
        %v2824 = vpack.c.bf16 %v2817, %v2816
        %v2825 = vpack.c.bf16 %v2819, %v2818
        %v2826 = vpack.c.bf16 %v2821, %v2820
        %v2827 = vpack.c.bf16 %v2823, %v2822
        %v2828 = vld [vmem:[%s14] sm:$0xf]
        %2837 = vrot.lane.b32.xlu0 %v2281, 120
        %v2838 = vpop.permute.xlu0 %2837
        %2839 = vrot.lane.b32.xlu0 %v2284, 120
        %v2840 = vpop.permute.xlu0 %2839
        %2841 = vrot.lane.b32.xlu0 %v2289, 120
        %v2842 = vpop.permute.xlu0 %2841
        %2843 = vrot.lane.b32.xlu0 %v2292, 120
        %v2844 = vpop.permute.xlu0 %2843
        %2845 = vrot.lane.b32.xlu0 %v2297, 120
        %v2846 = vpop.permute.xlu0 %2845
        %2847 = vrot.lane.b32.xlu0 %v2300, 120
        %v2848 = vpop.permute.xlu0 %2847
        %2849 = vrot.lane.b32.xlu0 %v2305, 120
        %v2850 = vpop.permute.xlu0 %2849
        %2851 = vrot.lane.b32.xlu0 %v2308, 120
        %v2852 = vpop.permute.xlu0 %2851
        %v2862 = vsel %vm1374, %v2824, 0
        %v2865 = vsel %vm1374, %v2825, 0
        %v2868 = vsel %vm1374, %v2826, 0
        %v2871 = vsel %vm1374, %v2827, 0
        %v2874 = vsel %vm1387, %v2828, 0
        %2876 = vmatprep.subr.bf16.mxu0 0
        %2877 = vmatpush1.bf16.msra.mxu0 %v2874
        %2878 = vmatprep.subr.bf16.mxu0 0
        %2879 = vmatpush1.bf16.msra.mxu0 0
        %2880 = vmatprep.subr.bf16.mxu0 0
        %2881 = vmatpush1.bf16.msra.mxu0 0
        %2882 = vmatprep.subr.bf16.mxu0 0
        %2883 = vmatpush1.bf16.msra.mxu0 0
        %2884 = vmatprep.subr.bf16.mxu0 0
        %2885 = vmatpush1.bf16.msra.mxu0 0
        %2886 = vmatprep.subr.bf16.mxu0 0
        %2887 = vmatpush1.bf16.msra.mxu0 0
        %2888 = vmatprep.subr.bf16.mxu0 0
        %2889 = vmatpush1.bf16.msra.mxu0 0
        %2890 = vmatprep.subr.bf16.mxu0 0
        %2891 = vmatpush1.bf16.msra.mxu0 0
        %2892 = vmatprep.subr.bf16.mxu0 0
        %2893 = vmatpush1.bf16.msra.mxu0 0
        %2894 = vmatprep.subr.bf16.mxu0 0
        %2895 = vmatpush1.bf16.msra.mxu0 0
        %2896 = vmatprep.subr.bf16.mxu0 0
        %2897 = vmatpush1.bf16.msra.mxu0 0
        %2898 = vmatprep.subr.bf16.mxu0 0
        %2899 = vmatpush1.bf16.msra.mxu0 0
        %2900 = vmatprep.subr.bf16.mxu0 0
        %2901 = vmatpush1.bf16.msra.mxu0 0
        %2902 = vmatprep.subr.bf16.mxu0 0
        %2903 = vmatpush1.bf16.msra.mxu0 0
        %2904 = vmatprep.subr.bf16.mxu0 0
        %2905 = vmatpush1.bf16.msra.mxu0 0
        %2906 = vmatprep.subr.bf16.mxu0 0
        %2907 = vmatpush1.bf16.msra.mxu0 0
        %2908 = vmatprep.mubr.bf16.mxu0 0
        %2909 = vmatmul.mubr.bf16.gmra.mrb[0].mxu0 %v2862
        %v2910 = vpop.f32.mrb[0].mxu0
        %v2911 = vadd.f32 %v2838, %v2910
        %v2912 = vpop.f32.mrb[0].mxu0
        %v2913 = vpop.f32.mrb[0].mxu0
        %v2914 = vadd.f32 %v2840, %v2913
        %v2915 = vpop.f32.mrb[0].mxu0
        %2916 = vmatprep.mubr.bf16.mxu0 0
        %2917 = vmatmul.mubr.bf16.gmra.mrb[0].mxu0 %v2865
        %v2918 = vpop.f32.mrb[0].mxu0
        %v2919 = vadd.f32 %v2842, %v2918
        %v2920 = vpop.f32.mrb[0].mxu0
        %v2921 = vpop.f32.mrb[0].mxu0
        %v2922 = vadd.f32 %v2844, %v2921
        %v2923 = vpop.f32.mrb[0].mxu0
        %2924 = vmatprep.mubr.bf16.mxu0 0
        %2925 = vmatmul.mubr.bf16.gmra.mrb[0].mxu0 %v2868
        %v2926 = vpop.f32.mrb[0].mxu0
        %v2927 = vadd.f32 %v2846, %v2926
        %v2928 = vpop.f32.mrb[0].mxu0
        %v2929 = vpop.f32.mrb[0].mxu0
        %v2930 = vadd.f32 %v2848, %v2929
        %v2931 = vpop.f32.mrb[0].mxu0
        %2932 = vmatprep.mubr.bf16.mxu0 0
        %2933 = vmatmul.mubr.bf16.gmra.mrb[0].mxu0 %v2871
        %v2934 = vpop.f32.mrb[0].mxu0
        %v2935 = vadd.f32 %v2850, %v2934
        %v2936 = vpop.f32.mrb[0].mxu0
        %v2937 = vpop.f32.mrb[0].mxu0
        %v2938 = vadd.f32 %v2852, %v2937
        %v2939 = vpop.f32.mrb[0].mxu0
        %2940 = vdwg.mxu0
        %v2941 = vmax.f32 %v2911, 0.0
        %v2942 = vmax.f32 %v2914, 0.0
        %v2943 = vmax.f32 %v2919, 0.0
        %v2944 = vmax.f32 %v2922, 0.0
        %v2945 = vmax.f32 %v2927, 0.0
        %v2946 = vmax.f32 %v2930, 0.0
        %v2947 = vmax.f32 %v2935, 0.0
        %v2948 = vmax.f32 %v2938, 0.0
        %v2949 = vld [vmem:[%s15] sm:$0xff]
        %v2950 = vld [vmem:[%s15 + $0x8] sm:$0xff]
        %v2951 = vld [vmem:[%s15 + $0x10] sm:$0xff]
        %v2952 = vld [vmem:[%s15 + $0x18] sm:$0xff]
        %v2953 = vld [vmem:[%s15 + $0x20] sm:$0xff]
        %v2954 = vld [vmem:[%s15 + $0x28] sm:$0xff]
        %v2955 = vld [vmem:[%s15 + $0x30] sm:$0xff]
        %v2956 = vld [vmem:[%s15 + $0x38] sm:$0xff]
        %v2957 = vld [vmem:[%s16] sm:$0xff]
        %v2959 = vsel %vm1374, %v2941, 0
        %v2962 = vsel %vm1374, %v2942, 0
        %v2965 = vsel %vm1374, %v2943, 0
        %v2968 = vsel %vm1374, %v2944, 0
        %v2971 = vsel %vm1374, %v2945, 0
        %v2974 = vsel %vm1374, %v2946, 0
        %v2977 = vsel %vm1374, %v2947, 0
        %v2980 = vsel %vm1374, %v2948, 0
        %2982 = vmatprep.subr.mxu0 0.0
        %2983 = vmatpush1.msra.mxu0 %v2957
        %2984 = vmatprep.subr.mxu0 0.0
        %2985 = vmatpush1.msra.mxu0 0.0
        %2986 = vmatprep.subr.mxu0 0.0
        %2987 = vmatpush1.msra.mxu0 0.0
        %2988 = vmatprep.subr.mxu0 0.0
        %2989 = vmatpush1.msra.mxu0 0.0
        %2990 = vmatprep.subr.mxu0 0.0
        %2991 = vmatpush1.msra.mxu0 0.0
        %2992 = vmatprep.subr.mxu0 0.0
        %2993 = vmatpush1.msra.mxu0 0.0
        %2994 = vmatprep.subr.mxu0 0.0
        %2995 = vmatpush1.msra.mxu0 0.0
        %2996 = vmatprep.subr.mxu0 0.0
        %2997 = vmatpush1.msra.mxu0 0.0
        %2998 = vmatprep.subr.mxu0 0.0
        %2999 = vmatpush1.msra.mxu0 0.0
        %3000 = vmatprep.subr.mxu0 0.0
        %3001 = vmatpush1.msra.mxu0 0.0
        %3002 = vmatprep.subr.mxu0 0.0
        %3003 = vmatpush1.msra.mxu0 0.0
        %3004 = vmatprep.subr.mxu0 0.0
        %3005 = vmatpush1.msra.mxu0 0.0
        %3006 = vmatprep.subr.mxu0 0.0
        %3007 = vmatpush1.msra.mxu0 0.0
        %3008 = vmatprep.subr.mxu0 0.0
        %3009 = vmatpush1.msra.mxu0 0.0
        %3010 = vmatprep.subr.mxu0 0.0
        %3011 = vmatpush1.msra.mxu0 0.0
        %3012 = vmatprep.subr.mxu0 0.0
        %3013 = vmatpush1.msra.mxu0 0.0
        %3014 = vmatprep.subr.mxu0 0.0
        %3015 = vmatpush1.msra.mxu0 0.0
        %3016 = vmatprep.subr.mxu0 0.0
        %3017 = vmatpush1.msra.mxu0 0.0
        %3018 = vmatprep.subr.mxu0 0.0
        %3019 = vmatpush1.msra.mxu0 0.0
        %3020 = vmatprep.subr.mxu0 0.0
        %3021 = vmatpush1.msra.mxu0 0.0
        %3022 = vmatprep.subr.mxu0 0.0
        %3023 = vmatpush1.msra.mxu0 0.0
        %3024 = vmatprep.subr.mxu0 0.0
        %3025 = vmatpush1.msra.mxu0 0.0
        %3026 = vmatprep.subr.mxu0 0.0
        %3027 = vmatpush1.msra.mxu0 0.0
        %3028 = vmatprep.subr.mxu0 0.0
        %3029 = vmatpush1.msra.mxu0 0.0
        %3030 = vmatprep.subr.mxu0 0.0
        %3031 = vmatpush1.msra.mxu0 0.0
        %3032 = vmatprep.subr.mxu0 0.0
        %3033 = vmatpush1.msra.mxu0 0.0
        %3034 = vmatprep.subr.mxu0 0.0
        %3035 = vmatpush1.msra.mxu0 0.0
        %3036 = vmatprep.subr.mxu0 0.0
        %3037 = vmatpush1.msra.mxu0 0.0
        %3038 = vmatprep.subr.mxu0 0.0
        %3039 = vmatpush1.msra.mxu0 0.0
        %3040 = vmatprep.subr.mxu0 0.0
        %3041 = vmatpush1.msra.mxu0 0.0
        %3042 = vmatprep.subr.mxu0 0.0
        %3043 = vmatpush1.msra.mxu0 0.0
        %3044 = vmatprep.subr.mxu0 0.0
        %3045 = vmatpush1.msra.mxu0 0.0
        %3046 = vmatprep.mubr.f32.mxu0 0.0
        %3047 = vmatmul.mubr.f32.gmra.mrb[0].mxu0 %v2959
        %v3048 = vpop.f32.mrb[0].mxu0
        %v3049 = vadd.f32 0.0, %v3048
        %v3050 = vpop.f32.mrb[0].mxu0
        %3051 = vmatprep.mubr.f32.mxu0 0.0
        %3052 = vmatmul.mubr.f32.gmra.mrb[0].mxu0 %v2962
        %v3053 = vpop.f32.mrb[0].mxu0
        %v3054 = vadd.f32 0.0, %v3053
        %v3055 = vpop.f32.mrb[0].mxu0
        %3056 = vmatprep.mubr.f32.mxu0 0.0
        %3057 = vmatmul.mubr.f32.gmra.mrb[0].mxu0 %v2965
        %v3058 = vpop.f32.mrb[0].mxu0
        %v3059 = vadd.f32 0.0, %v3058
        %v3060 = vpop.f32.mrb[0].mxu0
        %3061 = vmatprep.mubr.f32.mxu0 0.0
        %3062 = vmatmul.mubr.f32.gmra.mrb[0].mxu0 %v2968
        %v3063 = vpop.f32.mrb[0].mxu0
        %v3064 = vadd.f32 0.0, %v3063
        %v3065 = vpop.f32.mrb[0].mxu0
        %3066 = vmatprep.mubr.f32.mxu0 0.0
        %3067 = vmatmul.mubr.f32.gmra.mrb[0].mxu0 %v2971
        %v3068 = vpop.f32.mrb[0].mxu0
        %v3069 = vadd.f32 0.0, %v3068
        %v3070 = vpop.f32.mrb[0].mxu0
        %3071 = vmatprep.mubr.f32.mxu0 0.0
        %3072 = vmatmul.mubr.f32.gmra.mrb[0].mxu0 %v2974
        %v3073 = vpop.f32.mrb[0].mxu0
        %v3074 = vadd.f32 0.0, %v3073
        %v3075 = vpop.f32.mrb[0].mxu0
        %3076 = vmatprep.mubr.f32.mxu0 0.0
        %3077 = vmatmul.mubr.f32.gmra.mrb[0].mxu0 %v2977
        %v3078 = vpop.f32.mrb[0].mxu0
        %v3079 = vadd.f32 0.0, %v3078
        %v3080 = vpop.f32.mrb[0].mxu0
        %3081 = vmatprep.mubr.f32.mxu0 0.0
        %3082 = vmatmul.mubr.f32.gmra.mrb[0].mxu0 %v2980
        %v3083 = vpop.f32.mrb[0].mxu0
        %v3084 = vadd.f32 0.0, %v3083
        %v3085 = vpop.f32.mrb[0].mxu0
        %3086 = vdwg.mxu0
        %vm3087 = vcmask 523264
        %v3089 = vsel %vm3087, %v2218, 0
        %v3092 = vsel %vm3087, %v2219, 0
        %v3095 = vsel %vm3087, %v2220, 0
        %v3098 = vsel %vm3087, %v2221, 0
        %v3101 = vsel %vm3087, %v2222, 0
        %v3104 = vsel %vm3087, %v2223, 0
        %v3107 = vsel %vm3087, %v2224, 0
        %v3110 = vsel %vm3087, %v2225, 0
        %3112 = vmatprep.subr.mxu0 0.0
        %3113 = vmatpush1.msra.mxu0 %v2949
        %3114 = vmatprep.subr.mxu0 0.0
        %3115 = vmatpush1.msra.mxu0 %v2950
        %3116 = vmatprep.subr.mxu0 0.0
        %3117 = vmatpush1.msra.mxu0 %v2951
        %3118 = vmatprep.subr.mxu0 0.0
        %3119 = vmatpush1.msra.mxu0 %v2952
        %3120 = vmatprep.subr.mxu0 0.0
        %3121 = vmatpush1.msra.mxu0 %v2953
        %3122 = vmatprep.subr.mxu0 0.0
        %3123 = vmatpush1.msra.mxu0 %v2954
        %3124 = vmatprep.subr.mxu0 0.0
        %3125 = vmatpush1.msra.mxu0 %v2955
        %3126 = vmatprep.subr.mxu0 0.0
        %3127 = vmatpush1.msra.mxu0 %v2956
        %3128 = vmatprep.subr.mxu0 0.0
        %3129 = vmatpush1.msra.mxu0 0.0
        %3130 = vmatprep.subr.mxu0 0.0
        %3131 = vmatpush1.msra.mxu0 0.0
        %3132 = vmatprep.subr.mxu0 0.0
        %3133 = vmatpush1.msra.mxu0 0.0
        %3134 = vmatprep.subr.mxu0 0.0
        %3135 = vmatpush1.msra.mxu0 0.0
        %3136 = vmatprep.subr.mxu0 0.0
        %3137 = vmatpush1.msra.mxu0 0.0
        %3138 = vmatprep.subr.mxu0 0.0
        %3139 = vmatpush1.msra.mxu0 0.0
        %3140 = vmatprep.subr.mxu0 0.0
        %3141 = vmatpush1.msra.mxu0 0.0
        %3142 = vmatprep.subr.mxu0 0.0
        %3143 = vmatpush1.msra.mxu0 0.0
        %3144 = vmatprep.subr.mxu0 0.0
        %3145 = vmatpush1.msra.mxu0 0.0
        %3146 = vmatprep.subr.mxu0 0.0
        %3147 = vmatpush1.msra.mxu0 0.0
        %3148 = vmatprep.subr.mxu0 0.0
        %3149 = vmatpush1.msra.mxu0 0.0
        %3150 = vmatprep.subr.mxu0 0.0
        %3151 = vmatpush1.msra.mxu0 0.0
        %3152 = vmatprep.subr.mxu0 0.0
        %3153 = vmatpush1.msra.mxu0 0.0
        %3154 = vmatprep.subr.mxu0 0.0
        %3155 = vmatpush1.msra.mxu0 0.0
        %3156 = vmatprep.subr.mxu0 0.0
        %3157 = vmatpush1.msra.mxu0 0.0
        %3158 = vmatprep.subr.mxu0 0.0
        %3159 = vmatpush1.msra.mxu0 0.0
        %3160 = vmatprep.subr.mxu0 0.0
        %3161 = vmatpush1.msra.mxu0 0.0
        %3162 = vmatprep.subr.mxu0 0.0
        %3163 = vmatpush1.msra.mxu0 0.0
        %3164 = vmatprep.subr.mxu0 0.0
        %3165 = vmatpush1.msra.mxu0 0.0
        %3166 = vmatprep.subr.mxu0 0.0
        %3167 = vmatpush1.msra.mxu0 0.0
        %3168 = vmatprep.subr.mxu0 0.0
        %3169 = vmatpush1.msra.mxu0 0.0
        %3170 = vmatprep.subr.mxu0 0.0
        %3171 = vmatpush1.msra.mxu0 0.0
        %3172 = vmatprep.subr.mxu0 0.0
        %3173 = vmatpush1.msra.mxu0 0.0
        %3174 = vmatprep.subr.mxu0 0.0
        %3175 = vmatpush1.msra.mxu0 0.0
        %3176 = vmatprep.mubr.f32.mxu0 0.0
        %3177 = vmatmul.mubr.f32.gmra.mrb[0].mxu0 %v3089
        %v3178 = vpop.f32.mrb[0].mxu0
        %v3179 = vadd.f32 %v3049, %v3178
        %v3180 = vpop.f32.mrb[0].mxu0
        %3181 = vmatprep.mubr.f32.mxu0 0.0
        %3182 = vmatmul.mubr.f32.gmra.mrb[0].mxu0 %v3092
        %v3183 = vpop.f32.mrb[0].mxu0
        %v3184 = vadd.f32 %v3054, %v3183
        %v3185 = vpop.f32.mrb[0].mxu0
        %3186 = vmatprep.mubr.f32.mxu0 0.0
        %3187 = vmatmul.mubr.f32.gmra.mrb[0].mxu0 %v3095
        %v3188 = vpop.f32.mrb[0].mxu0
        %v3189 = vadd.f32 %v3059, %v3188
        %v3190 = vpop.f32.mrb[0].mxu0
        %3191 = vmatprep.mubr.f32.mxu0 0.0
        %3192 = vmatmul.mubr.f32.gmra.mrb[0].mxu0 %v3098
        %v3193 = vpop.f32.mrb[0].mxu0
        %v3194 = vadd.f32 %v3064, %v3193
        %v3195 = vpop.f32.mrb[0].mxu0
        %3196 = vmatprep.mubr.f32.mxu0 0.0
        %3197 = vmatmul.mubr.f32.gmra.mrb[0].mxu0 %v3101
        %v3198 = vpop.f32.mrb[0].mxu0
        %v3199 = vadd.f32 %v3069, %v3198
        %v3200 = vpop.f32.mrb[0].mxu0
        %3201 = vmatprep.mubr.f32.mxu0 0.0
        %3202 = vmatmul.mubr.f32.gmra.mrb[0].mxu0 %v3104
        %v3203 = vpop.f32.mrb[0].mxu0
        %v3204 = vadd.f32 %v3074, %v3203
        %v3205 = vpop.f32.mrb[0].mxu0
        %3206 = vmatprep.mubr.f32.mxu0 0.0
        %3207 = vmatmul.mubr.f32.gmra.mrb[0].mxu0 %v3107
        %v3208 = vpop.f32.mrb[0].mxu0
        %v3209 = vadd.f32 %v3079, %v3208
        %v3210 = vpop.f32.mrb[0].mxu0
        %3211 = vmatprep.mubr.f32.mxu0 0.0
        %3212 = vmatmul.mubr.f32.gmra.mrb[0].mxu0 %v3110
        %v3213 = vpop.f32.mrb[0].mxu0
        %v3214 = vadd.f32 %v3084, %v3213
        %v3215 = vpop.f32.mrb[0].mxu0
        %3216 = vdwg.mxu0
        %vm3217 = vcmask 23552
        %v3218 = vsel %vm3217, %v3179, 0.0
        %v3219 = vsel %vm3217, %v3184, 0.0
        %v3220 = vadd.f32 %v3218, %v3219
        %v3221 = vsel %vm3217, %v3189, 0.0
        %v3222 = vadd.f32 %v3220, %v3221
        %v3223 = vsel %vm3217, %v3194, 0.0
        %v3224 = vadd.f32 %v3222, %v3223
        %v3225 = vsel %vm3217, %v3199, 0.0
        %v3226 = vadd.f32 %v3224, %v3225
        %v3227 = vsel %vm3217, %v3204, 0.0
        %v3228 = vadd.f32 %v3226, %v3227
        %v3229 = vsel %vm3217, %v3209, 0.0
        %v3230 = vadd.f32 %v3228, %v3229
        %v3231 = vsel %vm3217, %v3214, 0.0
        %v3232 = vadd.f32 %v3230, %v3231
        %v3233 = vrot.slane %v3232, 4
        %v3234 = vadd.f32 %v3232, %v3233
        %v3235 = vrot.slane %v3234, 2
        %v3236 = vadd.f32 %v3234, %v3235
        %v3237 = vrot.slane %v3236, 1
        %v3238 = vadd.f32 %v3236, %v3237
        %v3239 = vmul.f32 %v3238, 0.015625
        %v3240 = vld [vmem:[%s17] sm:$0x1]
        %v3241 = vadd.f32 %v3239, %v3240
        %vm3242 = vcmask 16384
        %3243 = vst.msk [vmem:[%s584] sm:$0x1] %vm3242, %v3241
        %s3244 = sand.u32 %s428, 1
        %s3245 = scalar_lea.sflag [#allocation4], %s3244
        %s3246 = sand.u32 %s428, 1
        %s3247 = scalar_lea.vmem [#allocation3], %s3246
        // Predicated region
        $region93: #{formulanet_forward.1} parent=91 // pred_check
          %p3248 = pneg %p438
        $region94: #{formulanet_forward.1} parent=91 // pred_check_branch
          %3250 = sbr.rel (%p3248) target = $region96
        $region95: #{formulanet_forward.1} parent=91 // pred_region
          %s3252 = ssub.s32 16, 16
          %3253 = vsyncadd %s3245, %s3252
          %s3254 = smul.addr %s32, 16
          %s3255 = scalar_lea.hbm %s18, %s3254
          %s3257 = sshll.u32 %s3247, 4
          %s3258 = int_to_ptr.vmem [resolvable:$true] %s3257
          %3260 = dma.vmem_to_hbm [thread:$0]  %s3258, 16, %s3255, %s3245
        $region96: #{formulanet_forward.1} parent=91 // pred_fallthru
          _
      $region92: #{formulanet_forward.1} parent=5 // pred_fallthru
        _
      %p3261 = scmp.le.s32.totalorder 2, %s27
      // Predicated region
      $region97: #{formulanet_forward.1} parent=5 // pred_check
        %p3262 = pneg %p3261
      $region98: #{formulanet_forward.1} parent=5 // pred_check_branch
        %3264 = sbr.rel (%p3262) target = $region100
      $region99: #{formulanet_forward.1} parent=5 // pred_region
        %s3265 = ssub.s32 %s27, 2
        // Predicated region
        $region101: #{formulanet_forward.1} parent=99 // pred_check
          %p3266 = pneg %p444
        $region102: #{formulanet_forward.1} parent=99 // pred_check_branch
          %3268 = sbr.rel (%p3266) target = $region104
        $region103: #{formulanet_forward.1} parent=99 // pred_region
          %s3269 = sand.u32 %s429, 1
          %s3270 = scalar_lea.sflag [#allocation4], %s3269
          %s3271 = sand.u32 %s429, 1
          %s3272 = scalar_lea.vmem [#allocation3], %s3271
          %3273 = dma.done %s3270, 16
        $region104: #{formulanet_forward.1} parent=99 // pred_fallthru
          _
      $region100: #{formulanet_forward.1} parent=5 // pred_fallthru
        _
    $region6: #{formulanet_forward.1} parent=1 // loop_footer
      %s31 = sadd.s32 1, %s27
    $region7: #{formulanet_forward.1} parent=1 // loop_footer_branch
      %26 = sbr.rel target = $region3
    $region8: #{formulanet_forward.1} parent=1 // loop_exit
      _
    %3274 = vsyncpa [#allocation4], 1
    %s3275 = scalar_lea.sflag [#allocation4], 1
    %3276 = vsyncpa %s3275, 1

</llo_original>
